<compile_context>
chip_gen: v5e
topology: v5e:2x2
jax: 0.10.0
libtpu: 0.0.40
codegen_flags: <defaults>
</compile_context>

<pallas_src>
import jax
import jax.numpy as jnp
from jax.experimental import pallas as pl
from jax.experimental.pallas import tpu as pltpu


# ----------------------------------------------------------------------------
# Fused kernel (one grid step == one image):
#   BN1 -> ReLU -> conv1x1 -> BN2 -> ReLU -> conv3x3(pad=1) -> BN3 -> ReLU
#   -> conv1x1 -> + identity
#
#   x_ref  : [M, Cp]        (M = H*W rows of one image; also the identity)
#   sb*_ref: [2, C]         (row 0 = BN scale, row 1 = BN bias; f32)
#   w1_ref : [Cp, Wp]       (bf16)
#   w2_ref : [9*Wp, Wp]     (bf16, im2col-ordered 3x3 taps)
#   w3_ref : [Wp, Cp]       (bf16)
#   o_ref  : [M, Cp]
#   scratch: h_sc [H,W,Wp] f32, hpad_sc [H+2,W+2,Wp] f32,
#            col_sc [M, 9*Wp] bf16, dma_sem
# ----------------------------------------------------------------------------
def _bottleneck_v2_kernel(x_ref, sb1_ref, w1_ref, sb2_ref, w2_ref, sb3_ref,
                          w3_ref, o_ref, h_sc, hpad_sc, col_sc, dma_sem):
    hh, ww, wp = h_sc.shape
    m = hh * ww

    # ---- BN1 -> ReLU -> conv1 (1x1) -> BN2 -> ReLU -------------------------
    x2d = x_ref[...]                                                   # [M, Cp] f32
    t = jnp.maximum(x2d * sb1_ref[0:1, :] + sb1_ref[1:2, :], 0.0)
    h = jnp.dot(t.astype(jnp.bfloat16), w1_ref[...],
                preferred_element_type=jnp.float32)                    # [M, Wp]
    h = jnp.maximum(h * sb2_ref[0:1, :] + sb2_ref[1:2, :], 0.0)

    # ---- zero-padded activation held entirely in VMEM ----------------------
    # Zero every step (scratch is per-core; cheap VPU work that hides under MXU).
    hpad_sc[...] = jnp.zeros_like(hpad_sc)
    h_sc[...] = h.reshape(hh, ww, wp)
    # interior copy h -> hpad[1:H+1, 1:W+1, :] via a local DMA window copy
    cp = pltpu.make_async_copy(h_sc, hpad_sc.at[1:hh + 1, 1:ww + 1, :], dma_sem)
    cp.start()
    cp.wait()

    # ---- conv2 (3x3, pad=1) as im2col + a single K = 9*Wp matmul ------------
    for tap in range(9):
        di, dj = divmod(tap, 3)
        patch = hpad_sc[di:di + hh, dj:dj + ww, :]                     # [H, W, Wp]
        col_sc[:, tap * wp:(tap + 1) * wp] = (
            patch.reshape(m, wp).astype(col_sc.dtype))
    c2 = jnp.dot(col_sc[...], w2_ref[...],
                 preferred_element_type=jnp.float32)                   # [M, Wp]

    # ---- BN3 -> ReLU -> conv3 (1x1) -> residual add -------------------------
    t3 = jnp.maximum(c2 * sb3_ref[0:1, :] + sb3_ref[1:2, :], 0.0)
    out = jnp.dot(t3.astype(jnp.bfloat16), w3_ref[...],
                  preferred_element_type=jnp.float32)                  # [M, Cp]
    o_ref[...] = (out + x2d).astype(o_ref.dtype)


# ----------------------------------------------------------------------------
# Parameter glue
# ----------------------------------------------------------------------------
def _bn_fold(gamma, beta, mean, var, eps=1e-5):
    scale = gamma / jnp.sqrt(var + eps)
    bias = beta - mean * scale
    return jnp.stack([scale, bias], axis=0).astype(jnp.float32)        # [2, C]


def _round_up(v, m):
    return (v + m - 1) // m * m


def _pad_axis(a, axis, new_size):
    pad = [(0, 0)] * a.ndim
    pad[axis] = (0, new_size - a.shape[axis])
    return jnp.pad(a, pad)


def bottleneck_v2_forward(x_nchw, params):
    """Forward pass of Bottleneck_v2 (stride=1, downsample=None, eval-mode BN)."""
    n, cin, hh, ww = x_nchw.shape

    # conv weights: PyTorch OIHW -> [in, out] matrices / HWIO.
    w1 = jnp.transpose(params["conv1"][:, :, 0, 0], (1, 0))            # [Cin, width]
    w2 = jnp.transpose(params["conv2"], (2, 3, 1, 0))                  # [3,3,in,out]
    w3 = jnp.transpose(params["conv3"][:, :, 0, 0], (1, 0))            # [width, Cout]
    width, cout = w3.shape
    assert cout == cin, "stride=1 / downsample=None requires Cout == Cin"
    # TODO(synk): stride>1 / downsample path not implemented (not used by this config).

    cp = _round_up(cin, 128)       # lane-dense channel axes
    wp = _round_up(width, 128)

    sb1 = _pad_axis(_bn_fold(*params["bn1"]), 1, cp)
    sb2 = _pad_axis(_bn_fold(*params["bn2"]), 1, wp)
    sb3 = _pad_axis(_bn_fold(*params["bn3"]), 1, wp)
    w1p = _pad_axis(_pad_axis(w1, 0, cp), 1, wp).astype(jnp.bfloat16)
    w2p = _pad_axis(_pad_axis(w2, 2, wp), 3, wp).reshape(9 * wp, wp).astype(jnp.bfloat16)
    w3p = _pad_axis(_pad_axis(w3, 0, wp), 1, cp).astype(jnp.bfloat16)

    x = jnp.transpose(x_nchw, (0, 2, 3, 1)).astype(jnp.float32)        # NCHW -> NHWC
    xp = _pad_axis(x, 3, cp).reshape(n * hh * ww, cp)                  # [N*H*W, Cp]

    m_img = hh * ww
    # The (M_img, Cp) blocks need M_img % 8 == 0 (true for the spatial sizes used
    # here; otherwise switch to 4-D (1,H,W,Cp) blocks).
    assert m_img % 8 == 0

    flops = 2 * n * m_img * (cp * wp + 9 * wp * wp + wp * cp)
    bytes_accessed = (2 * xp.size * 4
                      + (w1p.size + w2p.size + w3p.size) * 2
                      + (sb1.size + sb2.size + sb3.size) * 4)
    cost = pl.CostEstimate(flops=flops, transcendentals=0,
                           bytes_accessed=int(bytes_accessed))

    # Per-grid-step VMEM budget: double-buffered x/out tiles + scratch + weights.
    tile_bytes = (2 * 2 * m_img * cp * 4                # x & out blocks, 2 buffers each
                  + m_img * wp * 4                      # h scratch
                  + (hh + 2) * (ww + 2) * wp * 4        # padded activation
                  + m_img * 9 * wp * 2                  # im2col buffer (bf16)
                  + (cp * wp + 9 * wp * wp + wp * cp) * 2 * 2)   # bf16 weights, 2 bufs
    vmem_limit = int(min(56 * 2**20, max(16 * 2**20, tile_bytes * 3 // 2)))

    const = lambda i: (0, 0)
    out2d = pl.pallas_call(
        _bottleneck_v2_kernel,
        out_shape=jax.ShapeDtypeStruct((n * m_img, cp), jnp.float32),
        grid=(n,),
        in_specs=[
            pl.BlockSpec((m_img, cp), lambda i: (i, 0)),   # x (also the identity)
            pl.BlockSpec((2, cp), const),                  # BN1 scale/bias
            pl.BlockSpec((cp, wp), const),                 # conv1
            pl.BlockSpec((2, wp), const),                  # BN2
            pl.BlockSpec((9 * wp, wp), const),             # conv2 (im2col matrix)
            pl.BlockSpec((2, wp), const),                  # BN3
            pl.BlockSpec((wp, cp), const),                 # conv3
        ],
        out_specs=pl.BlockSpec((m_img, cp), lambda i: (i, 0)),
        scratch_shapes=[
            pltpu.VMEM((hh, ww, wp), jnp.float32),             # h
            pltpu.VMEM((hh + 2, ww + 2, wp), jnp.float32),     # zero-padded h
            pltpu.VMEM((m_img, 9 * wp), jnp.bfloat16),         # im2col buffer
            pltpu.SemaphoreType.DMA(()),                       # local DMA sem
        ],
        compiler_params=pltpu.CompilerParams(
            dimension_semantics=("parallel",),
            vmem_limit_bytes=vmem_limit),
        cost_estimate=cost,
    )(xp, sb1, w1p, sb2, w2p, sb3, w3p)

    out = out2d[:, :cout].reshape(n, hh, ww, cout)
    return jnp.transpose(out, (0, 3, 1, 2))                   # NHWC -> NCHW


# ----------------------------------------------------------------------------
# Pure-JAX f32 reference for validation.
# ----------------------------------------------------------------------------
def bottleneck_v2_reference(x_nchw, params):
    x = jnp.transpose(x_nchw, (0, 2, 3, 1)).astype(jnp.float32)
    sb1 = _bn_fold(*params["bn1"])
    sb2 = _bn_fold(*params["bn2"])
    sb3 = _bn_fold(*params["bn3"])
    w1 = jnp.transpose(params["conv1"][:, :, 0, 0], (1, 0))
    w2 = jnp.transpose(params["conv2"], (2, 3, 1, 0))
    w3 = jnp.transpose(params["conv3"][:, :, 0, 0], (1, 0))

    t = jnp.maximum(x * sb1[0] + sb1[1], 0.0)
    h = jnp.einsum("nhwc,cd->nhwd", t, w1)
    t = jnp.maximum(h * sb2[0] + sb2[1], 0.0)
    c2 = jax.lax.conv_general_dilated(
        t, w2, window_strides=(1, 1), padding="SAME",
        dimension_numbers=("NHWC", "HWIO", "NHWC"))
    t = jnp.maximum(c2 * sb3[0] + sb3[1], 0.0)
    out = jnp.einsum("nhwc,cd->nhwd", t, w3) + x
    return jnp.transpose(out, (0, 3, 1, 2))


def make_params(key, inplanes, planes, base_width=64, groups=1):
    width = int(planes * (base_width / 64.0)) * groups
    cout = planes * 4
    ks = jax.random.split(key, 16)

    def bn(k1, k2, k3, k4, c):
        gamma = jax.random.normal(k1, (c,), jnp.float32) * 0.1 + 1.0
        beta = jax.random.normal(k2, (c,), jnp.float32) * 0.1
        mean = jax.random.normal(k3, (c,), jnp.float32) * 0.1
        var = jax.random.uniform(k4, (c,), jnp.float32, 0.5, 1.5)
        return (gamma, beta, mean, var)

    return {
        "bn1": bn(ks[0], ks[1], ks[2], ks[3], inplanes),
        "conv1": jax.random.normal(ks[4], (width, inplanes, 1, 1), jnp.float32) * 0.1,
        "bn2": bn(ks[5], ks[6], ks[7], ks[8], width),
        "conv2": jax.random.normal(ks[9], (width, width, 3, 3), jnp.float32) * 0.1,
        "bn3": bn(ks[10], ks[11], ks[12], ks[13], width),
        "conv3": jax.random.normal(ks[14], (cout, width, 1, 1), jnp.float32) * 0.1,
    }


if __name__ == "__main__":
    key = jax.random.PRNGKey(0)
    k_x, k_p = jax.random.split(key)

    # Small shapes consistent with the module: inplanes must equal
    # planes*expansion for the residual add when downsample=None, stride=1.
    N, PLANES = 2, 4
    INPLANES = PLANES * 4          # 16
    H = W = 16

    x = jax.random.normal(k_x, (N, INPLANES, H, W), jnp.float32)   # NCHW input
    params = make_params(k_p, INPLANES, PLANES)

    out = jax.block_until_ready(bottleneck_v2_forward(x, params))
    ref = bottleneck_v2_reference(x, params)

    assert out.shape == (N, INPLANES, H, W), out.shape
    max_err = float(jnp.max(jnp.abs(out - ref)))
    # bf16 matmul inputs with f32 accumulation -> relaxed tolerance vs f32 ref.
    assert jnp.allclose(out, ref, atol=2e-2, rtol=2e-2), max_err

    print("KERNEL_OK")
</pallas_src>

<mosaic_0001>
module attributes {stable_mosaic.version = 11 : i64} {
  func.func @_bottleneck_v2_kernel(%arg0: i32, %arg1: memref<256x128xf32, #tpu.memory_space<vmem>>, %arg2: memref<2x128xf32, #tpu.memory_space<vmem>>, %arg3: memref<128x128xbf16, #tpu.memory_space<vmem>>, %arg4: memref<2x128xf32, #tpu.memory_space<vmem>>, %arg5: memref<1152x128xbf16, #tpu.memory_space<vmem>>, %arg6: memref<2x128xf32, #tpu.memory_space<vmem>>, %arg7: memref<128x128xbf16, #tpu.memory_space<vmem>>, %arg8: memref<256x128xf32, #tpu.memory_space<vmem>>, %arg9: memref<16x16x128xf32, #tpu.memory_space<vmem>>, %arg10: memref<18x18x128xf32, #tpu.memory_space<vmem>>, %arg11: memref<256x1152xbf16, #tpu.memory_space<vmem>>, %arg12: memref<!tpu.dma_semaphore, #tpu.memory_space<semaphore_mem>>) attributes {dimension_semantics = [#tpu.dimension_semantics<parallel>], iteration_bounds = array<i64: 2>, scalar_prefetch = 0 : i64, scratch_operands = 4 : i64, tpu.core_type = #tpu.core_type<tc>, window_params = [{transform_indices = @transform_0, window_bounds = array<i64: 256, 128>}, {pipeline_mode = #tpu.pipeline_mode<synchronous>, transform_indices = @transform_1, window_bounds = array<i64: 2, 128>}, {pipeline_mode = #tpu.pipeline_mode<synchronous>, transform_indices = @transform_2, window_bounds = array<i64: 128, 128>}, {pipeline_mode = #tpu.pipeline_mode<synchronous>, transform_indices = @transform_3, window_bounds = array<i64: 2, 128>}, {pipeline_mode = #tpu.pipeline_mode<synchronous>, transform_indices = @transform_4, window_bounds = array<i64: 1152, 128>}, {pipeline_mode = #tpu.pipeline_mode<synchronous>, transform_indices = @transform_5, window_bounds = array<i64: 2, 128>}, {pipeline_mode = #tpu.pipeline_mode<synchronous>, transform_indices = @transform_6, window_bounds = array<i64: 128, 128>}, {transform_indices = @transform_7, window_bounds = array<i64: 256, 128>}]} {
    %c0 = arith.constant 0 : index
    %c0_0 = arith.constant 0 : index
    %0 = vector.load %arg1[%c0, %c0_0] : memref<256x128xf32, #tpu.memory_space<vmem>>, vector<256x128xf32>
    %c0_1 = arith.constant 0 : index
    %c0_2 = arith.constant 0 : index
    %1 = vector.load %arg2[%c0_1, %c0_2] : memref<2x128xf32, #tpu.memory_space<vmem>>, vector<1x128xf32>
    %2 = vector.broadcast %1 : vector<1x128xf32> to vector<256x128xf32>
    %3 = arith.mulf %0, %2 : vector<256x128xf32>
    %c1 = arith.constant 1 : index
    %c0_3 = arith.constant 0 : index
    %4 = vector.load %arg2[%c1, %c0_3] : memref<2x128xf32, #tpu.memory_space<vmem>>, vector<1x128xf32>
    %5 = vector.broadcast %4 : vector<1x128xf32> to vector<256x128xf32>
    %6 = arith.addf %3, %5 : vector<256x128xf32>
    %cst = arith.constant 0.000000e+00 : f32
    %7 = vector.broadcast %cst : f32 to vector<256x128xf32>
    %8 = arith.maximumf %6, %7 : vector<256x128xf32>
    %9 = arith.truncf %8 : vector<256x128xf32> to vector<256x128xbf16>
    %c0_4 = arith.constant 0 : index
    %c0_5 = arith.constant 0 : index
    %10 = vector.load %arg3[%c0_4, %c0_5] : memref<128x128xbf16, #tpu.memory_space<vmem>>, vector<128x128xbf16>
    %cst_6 = arith.constant dense<0.000000e+00> : vector<256x128xf32>
    %11 = tpu.matmul %9, %10, %cst_6 {dimension_numbers = #tpu.dot_dimension_numbers<[1], [0], [0], [1], [0, 0, 1, 1], [], []>} : vector<256x128xbf16>, vector<128x128xbf16>, vector<256x128xf32> -> vector<256x128xf32>
    %c0_7 = arith.constant 0 : index
    %c0_8 = arith.constant 0 : index
    %12 = vector.load %arg4[%c0_7, %c0_8] : memref<2x128xf32, #tpu.memory_space<vmem>>, vector<1x128xf32>
    %13 = vector.broadcast %12 : vector<1x128xf32> to vector<256x128xf32>
    %14 = arith.mulf %11, %13 : vector<256x128xf32>
    %c1_9 = arith.constant 1 : index
    %c0_10 = arith.constant 0 : index
    %15 = vector.load %arg4[%c1_9, %c0_10] : memref<2x128xf32, #tpu.memory_space<vmem>>, vector<1x128xf32>
    %16 = vector.broadcast %15 : vector<1x128xf32> to vector<256x128xf32>
    %17 = arith.addf %14, %16 : vector<256x128xf32>
    %cst_11 = arith.constant 0.000000e+00 : f32
    %18 = vector.broadcast %cst_11 : f32 to vector<256x128xf32>
    %19 = arith.maximumf %17, %18 : vector<256x128xf32>
    %cst_12 = arith.constant 0.000000e+00 : f32
    %20 = vector.broadcast %cst_12 : f32 to vector<18x18x128xf32>
    %c0_13 = arith.constant 0 : index
    %c0_14 = arith.constant 0 : index
    %c0_15 = arith.constant 0 : index
    %21 = vector.load %arg10[%c0_13, %c0_14, %c0_15] : memref<18x18x128xf32, #tpu.memory_space<vmem>>, vector<18x18x128xf32>
    tpu.vector_store %arg10[%c0_13, %c0_14, %c0_15], %20 {strides = array<i32>} : memref<18x18x128xf32, #tpu.memory_space<vmem>>, vector<18x18x128xf32>,
    %22 = vector.shape_cast %19 : vector<256x128xf32> to vector<16x16x128xf32>
    %c0_16 = arith.constant 0 : index
    %c0_17 = arith.constant 0 : index
    %c0_18 = arith.constant 0 : index
    %23 = vector.load %arg9[%c0_16, %c0_17, %c0_18] : memref<16x16x128xf32, #tpu.memory_space<vmem>>, vector<16x16x128xf32>
    tpu.vector_store %arg9[%c0_16, %c0_17, %c0_18], %22 {strides = array<i32>} : memref<16x16x128xf32, #tpu.memory_space<vmem>>, vector<16x16x128xf32>,
    %c1_i32 = arith.constant 1 : i32
    %c1_i32_19 = arith.constant 1 : i32
    %c0_i32 = arith.constant 0 : i32
    %24 = tpu.memref_slice %arg10[%c1_i32, %c1_i32_19, %c0_i32] : memref<18x18x128xf32, #tpu.memory_space<vmem>> -> memref<16x16x128xf32, #tpu.memory_space<vmem>>
    tpu.enqueue_dma source(%arg9 : memref<16x16x128xf32, #tpu.memory_space<vmem>>) target(%24 : memref<16x16x128xf32, #tpu.memory_space<vmem>>) target_semaphore(%arg12 : memref<!tpu.dma_semaphore, #tpu.memory_space<semaphore_mem>>)
    %c1_i32_20 = arith.constant 1 : i32
    %c1_i32_21 = arith.constant 1 : i32
    %c0_i32_22 = arith.constant 0 : i32
    %25 = tpu.memref_slice %arg10[%c1_i32_20, %c1_i32_21, %c0_i32_22] : memref<18x18x128xf32, #tpu.memory_space<vmem>> -> memref<16x16x128xf32, #tpu.memory_space<vmem>>
    tpu.wait_dma2 semaphore(%arg12 : memref<!tpu.dma_semaphore, #tpu.memory_space<semaphore_mem>>) src(%arg9 : memref<16x16x128xf32, #tpu.memory_space<vmem>>) dst(%25 : memref<16x16x128xf32, #tpu.memory_space<vmem>>)
    %c0_23 = arith.constant 0 : index
    %c0_24 = arith.constant 0 : index
    %c0_25 = arith.constant 0 : index
    %26 = vector.load %arg10[%c0_23, %c0_24, %c0_25] : memref<18x18x128xf32, #tpu.memory_space<vmem>>, vector<16x16x128xf32>
    %27 = vector.shape_cast %26 : vector<16x16x128xf32> to vector<256x128xf32>
    %28 = arith.truncf %27 : vector<256x128xf32> to vector<256x128xbf16>
    %c0_26 = arith.constant 0 : index
    %c0_27 = arith.constant 0 : index
    %29 = vector.load %arg11[%c0_26, %c0_27] : memref<256x1152xbf16, #tpu.memory_space<vmem>>, vector<256x128xbf16>
    tpu.vector_store %arg11[%c0_26, %c0_27], %28 {strides = array<i32>} : memref<256x1152xbf16, #tpu.memory_space<vmem>>, vector<256x128xbf16>,
    %c0_28 = arith.constant 0 : index
    %c1_29 = arith.constant 1 : index
    %c0_30 = arith.constant 0 : index
    %30 = vector.load %arg10[%c0_28, %c1_29, %c0_30] : memref<18x18x128xf32, #tpu.memory_space<vmem>>, vector<16x16x128xf32>
    %31 = vector.shape_cast %30 : vector<16x16x128xf32> to vector<256x128xf32>
    %32 = arith.truncf %31 : vector<256x128xf32> to vector<256x128xbf16>
    %c0_31 = arith.constant 0 : index
    %c128 = arith.constant 128 : index
    %33 = vector.load %arg11[%c0_31, %c128] : memref<256x1152xbf16, #tpu.memory_space<vmem>>, vector<256x128xbf16>
    tpu.vector_store %arg11[%c0_31, %c128], %32 {strides = array<i32>} : memref<256x1152xbf16, #tpu.memory_space<vmem>>, vector<256x128xbf16>,
    %c0_32 = arith.constant 0 : index
    %c2 = arith.constant 2 : index
    %c0_33 = arith.constant 0 : index
    %34 = vector.load %arg10[%c0_32, %c2, %c0_33] : memref<18x18x128xf32, #tpu.memory_space<vmem>>, vector<16x16x128xf32>
    %35 = vector.shape_cast %34 : vector<16x16x128xf32> to vector<256x128xf32>
    %36 = arith.truncf %35 : vector<256x128xf32> to vector<256x128xbf16>
    %c0_34 = arith.constant 0 : index
    %c256 = arith.constant 256 : index
    %37 = vector.load %arg11[%c0_34, %c256] : memref<256x1152xbf16, #tpu.memory_space<vmem>>, vector<256x128xbf16>
    tpu.vector_store %arg11[%c0_34, %c256], %36 {strides = array<i32>} : memref<256x1152xbf16, #tpu.memory_space<vmem>>, vector<256x128xbf16>,
    %c1_35 = arith.constant 1 : index
    %c0_36 = arith.constant 0 : index
    %c0_37 = arith.constant 0 : index
    %38 = vector.load %arg10[%c1_35, %c0_36, %c0_37] : memref<18x18x128xf32, #tpu.memory_space<vmem>>, vector<16x16x128xf32>
    %39 = vector.shape_cast %38 : vector<16x16x128xf32> to vector<256x128xf32>
    %40 = arith.truncf %39 : vector<256x128xf32> to vector<256x128xbf16>
    %c0_38 = arith.constant 0 : index
    %c384 = arith.constant 384 : index
    %41 = vector.load %arg11[%c0_38, %c384] : memref<256x1152xbf16, #tpu.memory_space<vmem>>, vector<256x128xbf16>
    tpu.vector_store %arg11[%c0_38, %c384], %40 {strides = array<i32>} : memref<256x1152xbf16, #tpu.memory_space<vmem>>, vector<256x128xbf16>,
    %c1_39 = arith.constant 1 : index
    %c1_40 = arith.constant 1 : index
    %c0_41 = arith.constant 0 : index
    %42 = vector.load %arg10[%c1_39, %c1_40, %c0_41] : memref<18x18x128xf32, #tpu.memory_space<vmem>>, vector<16x16x128xf32>
    %43 = vector.shape_cast %42 : vector<16x16x128xf32> to vector<256x128xf32>
    %44 = arith.truncf %43 : vector<256x128xf32> to vector<256x128xbf16>
    %c0_42 = arith.constant 0 : index
    %c512 = arith.constant 512 : index
    %45 = vector.load %arg11[%c0_42, %c512] : memref<256x1152xbf16, #tpu.memory_space<vmem>>, vector<256x128xbf16>
    tpu.vector_store %arg11[%c0_42, %c512], %44 {strides = array<i32>} : memref<256x1152xbf16, #tpu.memory_space<vmem>>, vector<256x128xbf16>,
    %c1_43 = arith.constant 1 : index
    %c2_44 = arith.constant 2 : index
    %c0_45 = arith.constant 0 : index
    %46 = vector.load %arg10[%c1_43, %c2_44, %c0_45] : memref<18x18x128xf32, #tpu.memory_space<vmem>>, vector<16x16x128xf32>
    %47 = vector.shape_cast %46 : vector<16x16x128xf32> to vector<256x128xf32>
    %48 = arith.truncf %47 : vector<256x128xf32> to vector<256x128xbf16>
    %c0_46 = arith.constant 0 : index
    %c640 = arith.constant 640 : index
    %49 = vector.load %arg11[%c0_46, %c640] : memref<256x1152xbf16, #tpu.memory_space<vmem>>, vector<256x128xbf16>
    tpu.vector_store %arg11[%c0_46, %c640], %48 {strides = array<i32>} : memref<256x1152xbf16, #tpu.memory_space<vmem>>, vector<256x128xbf16>,
    %c2_47 = arith.constant 2 : index
    %c0_48 = arith.constant 0 : index
    %c0_49 = arith.constant 0 : index
    %50 = vector.load %arg10[%c2_47, %c0_48, %c0_49] : memref<18x18x128xf32, #tpu.memory_space<vmem>>, vector<16x16x128xf32>
    %51 = vector.shape_cast %50 : vector<16x16x128xf32> to vector<256x128xf32>
    %52 = arith.truncf %51 : vector<256x128xf32> to vector<256x128xbf16>
    %c0_50 = arith.constant 0 : index
    %c768 = arith.constant 768 : index
    %53 = vector.load %arg11[%c0_50, %c768] : memref<256x1152xbf16, #tpu.memory_space<vmem>>, vector<256x128xbf16>
    tpu.vector_store %arg11[%c0_50, %c768], %52 {strides = array<i32>} : memref<256x1152xbf16, #tpu.memory_space<vmem>>, vector<256x128xbf16>,
    %c2_51 = arith.constant 2 : index
    %c1_52 = arith.constant 1 : index
    %c0_53 = arith.constant 0 : index
    %54 = vector.load %arg10[%c2_51, %c1_52, %c0_53] : memref<18x18x128xf32, #tpu.memory_space<vmem>>, vector<16x16x128xf32>
    %55 = vector.shape_cast %54 : vector<16x16x128xf32> to vector<256x128xf32>
    %56 = arith.truncf %55 : vector<256x128xf32> to vector<256x128xbf16>
    %c0_54 = arith.constant 0 : index
    %c896 = arith.constant 896 : index
    %57 = vector.load %arg11[%c0_54, %c896] : memref<256x1152xbf16, #tpu.memory_space<vmem>>, vector<256x128xbf16>
    tpu.vector_store %arg11[%c0_54, %c896], %56 {strides = array<i32>} : memref<256x1152xbf16, #tpu.memory_space<vmem>>, vector<256x128xbf16>,
    %c2_55 = arith.constant 2 : index
    %c2_56 = arith.constant 2 : index
    %c0_57 = arith.constant 0 : index
    %58 = vector.load %arg10[%c2_55, %c2_56, %c0_57] : memref<18x18x128xf32, #tpu.memory_space<vmem>>, vector<16x16x128xf32>
    %59 = vector.shape_cast %58 : vector<16x16x128xf32> to vector<256x128xf32>
    %60 = arith.truncf %59 : vector<256x128xf32> to vector<256x128xbf16>
    %c0_58 = arith.constant 0 : index
    %c1024 = arith.constant 1024 : index
    %61 = vector.load %arg11[%c0_58, %c1024] : memref<256x1152xbf16, #tpu.memory_space<vmem>>, vector<256x128xbf16>
    tpu.vector_store %arg11[%c0_58, %c1024], %60 {strides = array<i32>} : memref<256x1152xbf16, #tpu.memory_space<vmem>>, vector<256x128xbf16>,
    %c0_59 = arith.constant 0 : index
    %c0_60 = arith.constant 0 : index
    %62 = vector.load %arg11[%c0_59, %c0_60] : memref<256x1152xbf16, #tpu.memory_space<vmem>>, vector<256x1152xbf16>
    %c0_61 = arith.constant 0 : index
    %c0_62 = arith.constant 0 : index
    %63 = vector.load %arg5[%c0_61, %c0_62] : memref<1152x128xbf16, #tpu.memory_space<vmem>>, vector<1152x128xbf16>
    %cst_63 = arith.constant dense<0.000000e+00> : vector<256x128xf32>
    %64 = tpu.matmul %62, %63, %cst_63 {dimension_numbers = #tpu.dot_dimension_numbers<[1], [0], [0], [1], [0, 0, 1, 1], [], []>} : vector<256x1152xbf16>, vector<1152x128xbf16>, vector<256x128xf32> -> vector<256x128xf32>
    %c0_64 = arith.constant 0 : index
    %c0_65 = arith.constant 0 : index
    %65 = vector.load %arg6[%c0_64, %c0_65] : memref<2x128xf32, #tpu.memory_space<vmem>>, vector<1x128xf32>
    %66 = vector.broadcast %65 : vector<1x128xf32> to vector<256x128xf32>
    %67 = arith.mulf %64, %66 : vector<256x128xf32>
    %c1_66 = arith.constant 1 : index
    %c0_67 = arith.constant 0 : index
    %68 = vector.load %arg6[%c1_66, %c0_67] : memref<2x128xf32, #tpu.memory_space<vmem>>, vector<1x128xf32>
    %69 = vector.broadcast %68 : vector<1x128xf32> to vector<256x128xf32>
    %70 = arith.addf %67, %69 : vector<256x128xf32>
    %cst_68 = arith.constant 0.000000e+00 : f32
    %71 = vector.broadcast %cst_68 : f32 to vector<256x128xf32>
    %72 = arith.maximumf %70, %71 : vector<256x128xf32>
    %73 = arith.truncf %72 : vector<256x128xf32> to vector<256x128xbf16>
    %c0_69 = arith.constant 0 : index
    %c0_70 = arith.constant 0 : index
    %74 = vector.load %arg7[%c0_69, %c0_70] : memref<128x128xbf16, #tpu.memory_space<vmem>>, vector<128x128xbf16>
    %cst_71 = arith.constant dense<0.000000e+00> : vector<256x128xf32>
    %75 = tpu.matmul %73, %74, %cst_71 {dimension_numbers = #tpu.dot_dimension_numbers<[1], [0], [0], [1], [0, 0, 1, 1], [], []>} : vector<256x128xbf16>, vector<128x128xbf16>, vector<256x128xf32> -> vector<256x128xf32>
    %76 = arith.addf %75, %0 : vector<256x128xf32>
    %c0_72 = arith.constant 0 : index
    %c0_73 = arith.constant 0 : index
    %77 = vector.load %arg8[%c0_72, %c0_73] : memref<256x128xf32, #tpu.memory_space<vmem>>, vector<256x128xf32>
    tpu.vector_store %arg8[%c0_72, %c0_73], %76 {strides = array<i32>} : memref<256x128xf32, #tpu.memory_space<vmem>>, vector<256x128xf32>,
    return
  }
  func.func @transform_0(%arg0: i32) -> (i32, i32) {
    %c0_i32 = arith.constant 0 : i32
    %c0_i32_0 = arith.constant 0 : i32
    return %arg0, %c0_i32 : i32, i32
  }
  func.func @transform_1(%arg0: i32) -> (i32, i32) {
    %c0_i32 = arith.constant 0 : i32
    %c0_i32_0 = arith.constant 0 : i32
    %c0_i32_1 = arith.constant 0 : i32
    return %c0_i32, %c0_i32_0 : i32, i32
  }
  func.func @transform_2(%arg0: i32) -> (i32, i32) {
    %c0_i32 = arith.constant 0 : i32
    %c0_i32_0 = arith.constant 0 : i32
    %c0_i32_1 = arith.constant 0 : i32
    return %c0_i32, %c0_i32_0 : i32, i32
  }
  func.func @transform_3(%arg0: i32) -> (i32, i32) {
    %c0_i32 = arith.constant 0 : i32
    %c0_i32_0 = arith.constant 0 : i32
    %c0_i32_1 = arith.constant 0 : i32
    return %c0_i32, %c0_i32_0 : i32, i32
  }
  func.func @transform_4(%arg0: i32) -> (i32, i32) {
    %c0_i32 = arith.constant 0 : i32
    %c0_i32_0 = arith.constant 0 : i32
    %c0_i32_1 = arith.constant 0 : i32
    return %c0_i32, %c0_i32_0 : i32, i32
  }
  func.func @transform_5(%arg0: i32) -> (i32, i32) {
    %c0_i32 = arith.constant 0 : i32
    %c0_i32_0 = arith.constant 0 : i32
    %c0_i32_1 = arith.constant 0 : i32
    return %c0_i32, %c0_i32_0 : i32, i32
  }
  func.func @transform_6(%arg0: i32) -> (i32, i32) {
    %c0_i32 = arith.constant 0 : i32
    %c0_i32_0 = arith.constant 0 : i32
    %c0_i32_1 = arith.constant 0 : i32
    return %c0_i32, %c0_i32_0 : i32, i32
  }
  func.func @transform_7(%arg0: i32) -> (i32, i32) {
    %c0_i32 = arith.constant 0 : i32
    %c0_i32_0 = arith.constant 0 : i32
    return %arg0, %c0_i32 : i32, i32
  }
}

</mosaic_0001>

<llo_original>
// kernel: tpu_custom_call.1
$region0: #{tpu_custom_call.1}
  #allocation0 [shape = 'u32[]', space=smem, size = 0x4, offset = 0x4, fixed_abs, tag = 'smem constant byte address 0x4 - core index']
  #allocation1 [shape = 'u32[72,128]{1,0:T(1,128)}', space=vmem, size = 0x9000, scoped, tag = 'internal scratch']
  #allocation2 [shape = 'f32[16,16,128]{2,1,0:T(8,128)}', space=vmem, size = 0x20000, scoped, tag = 'scratch operand']
  #allocation3 [shape = 'f32[18,18,128]{2,1,0:T(8,128)}', space=vmem, size = 0x36000, scoped, tag = 'scratch operand']
  #allocation4 [shape = 'bf16[256,1152]{1,0:T(8,128)(2,1)}', space=vmem, size = 0x90000, scoped, tag = 'scratch operand']
  #allocation5 [shape = 's32[1]{0}', space=sflag, size = 0x4, scoped, tag = 'scratch operand']
  #allocation16 [shape = 's32[]', space=sflag, size = 0x4, offset = 0, fixed_abs, tag = 'sflag constant byte address 0x0 - dummy sync flag']
  %s0 = inlined_call_operand.hbm [shape: f32[512,128], index: 0, kind: input, shape index: {}]
  %s1 = inlined_call_operand.hbm [shape: f32[2,128], index: 1, kind: input, shape index: {}]
  %s2 = inlined_call_operand.hbm [shape: bf16[128,128], index: 2, kind: input, shape index: {}]
  %s3 = inlined_call_operand.vmem [shape: f32[2,128], index: 3, kind: input, shape index: {}]
  %s4 = inlined_call_operand.hbm [shape: bf16[1152,128], index: 4, kind: input, shape index: {}]
  %s5 = inlined_call_operand.vmem [shape: f32[2,128], index: 5, kind: input, shape index: {}]
  %s6 = inlined_call_operand.hbm [shape: bf16[128,128], index: 6, kind: input, shape index: {}]
  %s7 = inlined_call_operand.hbm [shape: f32[512,128], index: 7, kind: output, shape index: {}]
  %s8 = sld [smem:[#allocation0]]
  $region100: #{tpu_custom_call.1} parent=0
    _
  %s10 = ssub.s32 1, %s8
  %s11 = scalar_select 0, %s10, %s8
  $region1: #{tpu_custom_call.1} parent=0
    #allocation6 [shape = 'u8[262144]{0}', space=vmem, size = 0x40000, scoped, tag = 'input window, operand 0']
    #allocation7 [shape = 's32[2]{0}', space=sflag, size = 0x8, scoped, tag = 'scoped memory for tpu_custom_call.1']
    #allocation8 [shape = 's32[2]{0}', space=sflag, size = 0x8, scoped, tag = 'scoped memory for tpu_custom_call.1']
    #allocation9 [shape = 'u8[1024]{0}', space=vmem, size = 0x400, scoped, tag = 'input window, operand 1, single buffered']
    #allocation10 [shape = 's32[1]{0}', space=sflag, size = 0x4, scoped, tag = 'scoped memory for tpu_custom_call.1']
    #allocation11 [shape = 'u8[32768]{0}', space=vmem, size = 0x8000, scoped, tag = 'input window, operand 2, single buffered']
    #allocation12 [shape = 'u8[294912]{0}', space=vmem, size = 0x48000, scoped, tag = 'input window, operand 4, single buffered']
    #allocation13 [shape = 's32[1]{0}', space=sflag, size = 0x4, scoped, tag = 'scoped memory for tpu_custom_call.1']
    #allocation14 [shape = 'u8[32768]{0}', space=vmem, size = 0x8000, scoped, tag = 'input window, operand 6, single buffered']
    #allocation15 [shape = 'u8[262144]{0}', space=vmem, size = 0x40000, scoped, tag = 'output window, operand 0']
    %12 = vsyncpa [#allocation7], 0
    %s13 = scalar_lea.sflag [#allocation7], 1
    %14 = vsyncpa %s13, 0
    %15 = vsyncpa [#allocation10], 0
    %16 = vsyncpa [#allocation13], 0
    %17 = vsyncpa [#allocation8], 0
    %s18 = scalar_lea.sflag [#allocation8], 1
    %19 = vsyncpa %s18, 0
    loop: start=0, step=1, limit=4
    $region2: #{tpu_custom_call.1} parent=1 // loop_pre_header
      _
    $region3: #{tpu_custom_call.1} parent=1 // loop_header
      %s21 = sphi 0, %s25
      %p22 = scmp.ge.s32.totalorder %s21, 4
      %s31 = sphi 0, %s33
      %s34 = sphi 0, %s31
      %s35 = sphi 0, %s34
      %s51 = sphi 0, %s35
      %s55 = sphi 0, %s55
      %s57 = sphi 0, %s55
      %s58 = sphi 0, %s57
      %s72 = sphi 0, %s58
      %s76 = sphi 0, %s76
      %s78 = sphi 0, %s76
      %s79 = sphi 0, %s78
      %s93 = sphi 0, %s79
      %s97 = sphi 0, %s97
      %s99 = sphi 0, %s97
      %s100 = sphi 0, %s99
      %s114 = sphi 0, %s100
      %s118 = sphi 0, %s118
      %s120 = sphi 0, %s118
      %s121 = sphi 0, %s120
      %s135 = sphi 0, %s121
      %s139 = sphi 0, %s139
      %s141 = sphi 0, %s139
      %s142 = sphi 0, %s141
      %s156 = sphi 0, %s142
      %s160 = sphi 0, %s160
      %s162 = sphi 0, %s160
      %s163 = sphi 0, %s162
      %s177 = sphi 0, %s163
      %s183 = sphi 0, %s185
      %s186 = sphi 0, %s183
      %s187 = sphi 0, %s186
      %s203 = sphi 0, %s187
    $region4: #{tpu_custom_call.1} parent=1 // loop_header_branch
      %24 = sbr.rel (%p22) target = $region8
    $region5: #{tpu_custom_call.1} parent=1 // loop_body
      %s26 = ssub.s32 %s21, 1
      %s27 = ssub.s32 %s21, 2
      %s28 = sadd.s32 %s21, 1
      %s29 = ssub.s32 %s21, %s28
      %p30 = scmp.eq.s32.totalorder %s29, 0
      %s32 = sadd.s32 %s31, 1
      %s33 = scalar_select %p30, %s31, %s32
      %p36 = pneg %p30
      %p37 = scmp.eq.s32.totalorder %s21, 1
      %p38 = por %p36, %p37
      %p39 = scmp.ne.s32.totalorder %s31, %s34
      %p40 = scmp.eq.s32.totalorder %s21, 0
      %p41 = por %p39, %p40
      %p42 = scmp.ne.s32.totalorder %s31, %s34
      %p43 = scmp.eq.s32.totalorder %s26, 1
      %p44 = por %p42, %p43
      %p45 = scmp.ne.s32.totalorder %s34, %s35
      %p46 = scmp.eq.s32.totalorder %s26, 0
      %p47 = por %p45, %p46
      %p48 = scmp.ne.s32.totalorder %s34, %s35
      %p49 = scmp.eq.s32.totalorder %s27, 1
      %p50 = por %p48, %p49
      %p52 = scmp.ne.s32.totalorder %s35, %s51
      %p53 = scmp.eq.s32.totalorder %s27, 0
      %p54 = por %p52, %p53
      %s56 = sadd.s32 %s55, 1
      %p59 = scmp.eq.s32.totalorder %s21, 1
      %p60 = scmp.ne.s32.totalorder %s55, %s57
      %p61 = scmp.eq.s32.totalorder %s21, 0
      %p62 = por %p60, %p61
      %p63 = scmp.ne.s32.totalorder %s55, %s57
      %p64 = scmp.eq.s32.totalorder %s26, 1
      %p65 = por %p63, %p64
      %p66 = scmp.ne.s32.totalorder %s57, %s58
      %p67 = scmp.eq.s32.totalorder %s26, 0
      %p68 = por %p66, %p67
      %p69 = scmp.ne.s32.totalorder %s57, %s58
      %p70 = scmp.eq.s32.totalorder %s27, 1
      %p71 = por %p69, %p70
      %p73 = scmp.ne.s32.totalorder %s58, %s72
      %p74 = scmp.eq.s32.totalorder %s27, 0
      %p75 = por %p73, %p74
      %s77 = sadd.s32 %s76, 1
      %p80 = scmp.eq.s32.totalorder %s21, 1
      %p81 = scmp.ne.s32.totalorder %s76, %s78
      %p82 = scmp.eq.s32.totalorder %s21, 0
      %p83 = por %p81, %p82
      %p84 = scmp.ne.s32.totalorder %s76, %s78
      %p85 = scmp.eq.s32.totalorder %s26, 1
      %p86 = por %p84, %p85
      %p87 = scmp.ne.s32.totalorder %s78, %s79
      %p88 = scmp.eq.s32.totalorder %s26, 0
      %p89 = por %p87, %p88
      %p90 = scmp.ne.s32.totalorder %s78, %s79
      %p91 = scmp.eq.s32.totalorder %s27, 1
      %p92 = por %p90, %p91
      %p94 = scmp.ne.s32.totalorder %s79, %s93
      %p95 = scmp.eq.s32.totalorder %s27, 0
      %p96 = por %p94, %p95
      %s98 = sadd.s32 %s97, 1
      %p101 = scmp.eq.s32.totalorder %s21, 1
      %p102 = scmp.ne.s32.totalorder %s97, %s99
      %p103 = scmp.eq.s32.totalorder %s21, 0
      %p104 = por %p102, %p103
      %p105 = scmp.ne.s32.totalorder %s97, %s99
      %p106 = scmp.eq.s32.totalorder %s26, 1
      %p107 = por %p105, %p106
      %p108 = scmp.ne.s32.totalorder %s99, %s100
      %p109 = scmp.eq.s32.totalorder %s26, 0
      %p110 = por %p108, %p109
      %p111 = scmp.ne.s32.totalorder %s99, %s100
      %p112 = scmp.eq.s32.totalorder %s27, 1
      %p113 = por %p111, %p112
      %p115 = scmp.ne.s32.totalorder %s100, %s114
      %p116 = scmp.eq.s32.totalorder %s27, 0
      %p117 = por %p115, %p116
      %s119 = sadd.s32 %s118, 1
      %p122 = scmp.eq.s32.totalorder %s21, 1
      %p123 = scmp.ne.s32.totalorder %s118, %s120
      %p124 = scmp.eq.s32.totalorder %s21, 0
      %p125 = por %p123, %p124
      %p126 = scmp.ne.s32.totalorder %s118, %s120
      %p127 = scmp.eq.s32.totalorder %s26, 1
      %p128 = por %p126, %p127
      %p129 = scmp.ne.s32.totalorder %s120, %s121
      %p130 = scmp.eq.s32.totalorder %s26, 0
      %p131 = por %p129, %p130
      %p132 = scmp.ne.s32.totalorder %s120, %s121
      %p133 = scmp.eq.s32.totalorder %s27, 1
      %p134 = por %p132, %p133
      %p136 = scmp.ne.s32.totalorder %s121, %s135
      %p137 = scmp.eq.s32.totalorder %s27, 0
      %p138 = por %p136, %p137
      %s140 = sadd.s32 %s139, 1
      %p143 = scmp.eq.s32.totalorder %s21, 1
      %p144 = scmp.ne.s32.totalorder %s139, %s141
      %p145 = scmp.eq.s32.totalorder %s21, 0
      %p146 = por %p144, %p145
      %p147 = scmp.ne.s32.totalorder %s139, %s141
      %p148 = scmp.eq.s32.totalorder %s26, 1
      %p149 = por %p147, %p148
      %p150 = scmp.ne.s32.totalorder %s141, %s142
      %p151 = scmp.eq.s32.totalorder %s26, 0
      %p152 = por %p150, %p151
      %p153 = scmp.ne.s32.totalorder %s141, %s142
      %p154 = scmp.eq.s32.totalorder %s27, 1
      %p155 = por %p153, %p154
      %p157 = scmp.ne.s32.totalorder %s142, %s156
      %p158 = scmp.eq.s32.totalorder %s27, 0
      %p159 = por %p157, %p158
      %s161 = sadd.s32 %s160, 1
      %p164 = scmp.eq.s32.totalorder %s21, 1
      %p165 = scmp.ne.s32.totalorder %s160, %s162
      %p166 = scmp.eq.s32.totalorder %s21, 0
      %p167 = por %p165, %p166
      %p168 = scmp.ne.s32.totalorder %s160, %s162
      %p169 = scmp.eq.s32.totalorder %s26, 1
      %p170 = por %p168, %p169
      %p171 = scmp.ne.s32.totalorder %s162, %s163
      %p172 = scmp.eq.s32.totalorder %s26, 0
      %p173 = por %p171, %p172
      %p174 = scmp.ne.s32.totalorder %s162, %s163
      %p175 = scmp.eq.s32.totalorder %s27, 1
      %p176 = por %p174, %p175
      %p178 = scmp.ne.s32.totalorder %s163, %s177
      %p179 = scmp.eq.s32.totalorder %s27, 0
      %p180 = por %p178, %p179
      %s181 = ssub.s32 %s21, %s28
      %p182 = scmp.eq.s32.totalorder %s181, 0
      %s184 = sadd.s32 %s183, 1
      %s185 = scalar_select %p182, %s183, %s184
      %p188 = pneg %p182
      %p189 = scmp.eq.s32.totalorder %s21, 1
      %p190 = por %p188, %p189
      %p191 = scmp.ne.s32.totalorder %s183, %s186
      %p192 = scmp.eq.s32.totalorder %s21, 0
      %p193 = por %p191, %p192
      %p194 = scmp.ne.s32.totalorder %s183, %s186
      %p195 = scmp.eq.s32.totalorder %s26, 1
      %p196 = por %p194, %p195
      %p197 = scmp.ne.s32.totalorder %s186, %s187
      %p198 = scmp.eq.s32.totalorder %s26, 0
      %p199 = por %p197, %p198
      %p200 = scmp.ne.s32.totalorder %s186, %s187
      %p201 = scmp.eq.s32.totalorder %s27, 1
      %p202 = por %p200, %p201
      %p204 = scmp.ne.s32.totalorder %s187, %s203
      %p205 = scmp.eq.s32.totalorder %s27, 0
      %p206 = por %p204, %p205
      %p207 = scmp.le.s32.totalorder 1, %s21
      %p208 = scmp.lt.s32.totalorder %s21, 3
      %p209 = pnand %p207, %p208
      %p210 = pneg %p209
      // Predicated region
      $region9: #{tpu_custom_call.1} parent=5 // pred_check
        _
      $region10: #{tpu_custom_call.1} parent=5 // pred_check_branch
        %212 = sbr.rel (%p209) target = $region12
      $region11: #{tpu_custom_call.1} parent=5 // pred_region
        %s213 = ssub.s32 %s21, 1
        // Predicated region
        $region13: #{tpu_custom_call.1} parent=11 // pred_check
          %p214 = pneg %p68
        $region14: #{tpu_custom_call.1} parent=11 // pred_check_branch
          %216 = sbr.rel (%p214) target = $region16
        $region15: #{tpu_custom_call.1} parent=11 // pred_region
          %218 = vsyncadd [#allocation10], 0
          %s220 = sshll.u32 %s1, 4
          %s221 = int_to_ptr.hbm [resolvable:$true] %s220
          %s222 = sshll.u32 [#allocation9], 4
          %s223 = int_to_ptr.vmem [resolvable:$true] %s222
          %225 = dma.hbm_to_vmem [thread:$0]  %s221, 32, %s223, [#allocation10]
        $region16: #{tpu_custom_call.1} parent=11 // pred_fallthru
          _
        // Predicated region
        $region17: #{tpu_custom_call.1} parent=11 // pred_check
          %p226 = pneg %p89
        $region18: #{tpu_custom_call.1} parent=11 // pred_check_branch
          %228 = sbr.rel (%p226) target = $region20
        $region19: #{tpu_custom_call.1} parent=11 // pred_region
          %230 = vsyncadd [#allocation10], 0
          %s231 = sshll.u32 %s2, 4
          %s232 = int_to_ptr.hbm [resolvable:$true] %s231
          %s233 = sshll.u32 [#allocation11], 4
          %s234 = int_to_ptr.vmem [resolvable:$true] %s233
          %239 = dma.hbm_to_vmem [thread:$0]  %s232, 1024, %s234, [#allocation10], 64, 64, 4
        $region20: #{tpu_custom_call.1} parent=11 // pred_fallthru
          _
        // Predicated region
        $region21: #{tpu_custom_call.1} parent=11 // pred_check
          %p240 = pneg %p110
        $region22: #{tpu_custom_call.1} parent=11 // pred_check_branch
          %242 = sbr.rel (%p240) target = $region24
        $region23: #{tpu_custom_call.1} parent=11 // pred_region
          _
        $region24: #{tpu_custom_call.1} parent=11 // pred_fallthru
          _
        // Predicated region
        $region25: #{tpu_custom_call.1} parent=11 // pred_check
          %p243 = pneg %p131
        $region26: #{tpu_custom_call.1} parent=11 // pred_check_branch
          %245 = sbr.rel (%p243) target = $region28
        $region27: #{tpu_custom_call.1} parent=11 // pred_region
          %247 = vsyncadd [#allocation13], 0
          %s248 = sshll.u32 %s4, 4
          %s249 = int_to_ptr.hbm [resolvable:$true] %s248
          %s250 = sshll.u32 [#allocation12], 4
          %s251 = int_to_ptr.vmem [resolvable:$true] %s250
          %256 = dma.hbm_to_vmem [thread:$0]  %s249, 9216, %s251, [#allocation13], 64, 64, 4
        $region28: #{tpu_custom_call.1} parent=11 // pred_fallthru
          _
        // Predicated region
        $region29: #{tpu_custom_call.1} parent=11 // pred_check
          %p257 = pneg %p152
        $region30: #{tpu_custom_call.1} parent=11 // pred_check_branch
          %259 = sbr.rel (%p257) target = $region32
        $region31: #{tpu_custom_call.1} parent=11 // pred_region
          _
        $region32: #{tpu_custom_call.1} parent=11 // pred_fallthru
          _
        // Predicated region
        $region33: #{tpu_custom_call.1} parent=11 // pred_check
          %p260 = pneg %p173
        $region34: #{tpu_custom_call.1} parent=11 // pred_check_branch
          %262 = sbr.rel (%p260) target = $region36
        $region35: #{tpu_custom_call.1} parent=11 // pred_region
          %264 = vsyncadd [#allocation13], 0
          %s265 = sshll.u32 %s6, 4
          %s266 = int_to_ptr.hbm [resolvable:$true] %s265
          %s267 = sshll.u32 [#allocation14], 4
          %s268 = int_to_ptr.vmem [resolvable:$true] %s267
          %273 = dma.hbm_to_vmem [thread:$0]  %s266, 1024, %s268, [#allocation13], 64, 64, 4
        $region36: #{tpu_custom_call.1} parent=11 // pred_fallthru
          _
      $region12: #{tpu_custom_call.1} parent=5 // pred_fallthru
        _
      %p274 = scmp.lt.s32.totalorder %s21, 2
      // Predicated region
      $region37: #{tpu_custom_call.1} parent=5 // pred_check
        %p275 = pneg %p274
      $region38: #{tpu_custom_call.1} parent=5 // pred_check_branch
        %277 = sbr.rel (%p275) target = $region40
      $region39: #{tpu_custom_call.1} parent=5 // pred_region
        // Predicated region
        $region41: #{tpu_custom_call.1} parent=39 // pred_check
          %p278 = pneg %p41
        $region42: #{tpu_custom_call.1} parent=39 // pred_check_branch
          %280 = sbr.rel (%p278) target = $region44
        $region43: #{tpu_custom_call.1} parent=39 // pred_region
          %s281 = sand.u32 %s31, 1
          %s282 = scalar_lea.sflag [#allocation7], %s281
          %s283 = sand.u32 %s31, 1
          %s284 = smul.addr %s283, 256
          %s285 = scalar_lea.vmem [#allocation6], %s284
          %s286 = smul.u32 32, %s21
          %288 = vsyncadd %s282, 0
          %s289 = smul.addr %s286, 8
          %s290 = scalar_lea.hbm %s0, %s289
          %s291 = sshll.u32 %s290, 4
          %s292 = int_to_ptr.hbm [resolvable:$true] %s291
          %s293 = sshll.u32 %s285, 4
          %s294 = int_to_ptr.vmem [resolvable:$true] %s293
          %299 = dma.hbm_to_vmem [thread:$0]  %s292, 4096, %s294, %s282, 128, 128, 8
        $region44: #{tpu_custom_call.1} parent=39 // pred_fallthru
          _
      $region40: #{tpu_custom_call.1} parent=5 // pred_fallthru
        _
      %p300 = scmp.le.s32.totalorder 1, %s21
      %p301 = scmp.lt.s32.totalorder %s21, 3
      %p302 = pnand %p300, %p301
      %p303 = pneg %p302
      // Predicated region
      $region45: #{tpu_custom_call.1} parent=5 // pred_check
        _
      $region46: #{tpu_custom_call.1} parent=5 // pred_check_branch
        %305 = sbr.rel (%p302) target = $region48
      $region47: #{tpu_custom_call.1} parent=5 // pred_region
        %s306 = ssub.s32 %s21, 1
        %s307 = sand.u32 %s34, 1
        %s308 = scalar_lea.sflag [#allocation7], %s307
        %s309 = sand.u32 %s34, 1
        %s310 = smul.addr %s309, 256
        %s311 = scalar_lea.vmem [#allocation6], %s310
        // Predicated region
        $region49: #{tpu_custom_call.1} parent=47 // pred_check
          %p312 = pneg %p47
        $region50: #{tpu_custom_call.1} parent=47 // pred_check_branch
          %314 = sbr.rel (%p312) target = $region52
        $region51: #{tpu_custom_call.1} parent=47 // pred_region
          %316 = dma.done %s308, 4096
        $region52: #{tpu_custom_call.1} parent=47 // pred_fallthru
          _
        // Predicated region
        $region53: #{tpu_custom_call.1} parent=47 // pred_check
          %p317 = pneg %p68
        $region54: #{tpu_custom_call.1} parent=47 // pred_check_branch
          %319 = sbr.rel (%p317) target = $region56
        $region55: #{tpu_custom_call.1} parent=47 // pred_region
          %321 = dma.done [#allocation10], 32
        $region56: #{tpu_custom_call.1} parent=47 // pred_fallthru
          _
        // Predicated region
        $region57: #{tpu_custom_call.1} parent=47 // pred_check
          %p322 = pneg %p89
        $region58: #{tpu_custom_call.1} parent=47 // pred_check_branch
          %324 = sbr.rel (%p322) target = $region60
        $region59: #{tpu_custom_call.1} parent=47 // pred_region
          %326 = dma.done [#allocation10], 1024
        $region60: #{tpu_custom_call.1} parent=47 // pred_fallthru
          _
        // Predicated region
        $region61: #{tpu_custom_call.1} parent=47 // pred_check
          %p327 = pneg %p131
        $region62: #{tpu_custom_call.1} parent=47 // pred_check_branch
          %329 = sbr.rel (%p327) target = $region64
        $region63: #{tpu_custom_call.1} parent=47 // pred_region
          %331 = dma.done [#allocation13], 9216
        $region64: #{tpu_custom_call.1} parent=47 // pred_fallthru
          _
        // Predicated region
        $region65: #{tpu_custom_call.1} parent=47 // pred_check
          %p332 = pneg %p173
        $region66: #{tpu_custom_call.1} parent=47 // pred_check_branch
          %334 = sbr.rel (%p332) target = $region68
        $region67: #{tpu_custom_call.1} parent=47 // pred_region
          %336 = dma.done [#allocation13], 1024
        $region68: #{tpu_custom_call.1} parent=47 // pred_fallthru
          _
        %s337 = sand.u32 %s34, 1
        %s338 = scalar_lea.sflag [#allocation7], %s337
        %s339 = sand.u32 %s34, 1
        %s340 = smul.addr %s339, 256
        %s341 = scalar_lea.vmem [#allocation6], %s340
        %p342 = pneg %p47
        %p343 = pneg %p44
        %p344 = pneg %p68
        %p345 = pneg %p65
        %p346 = pneg %p89
        %p347 = pneg %p86
        %p348 = pneg %p110
        %p349 = pneg %p107
        %p350 = pneg %p131
        %p351 = pneg %p128
        %p352 = pneg %p152
        %p353 = pneg %p149
        %p354 = pneg %p173
        %p355 = pneg %p170
        %p356 = pneg %p199
        %p357 = pneg %p196
        %s358 = sand.u32 %s186, 1
        %s359 = scalar_lea.sflag [#allocation8], %s358
        %s360 = sand.u32 %s186, 1
        %s361 = smul.addr %s360, 256
        %s362 = scalar_lea.vmem [#allocation15], %s361
        %s363 = smul.u32 32, %s26
        %s364 = smul.u32 32, %s26
        %v365 = vld [vmem:[%s311] sm:$0xff]
        %v366 = vld [vmem:[%s311 + $0x8] sm:$0xff]
        %v367 = vld [vmem:[%s311 + $0x10] sm:$0xff]
        %v368 = vld [vmem:[%s311 + $0x18] sm:$0xff]
        %v369 = vld [vmem:[%s311 + $0x20] sm:$0xff]
        %v370 = vld [vmem:[%s311 + $0x28] sm:$0xff]
        %v371 = vld [vmem:[%s311 + $0x30] sm:$0xff]
        %v372 = vld [vmem:[%s311 + $0x38] sm:$0xff]
        %v373 = vld [vmem:[%s311 + $0x40] sm:$0xff]
        %v374 = vld [vmem:[%s311 + $0x48] sm:$0xff]
        %v375 = vld [vmem:[%s311 + $0x50] sm:$0xff]
        %v376 = vld [vmem:[%s311 + $0x58] sm:$0xff]
        %v377 = vld [vmem:[%s311 + $0x60] sm:$0xff]
        %v378 = vld [vmem:[%s311 + $0x68] sm:$0xff]
        %v379 = vld [vmem:[%s311 + $0x70] sm:$0xff]
        %v380 = vld [vmem:[%s311 + $0x78] sm:$0xff]
        %v381 = vld [vmem:[%s311 + $0x80] sm:$0xff]
        %v382 = vld [vmem:[%s311 + $0x88] sm:$0xff]
        %v383 = vld [vmem:[%s311 + $0x90] sm:$0xff]
        %v384 = vld [vmem:[%s311 + $0x98] sm:$0xff]
        %v385 = vld [vmem:[%s311 + $0xa0] sm:$0xff]
        %v386 = vld [vmem:[%s311 + $0xa8] sm:$0xff]
        %v387 = vld [vmem:[%s311 + $0xb0] sm:$0xff]
        %v388 = vld [vmem:[%s311 + $0xb8] sm:$0xff]
        %v389 = vld [vmem:[%s311 + $0xc0] sm:$0xff]
        %v390 = vld [vmem:[%s311 + $0xc8] sm:$0xff]
        %v391 = vld [vmem:[%s311 + $0xd0] sm:$0xff]
        %v392 = vld [vmem:[%s311 + $0xd8] sm:$0xff]
        %v393 = vld [vmem:[%s311 + $0xe0] sm:$0xff]
        %v394 = vld [vmem:[%s311 + $0xe8] sm:$0xff]
        %v395 = vld [vmem:[%s311 + $0xf0] sm:$0xff]
        %v396 = vld [vmem:[%s311 + $0xf8] sm:$0xff]
        %v397 = vld [vmem:[#allocation9] sm:$0x1]
        %v398 = vperm.slane %v397, 0
        %v399 = vmul.f32 %v365, %v398
        %v400 = vmul.f32 %v366, %v398
        %v401 = vmul.f32 %v367, %v398
        %v402 = vmul.f32 %v368, %v398
        %v403 = vmul.f32 %v369, %v398
        %v404 = vmul.f32 %v370, %v398
        %v405 = vmul.f32 %v371, %v398
        %v406 = vmul.f32 %v372, %v398
        %v407 = vmul.f32 %v373, %v398
        %v408 = vmul.f32 %v374, %v398
        %v409 = vmul.f32 %v375, %v398
        %v410 = vmul.f32 %v376, %v398
        %v411 = vmul.f32 %v377, %v398
        %v412 = vmul.f32 %v378, %v398
        %v413 = vmul.f32 %v379, %v398
        %v414 = vmul.f32 %v380, %v398
        %v415 = vmul.f32 %v381, %v398
        %v416 = vmul.f32 %v382, %v398
        %v417 = vmul.f32 %v383, %v398
        %v418 = vmul.f32 %v384, %v398
        %v419 = vmul.f32 %v385, %v398
        %v420 = vmul.f32 %v386, %v398
        %v421 = vmul.f32 %v387, %v398
        %v422 = vmul.f32 %v388, %v398
        %v423 = vmul.f32 %v389, %v398
        %v424 = vmul.f32 %v390, %v398
        %v425 = vmul.f32 %v391, %v398
        %v426 = vmul.f32 %v392, %v398
        %v427 = vmul.f32 %v393, %v398
        %v428 = vmul.f32 %v394, %v398
        %v429 = vmul.f32 %v395, %v398
        %v430 = vmul.f32 %v396, %v398
        %v431 = vld [vmem:[#allocation9 + $0x1] sm:$0x1]
        %v432 = vperm.slane %v431, 0
        %v433 = vadd.f32 %v399, %v432
        %v434 = vadd.f32 %v400, %v432
        %v435 = vadd.f32 %v401, %v432
        %v436 = vadd.f32 %v402, %v432
        %v437 = vadd.f32 %v403, %v432
        %v438 = vadd.f32 %v404, %v432
        %v439 = vadd.f32 %v405, %v432
        %v440 = vadd.f32 %v406, %v432
        %v441 = vadd.f32 %v407, %v432
        %v442 = vadd.f32 %v408, %v432
        %v443 = vadd.f32 %v409, %v432
        %v444 = vadd.f32 %v410, %v432
        %v445 = vadd.f32 %v411, %v432
        %v446 = vadd.f32 %v412, %v432
        %v447 = vadd.f32 %v413, %v432
        %v448 = vadd.f32 %v414, %v432
        %v449 = vadd.f32 %v415, %v432
        %v450 = vadd.f32 %v416, %v432
        %v451 = vadd.f32 %v417, %v432
        %v452 = vadd.f32 %v418, %v432
        %v453 = vadd.f32 %v419, %v432
        %v454 = vadd.f32 %v420, %v432
        %v455 = vadd.f32 %v421, %v432
        %v456 = vadd.f32 %v422, %v432
        %v457 = vadd.f32 %v423, %v432
        %v458 = vadd.f32 %v424, %v432
        %v459 = vadd.f32 %v425, %v432
        %v460 = vadd.f32 %v426, %v432
        %v461 = vadd.f32 %v427, %v432
        %v462 = vadd.f32 %v428, %v432
        %v463 = vadd.f32 %v429, %v432
        %v464 = vadd.f32 %v430, %v432
        %v465 = vmax.f32 %v433, 0.0
        %v466 = vmax.f32 %v434, 0.0
        %v467 = vmax.f32 %v435, 0.0
        %v468 = vmax.f32 %v436, 0.0
        %v469 = vmax.f32 %v437, 0.0
        %v470 = vmax.f32 %v438, 0.0
        %v471 = vmax.f32 %v439, 0.0
        %v472 = vmax.f32 %v440, 0.0
        %v473 = vmax.f32 %v441, 0.0
        %v474 = vmax.f32 %v442, 0.0
        %v475 = vmax.f32 %v443, 0.0
        %v476 = vmax.f32 %v444, 0.0
        %v477 = vmax.f32 %v445, 0.0
        %v478 = vmax.f32 %v446, 0.0
        %v479 = vmax.f32 %v447, 0.0
        %v480 = vmax.f32 %v448, 0.0
        %v481 = vmax.f32 %v449, 0.0
        %v482 = vmax.f32 %v450, 0.0
        %v483 = vmax.f32 %v451, 0.0
        %v484 = vmax.f32 %v452, 0.0
        %v485 = vmax.f32 %v453, 0.0
        %v486 = vmax.f32 %v454, 0.0
        %v487 = vmax.f32 %v455, 0.0
        %v488 = vmax.f32 %v456, 0.0
        %v489 = vmax.f32 %v457, 0.0
        %v490 = vmax.f32 %v458, 0.0
        %v491 = vmax.f32 %v459, 0.0
        %v492 = vmax.f32 %v460, 0.0
        %v493 = vmax.f32 %v461, 0.0
        %v494 = vmax.f32 %v462, 0.0
        %v495 = vmax.f32 %v463, 0.0
        %v496 = vmax.f32 %v464, 0.0
        %v497 = vpack.c.bf16 %v466, %v465
        %v498 = vpack.c.bf16 %v468, %v467
        %v499 = vpack.c.bf16 %v470, %v469
        %v500 = vpack.c.bf16 %v472, %v471
        %v501 = vpack.c.bf16 %v474, %v473
        %v502 = vpack.c.bf16 %v476, %v475
        %v503 = vpack.c.bf16 %v478, %v477
        %v504 = vpack.c.bf16 %v480, %v479
        %v505 = vpack.c.bf16 %v482, %v481
        %v506 = vpack.c.bf16 %v484, %v483
        %v507 = vpack.c.bf16 %v486, %v485
        %v508 = vpack.c.bf16 %v488, %v487
        %v509 = vpack.c.bf16 %v490, %v489
        %v510 = vpack.c.bf16 %v492, %v491
        %v511 = vpack.c.bf16 %v494, %v493
        %v512 = vpack.c.bf16 %v496, %v495
        %v513 = vld [vmem:[#allocation11] sm:$0xf]
        %v514 = vld [vmem:[#allocation11 + $0x4] sm:$0xf]
        %v515 = vld [vmem:[#allocation11 + $0x8] sm:$0xf]
        %v516 = vld [vmem:[#allocation11 + $0xc] sm:$0xf]
        %v517 = vld [vmem:[#allocation11 + $0x10] sm:$0xf]
        %v518 = vld [vmem:[#allocation11 + $0x14] sm:$0xf]
        %v519 = vld [vmem:[#allocation11 + $0x18] sm:$0xf]
        %v520 = vld [vmem:[#allocation11 + $0x1c] sm:$0xf]
        %v521 = vld [vmem:[#allocation11 + $0x20] sm:$0xf]
        %v522 = vld [vmem:[#allocation11 + $0x24] sm:$0xf]
        %v523 = vld [vmem:[#allocation11 + $0x28] sm:$0xf]
        %v524 = vld [vmem:[#allocation11 + $0x2c] sm:$0xf]
        %v525 = vld [vmem:[#allocation11 + $0x30] sm:$0xf]
        %v526 = vld [vmem:[#allocation11 + $0x34] sm:$0xf]
        %v527 = vld [vmem:[#allocation11 + $0x38] sm:$0xf]
        %v528 = vld [vmem:[#allocation11 + $0x3c] sm:$0xf]
        %v545 = vunpack.c.l.b16 %v513
        %v546 = vunpack.c.l.b16 %v514
        %v547 = vunpack.c.l.b16 %v515
        %v548 = vunpack.c.l.b16 %v516
        %v549 = vunpack.c.l.b16 %v517
        %v550 = vunpack.c.l.b16 %v518
        %v551 = vunpack.c.l.b16 %v519
        %v552 = vunpack.c.l.b16 %v520
        %v553 = vunpack.c.l.b16 %v521
        %v554 = vunpack.c.l.b16 %v522
        %v555 = vunpack.c.l.b16 %v523
        %v556 = vunpack.c.l.b16 %v524
        %v557 = vunpack.c.l.b16 %v525
        %v558 = vunpack.c.l.b16 %v526
        %v559 = vunpack.c.l.b16 %v527
        %v560 = vunpack.c.l.b16 %v528
        %v561 = vpack.c.b16 %v546, %v545
        %v562 = vpack.c.b16 %v548, %v547
        %v563 = vpack.c.b16 %v550, %v549
        %v564 = vpack.c.b16 %v552, %v551
        %v565 = vpack.c.b16 %v554, %v553
        %v566 = vpack.c.b16 %v556, %v555
        %v567 = vpack.c.b16 %v558, %v557
        %v568 = vpack.c.b16 %v560, %v559
        %577 = vmatpush.bf16.msra.mxu0 %v568
        %578 = vmatpush.bf16.msra.mxu0 %v567
        %579 = vmatpush.bf16.msra.mxu0 %v566
        %580 = vmatpush.bf16.msra.mxu0 %v565
        %581 = vmatpush.bf16.msra.mxu0 %v564
        %582 = vmatpush.bf16.msra.mxu0 %v563
        %583 = vmatpush.bf16.msra.mxu0 %v562
        %584 = vmatpush.bf16.msra.mxu0 %v561
        %585 = vmatmul.bf16.gmra.mxu0 %v497
        %v586 = vpop.f32.mrf.mxu0
        %v587 = vadd.f32 0.0, %v586
        %v588 = vpop.f32.mrf.mxu0
        %v589 = vadd.f32 0.0, %v588
        %590 = vmatmul.bf16.gmra.mxu0 %v498
        %v591 = vpop.f32.mrf.mxu0
        %v592 = vadd.f32 0.0, %v591
        %v593 = vpop.f32.mrf.mxu0
        %v594 = vadd.f32 0.0, %v593
        %595 = vmatmul.bf16.gmra.mxu0 %v499
        %v596 = vpop.f32.mrf.mxu0
        %v597 = vadd.f32 0.0, %v596
        %v598 = vpop.f32.mrf.mxu0
        %v599 = vadd.f32 0.0, %v598
        %600 = vmatmul.bf16.gmra.mxu0 %v500
        %v601 = vpop.f32.mrf.mxu0
        %v602 = vadd.f32 0.0, %v601
        %v603 = vpop.f32.mrf.mxu0
        %v604 = vadd.f32 0.0, %v603
        %605 = vmatmul.bf16.gmra.mxu0 %v501
        %v606 = vpop.f32.mrf.mxu0
        %v607 = vadd.f32 0.0, %v606
        %v608 = vpop.f32.mrf.mxu0
        %v609 = vadd.f32 0.0, %v608
        %610 = vmatmul.bf16.gmra.mxu0 %v502
        %v611 = vpop.f32.mrf.mxu0
        %v612 = vadd.f32 0.0, %v611
        %v613 = vpop.f32.mrf.mxu0
        %v614 = vadd.f32 0.0, %v613
        %615 = vmatmul.bf16.gmra.mxu0 %v503
        %v616 = vpop.f32.mrf.mxu0
        %v617 = vadd.f32 0.0, %v616
        %v618 = vpop.f32.mrf.mxu0
        %v619 = vadd.f32 0.0, %v618
        %620 = vmatmul.bf16.gmra.mxu0 %v504
        %v621 = vpop.f32.mrf.mxu0
        %v622 = vadd.f32 0.0, %v621
        %v623 = vpop.f32.mrf.mxu0
        %v624 = vadd.f32 0.0, %v623
        %625 = vmatmul.bf16.gmra.mxu0 %v505
        %v626 = vpop.f32.mrf.mxu0
        %v627 = vadd.f32 0.0, %v626
        %v628 = vpop.f32.mrf.mxu0
        %v629 = vadd.f32 0.0, %v628
        %630 = vmatmul.bf16.gmra.mxu0 %v506
        %v631 = vpop.f32.mrf.mxu0
        %v632 = vadd.f32 0.0, %v631
        %v633 = vpop.f32.mrf.mxu0
        %v634 = vadd.f32 0.0, %v633
        %635 = vmatmul.bf16.gmra.mxu0 %v507
        %v636 = vpop.f32.mrf.mxu0
        %v637 = vadd.f32 0.0, %v636
        %v638 = vpop.f32.mrf.mxu0
        %v639 = vadd.f32 0.0, %v638
        %640 = vmatmul.bf16.gmra.mxu0 %v508
        %v641 = vpop.f32.mrf.mxu0
        %v642 = vadd.f32 0.0, %v641
        %v643 = vpop.f32.mrf.mxu0
        %v644 = vadd.f32 0.0, %v643
        %645 = vmatmul.bf16.gmra.mxu0 %v509
        %v646 = vpop.f32.mrf.mxu0
        %v647 = vadd.f32 0.0, %v646
        %v648 = vpop.f32.mrf.mxu0
        %v649 = vadd.f32 0.0, %v648
        %650 = vmatmul.bf16.gmra.mxu0 %v510
        %v651 = vpop.f32.mrf.mxu0
        %v652 = vadd.f32 0.0, %v651
        %v653 = vpop.f32.mrf.mxu0
        %v654 = vadd.f32 0.0, %v653
        %655 = vmatmul.bf16.gmra.mxu0 %v511
        %v656 = vpop.f32.mrf.mxu0
        %v657 = vadd.f32 0.0, %v656
        %v658 = vpop.f32.mrf.mxu0
        %v659 = vadd.f32 0.0, %v658
        %660 = vmatmul.bf16.gmra.mxu0 %v512
        %v661 = vpop.f32.mrf.mxu0
        %v662 = vadd.f32 0.0, %v661
        %v663 = vpop.f32.mrf.mxu0
        %v664 = vadd.f32 0.0, %v663
        %665 = vdwg.mxu0
        %v666 = vld [vmem:[%s3] sm:$0x1]
        %v667 = vperm.slane %v666, 0
        %v668 = vmul.f32 %v587, %v667
        %v669 = vmul.f32 %v589, %v667
        %v670 = vmul.f32 %v592, %v667
        %v671 = vmul.f32 %v594, %v667
        %v672 = vmul.f32 %v597, %v667
        %v673 = vmul.f32 %v599, %v667
        %v674 = vmul.f32 %v602, %v667
        %v675 = vmul.f32 %v604, %v667
        %v676 = vmul.f32 %v607, %v667
        %v677 = vmul.f32 %v609, %v667
        %v678 = vmul.f32 %v612, %v667
        %v679 = vmul.f32 %v614, %v667
        %v680 = vmul.f32 %v617, %v667
        %v681 = vmul.f32 %v619, %v667
        %v682 = vmul.f32 %v622, %v667
        %v683 = vmul.f32 %v624, %v667
        %v684 = vmul.f32 %v627, %v667
        %v685 = vmul.f32 %v629, %v667
        %v686 = vmul.f32 %v632, %v667
        %v687 = vmul.f32 %v634, %v667
        %v688 = vmul.f32 %v637, %v667
        %v689 = vmul.f32 %v639, %v667
        %v690 = vmul.f32 %v642, %v667
        %v691 = vmul.f32 %v644, %v667
        %v692 = vmul.f32 %v647, %v667
        %v693 = vmul.f32 %v649, %v667
        %v694 = vmul.f32 %v652, %v667
        %v695 = vmul.f32 %v654, %v667
        %v696 = vmul.f32 %v657, %v667
        %v697 = vmul.f32 %v659, %v667
        %v698 = vmul.f32 %v662, %v667
        %v699 = vmul.f32 %v664, %v667
        %v700 = vld [vmem:[%s3 + $0x1] sm:$0x1]
        %v701 = vperm.slane %v700, 0
        %v702 = vadd.f32 %v668, %v701
        %v703 = vadd.f32 %v669, %v701
        %v704 = vadd.f32 %v670, %v701
        %v705 = vadd.f32 %v671, %v701
        %v706 = vadd.f32 %v672, %v701
        %v707 = vadd.f32 %v673, %v701
        %v708 = vadd.f32 %v674, %v701
        %v709 = vadd.f32 %v675, %v701
        %v710 = vadd.f32 %v676, %v701
        %v711 = vadd.f32 %v677, %v701
        %v712 = vadd.f32 %v678, %v701
        %v713 = vadd.f32 %v679, %v701
        %v714 = vadd.f32 %v680, %v701
        %v715 = vadd.f32 %v681, %v701
        %v716 = vadd.f32 %v682, %v701
        %v717 = vadd.f32 %v683, %v701
        %v718 = vadd.f32 %v684, %v701
        %v719 = vadd.f32 %v685, %v701
        %v720 = vadd.f32 %v686, %v701
        %v721 = vadd.f32 %v687, %v701
        %v722 = vadd.f32 %v688, %v701
        %v723 = vadd.f32 %v689, %v701
        %v724 = vadd.f32 %v690, %v701
        %v725 = vadd.f32 %v691, %v701
        %v726 = vadd.f32 %v692, %v701
        %v727 = vadd.f32 %v693, %v701
        %v728 = vadd.f32 %v694, %v701
        %v729 = vadd.f32 %v695, %v701
        %v730 = vadd.f32 %v696, %v701
        %v731 = vadd.f32 %v697, %v701
        %v732 = vadd.f32 %v698, %v701
        %v733 = vadd.f32 %v699, %v701
        %v734 = vmax.f32 %v702, 0.0
        %v735 = vmax.f32 %v703, 0.0
        %v736 = vmax.f32 %v704, 0.0
        %v737 = vmax.f32 %v705, 0.0
        %v738 = vmax.f32 %v706, 0.0
        %v739 = vmax.f32 %v707, 0.0
        %v740 = vmax.f32 %v708, 0.0
        %v741 = vmax.f32 %v709, 0.0
        %v742 = vmax.f32 %v710, 0.0
        %v743 = vmax.f32 %v711, 0.0
        %v744 = vmax.f32 %v712, 0.0
        %v745 = vmax.f32 %v713, 0.0
        %v746 = vmax.f32 %v714, 0.0
        %v747 = vmax.f32 %v715, 0.0
        %v748 = vmax.f32 %v716, 0.0
        %v749 = vmax.f32 %v717, 0.0
        %v750 = vmax.f32 %v718, 0.0
        %v751 = vmax.f32 %v719, 0.0
        %v752 = vmax.f32 %v720, 0.0
        %v753 = vmax.f32 %v721, 0.0
        %v754 = vmax.f32 %v722, 0.0
        %v755 = vmax.f32 %v723, 0.0
        %v756 = vmax.f32 %v724, 0.0
        %v757 = vmax.f32 %v725, 0.0
        %v758 = vmax.f32 %v726, 0.0
        %v759 = vmax.f32 %v727, 0.0
        %v760 = vmax.f32 %v728, 0.0
        %v761 = vmax.f32 %v729, 0.0
        %v762 = vmax.f32 %v730, 0.0
        %v763 = vmax.f32 %v731, 0.0
        %v764 = vmax.f32 %v732, 0.0
        %v765 = vmax.f32 %v733, 0.0
        %766 = vst [vmem:[#allocation3] sm:$0xff] 0.0
        %767 = vst [vmem:[#allocation3 + $0x8] sm:$0xff] 0.0
        %768 = vst [vmem:[#allocation3 + $0x10] sm:$0x3] 0.0
        %769 = vst [vmem:[#allocation3 + $0x18] sm:$0xff] 0.0
        %770 = vst [vmem:[#allocation3 + $0x20] sm:$0xff] 0.0
        %771 = vst [vmem:[#allocation3 + $0x28] sm:$0x3] 0.0
        %772 = vst [vmem:[#allocation3 + $0x30] sm:$0xff] 0.0
        %773 = vst [vmem:[#allocation3 + $0x38] sm:$0xff] 0.0
        %774 = vst [vmem:[#allocation3 + $0x40] sm:$0x3] 0.0
        %775 = vst [vmem:[#allocation3 + $0x48] sm:$0xff] 0.0
        %776 = vst [vmem:[#allocation3 + $0x50] sm:$0xff] 0.0
        %777 = vst [vmem:[#allocation3 + $0x58] sm:$0x3] 0.0
        %778 = vst [vmem:[#allocation3 + $0x60] sm:$0xff] 0.0
        %779 = vst [vmem:[#allocation3 + $0x68] sm:$0xff] 0.0
        %780 = vst [vmem:[#allocation3 + $0x70] sm:$0x3] 0.0
        %781 = vst [vmem:[#allocation3 + $0x78] sm:$0xff] 0.0
        %782 = vst [vmem:[#allocation3 + $0x80] sm:$0xff] 0.0
        %783 = vst [vmem:[#allocation3 + $0x88] sm:$0x3] 0.0
        %784 = vst [vmem:[#allocation3 + $0x90] sm:$0xff] 0.0
        %785 = vst [vmem:[#allocation3 + $0x98] sm:$0xff] 0.0
        %786 = vst [vmem:[#allocation3 + $0xa0] sm:$0x3] 0.0
        %787 = vst [vmem:[#allocation3 + $0xa8] sm:$0xff] 0.0
        %788 = vst [vmem:[#allocation3 + $0xb0] sm:$0xff] 0.0
        %789 = vst [vmem:[#allocation3 + $0xb8] sm:$0x3] 0.0
        %790 = vst [vmem:[#allocation3 + $0xc0] sm:$0xff] 0.0
        %791 = vst [vmem:[#allocation3 + $0xc8] sm:$0xff] 0.0
        %792 = vst [vmem:[#allocation3 + $0xd0] sm:$0x3] 0.0
        %793 = vst [vmem:[#allocation3 + $0xd8] sm:$0xff] 0.0
        %794 = vst [vmem:[#allocation3 + $0xe0] sm:$0xff] 0.0
        %795 = vst [vmem:[#allocation3 + $0xe8] sm:$0x3] 0.0
        %796 = vst [vmem:[#allocation3 + $0xf0] sm:$0xff] 0.0
        %797 = vst [vmem:[#allocation3 + $0xf8] sm:$0xff] 0.0
        %798 = vst [vmem:[#allocation3 + $0x100] sm:$0x3] 0.0
        %799 = vst [vmem:[#allocation3 + $0x108] sm:$0xff] 0.0
        %800 = vst [vmem:[#allocation3 + $0x110] sm:$0xff] 0.0
        %801 = vst [vmem:[#allocation3 + $0x118] sm:$0x3] 0.0
        %802 = vst [vmem:[#allocation3 + $0x120] sm:$0xff] 0.0
        %803 = vst [vmem:[#allocation3 + $0x128] sm:$0xff] 0.0
        %804 = vst [vmem:[#allocation3 + $0x130] sm:$0x3] 0.0
        %805 = vst [vmem:[#allocation3 + $0x138] sm:$0xff] 0.0
        %806 = vst [vmem:[#allocation3 + $0x140] sm:$0xff] 0.0
        %807 = vst [vmem:[#allocation3 + $0x148] sm:$0x3] 0.0
        %808 = vst [vmem:[#allocation3 + $0x150] sm:$0xff] 0.0
        %809 = vst [vmem:[#allocation3 + $0x158] sm:$0xff] 0.0
        %810 = vst [vmem:[#allocation3 + $0x160] sm:$0x3] 0.0
        %811 = vst [vmem:[#allocation3 + $0x168] sm:$0xff] 0.0
        %812 = vst [vmem:[#allocation3 + $0x170] sm:$0xff] 0.0
        %813 = vst [vmem:[#allocation3 + $0x178] sm:$0x3] 0.0
        %814 = vst [vmem:[#allocation3 + $0x180] sm:$0xff] 0.0
        %815 = vst [vmem:[#allocation3 + $0x188] sm:$0xff] 0.0
        %816 = vst [vmem:[#allocation3 + $0x190] sm:$0x3] 0.0
        %817 = vst [vmem:[#allocation3 + $0x198] sm:$0xff] 0.0
        %818 = vst [vmem:[#allocation3 + $0x1a0] sm:$0xff] 0.0
        %819 = vst [vmem:[#allocation3 + $0x1a8] sm:$0x3] 0.0
        %820 = vst [vmem:[#allocation2] sm:$0xff] %v734
        %821 = vst [vmem:[#allocation2 + $0x8] sm:$0xff] %v735
        %822 = vst [vmem:[#allocation2 + $0x10] sm:$0xff] %v736
        %823 = vst [vmem:[#allocation2 + $0x18] sm:$0xff] %v737
        %824 = vst [vmem:[#allocation2 + $0x20] sm:$0xff] %v738
        %825 = vst [vmem:[#allocation2 + $0x28] sm:$0xff] %v739
        %826 = vst [vmem:[#allocation2 + $0x30] sm:$0xff] %v740
        %827 = vst [vmem:[#allocation2 + $0x38] sm:$0xff] %v741
        %828 = vst [vmem:[#allocation2 + $0x40] sm:$0xff] %v742
        %829 = vst [vmem:[#allocation2 + $0x48] sm:$0xff] %v743
        %830 = vst [vmem:[#allocation2 + $0x50] sm:$0xff] %v744
        %831 = vst [vmem:[#allocation2 + $0x58] sm:$0xff] %v745
        %832 = vst [vmem:[#allocation2 + $0x60] sm:$0xff] %v746
        %833 = vst [vmem:[#allocation2 + $0x68] sm:$0xff] %v747
        %834 = vst [vmem:[#allocation2 + $0x70] sm:$0xff] %v748
        %835 = vst [vmem:[#allocation2 + $0x78] sm:$0xff] %v749
        %836 = vst [vmem:[#allocation2 + $0x80] sm:$0xff] %v750
        %837 = vst [vmem:[#allocation2 + $0x88] sm:$0xff] %v751
        %838 = vst [vmem:[#allocation2 + $0x90] sm:$0xff] %v752
        %839 = vst [vmem:[#allocation2 + $0x98] sm:$0xff] %v753
        %840 = vst [vmem:[#allocation2 + $0xa0] sm:$0xff] %v754
        %841 = vst [vmem:[#allocation2 + $0xa8] sm:$0xff] %v755
        %842 = vst [vmem:[#allocation2 + $0xb0] sm:$0xff] %v756
        %843 = vst [vmem:[#allocation2 + $0xb8] sm:$0xff] %v757
        %844 = vst [vmem:[#allocation2 + $0xc0] sm:$0xff] %v758
        %845 = vst [vmem:[#allocation2 + $0xc8] sm:$0xff] %v759
        %846 = vst [vmem:[#allocation2 + $0xd0] sm:$0xff] %v760
        %847 = vst [vmem:[#allocation2 + $0xd8] sm:$0xff] %v761
        %848 = vst [vmem:[#allocation2 + $0xe0] sm:$0xff] %v762
        %849 = vst [vmem:[#allocation2 + $0xe8] sm:$0xff] %v763
        %850 = vst [vmem:[#allocation2 + $0xf0] sm:$0xff] %v764
        %851 = vst [vmem:[#allocation2 + $0xf8] sm:$0xff] %v765
        %s852 = scalar_lea.vmem [#allocation3], 25
        // Predicated region
        $region69: #{tpu_custom_call.1} parent=47 // pred_check
          _
        $region70: #{tpu_custom_call.1} parent=47 // pred_check_branch
          %854 = sbr.rel (0) target = $region72
        $region71: #{tpu_custom_call.1} parent=47 // pred_region
          loop: start=0, step=1, limit=1
          $region73: #{tpu_custom_call.1} parent=71 // loop_pre_header
            _
          $region74: #{tpu_custom_call.1} parent=71 // loop_header
            %s856 = sphi 0, %s860
            %p857 = scmp.ge.s32.totalorder %s856, 1
            %s861 = sphi [#allocation2], [#allocation2]
            %s862 = sphi %s852, %s852
          $region75: #{tpu_custom_call.1} parent=71 // loop_header_branch
            %859 = sbr.rel (%p857) target = $region79
          $region76: #{tpu_custom_call.1} parent=71 // loop_body
            %v863 = vld [vmem:[%s861] sm:$0xff]
            %864 = vst [vmem:[%s862] sm:$0xff] %v863
            %v865 = vld [vmem:[%s861 + $0x8] sm:$0xff]
            %866 = vst [vmem:[%s862 + $0x8] sm:$0xff] %v865
            %v867 = vld [vmem:[%s861 + $0x10] sm:$0xff]
            %868 = vst [vmem:[%s862 + $0x18] sm:$0xff] %v867
            %v869 = vld [vmem:[%s861 + $0x18] sm:$0xff]
            %870 = vst [vmem:[%s862 + $0x20] sm:$0xff] %v869
            %v871 = vld [vmem:[%s861 + $0x20] sm:$0xff]
            %872 = vst [vmem:[%s862 + $0x30] sm:$0xff] %v871
            %v873 = vld [vmem:[%s861 + $0x28] sm:$0xff]
            %874 = vst [vmem:[%s862 + $0x38] sm:$0xff] %v873
            %v875 = vld [vmem:[%s861 + $0x30] sm:$0xff]
            %876 = vst [vmem:[%s862 + $0x48] sm:$0xff] %v875
            %v877 = vld [vmem:[%s861 + $0x38] sm:$0xff]
            %878 = vst [vmem:[%s862 + $0x50] sm:$0xff] %v877
            %v879 = vld [vmem:[%s861 + $0x40] sm:$0xff]
            %880 = vst [vmem:[%s862 + $0x60] sm:$0xff] %v879
            %v881 = vld [vmem:[%s861 + $0x48] sm:$0xff]
            %882 = vst [vmem:[%s862 + $0x68] sm:$0xff] %v881
            %v883 = vld [vmem:[%s861 + $0x50] sm:$0xff]
            %884 = vst [vmem:[%s862 + $0x78] sm:$0xff] %v883
            %v885 = vld [vmem:[%s861 + $0x58] sm:$0xff]
            %886 = vst [vmem:[%s862 + $0x80] sm:$0xff] %v885
            %v887 = vld [vmem:[%s861 + $0x60] sm:$0xff]
            %888 = vst [vmem:[%s862 + $0x90] sm:$0xff] %v887
            %v889 = vld [vmem:[%s861 + $0x68] sm:$0xff]
            %890 = vst [vmem:[%s862 + $0x98] sm:$0xff] %v889
            %v891 = vld [vmem:[%s861 + $0x70] sm:$0xff]
            %892 = vst [vmem:[%s862 + $0xa8] sm:$0xff] %v891
            %v893 = vld [vmem:[%s861 + $0x78] sm:$0xff]
            %894 = vst [vmem:[%s862 + $0xb0] sm:$0xff] %v893
            %v895 = vld [vmem:[%s861 + $0x80] sm:$0xff]
            %896 = vst [vmem:[%s862 + $0xc0] sm:$0xff] %v895
            %v897 = vld [vmem:[%s861 + $0x88] sm:$0xff]
            %898 = vst [vmem:[%s862 + $0xc8] sm:$0xff] %v897
            %v899 = vld [vmem:[%s861 + $0x90] sm:$0xff]
            %900 = vst [vmem:[%s862 + $0xd8] sm:$0xff] %v899
            %v901 = vld [vmem:[%s861 + $0x98] sm:$0xff]
            %902 = vst [vmem:[%s862 + $0xe0] sm:$0xff] %v901
            %v903 = vld [vmem:[%s861 + $0xa0] sm:$0xff]
            %904 = vst [vmem:[%s862 + $0xf0] sm:$0xff] %v903
            %v905 = vld [vmem:[%s861 + $0xa8] sm:$0xff]
            %906 = vst [vmem:[%s862 + $0xf8] sm:$0xff] %v905
            %v907 = vld [vmem:[%s861 + $0xb0] sm:$0xff]
            %908 = vst [vmem:[%s862 + $0x108] sm:$0xff] %v907
            %v909 = vld [vmem:[%s861 + $0xb8] sm:$0xff]
            %910 = vst [vmem:[%s862 + $0x110] sm:$0xff] %v909
            %v911 = vld [vmem:[%s861 + $0xc0] sm:$0xff]
            %912 = vst [vmem:[%s862 + $0x120] sm:$0xff] %v911
            %v913 = vld [vmem:[%s861 + $0xc8] sm:$0xff]
            %914 = vst [vmem:[%s862 + $0x128] sm:$0xff] %v913
            %v915 = vld [vmem:[%s861 + $0xd0] sm:$0xff]
            %916 = vst [vmem:[%s862 + $0x138] sm:$0xff] %v915
            %v917 = vld [vmem:[%s861 + $0xd8] sm:$0xff]
            %918 = vst [vmem:[%s862 + $0x140] sm:$0xff] %v917
            %v919 = vld [vmem:[%s861 + $0xe0] sm:$0xff]
            %920 = vst [vmem:[%s862 + $0x150] sm:$0xff] %v919
            %v921 = vld [vmem:[%s861 + $0xe8] sm:$0xff]
            %922 = vst [vmem:[%s862 + $0x158] sm:$0xff] %v921
            %v923 = vld [vmem:[%s861 + $0xf0] sm:$0xff]
            %924 = vst [vmem:[%s862 + $0x168] sm:$0xff] %v923
            %v925 = vld [vmem:[%s861 + $0xf8] sm:$0xff]
            %926 = vst [vmem:[%s862 + $0x170] sm:$0xff] %v925
          $region77: #{tpu_custom_call.1} parent=71 // loop_footer
            %s860 = sadd.s32 1, %s856
          $region78: #{tpu_custom_call.1} parent=71 // loop_footer_branch
            %855 = sbr.rel target = $region74
          $region79: #{tpu_custom_call.1} parent=71 // loop_exit
            _
        $region72: #{tpu_custom_call.1} parent=47 // pred_fallthru
          _
        // Predicated region
        $region80: #{tpu_custom_call.1} parent=47 // pred_check
          _
        $region81: #{tpu_custom_call.1} parent=47 // pred_check_branch
          %928 = sbr.rel target = $region83
        $region82: #{tpu_custom_call.1} parent=47 // pred_region
          _
        $region83: #{tpu_custom_call.1} parent=47 // pred_fallthru
          _
        // Predicated region
        $region84: #{tpu_custom_call.1} parent=47 // pred_check
          _
        $region85: #{tpu_custom_call.1} parent=47 // pred_check_branch
          %931 = sbr.rel (0) target = $region87
        $region86: #{tpu_custom_call.1} parent=47 // pred_region
          %932 = vsyncadd [#allocation5], 4096
        $region87: #{tpu_custom_call.1} parent=47 // pred_fallthru
          _
        %s933 = smul.u32 16, 16
        %s934 = smul.u32 %s933, 1
        %s935 = sshll.u32 %s934, 4
        %936 = dma.done [#allocation5], %s935
        %v937 = vld [vmem:[#allocation3] sm:$0xff]
        %v938 = vld [vmem:[#allocation3 + $0x8] sm:$0xff]
        %v939 = vld [vmem:[#allocation3 + $0x18] sm:$0xff]
        %v940 = vld [vmem:[#allocation3 + $0x20] sm:$0xff]
        %v941 = vld [vmem:[#allocation3 + $0x30] sm:$0xff]
        %v942 = vld [vmem:[#allocation3 + $0x38] sm:$0xff]
        %v943 = vld [vmem:[#allocation3 + $0x48] sm:$0xff]
        %v944 = vld [vmem:[#allocation3 + $0x50] sm:$0xff]
        %v945 = vld [vmem:[#allocation3 + $0x60] sm:$0xff]
        %v946 = vld [vmem:[#allocation3 + $0x68] sm:$0xff]
        %v947 = vld [vmem:[#allocation3 + $0x78] sm:$0xff]
        %v948 = vld [vmem:[#allocation3 + $0x80] sm:$0xff]
        %v949 = vld [vmem:[#allocation3 + $0x90] sm:$0xff]
        %v950 = vld [vmem:[#allocation3 + $0x98] sm:$0xff]
        %v951 = vld [vmem:[#allocation3 + $0xa8] sm:$0xff]
        %v952 = vld [vmem:[#allocation3 + $0xb0] sm:$0xff]
        %v953 = vld [vmem:[#allocation3 + $0xc0] sm:$0xff]
        %v954 = vld [vmem:[#allocation3 + $0xc8] sm:$0xff]
        %v955 = vld [vmem:[#allocation3 + $0xd8] sm:$0xff]
        %v956 = vld [vmem:[#allocation3 + $0xe0] sm:$0xff]
        %v957 = vld [vmem:[#allocation3 + $0xf0] sm:$0xff]
        %v958 = vld [vmem:[#allocation3 + $0xf8] sm:$0xff]
        %v959 = vld [vmem:[#allocation3 + $0x108] sm:$0xff]
        %v960 = vld [vmem:[#allocation3 + $0x110] sm:$0xff]
        %v961 = vld [vmem:[#allocation3 + $0x120] sm:$0xff]
        %v962 = vld [vmem:[#allocation3 + $0x128] sm:$0xff]
        %v963 = vld [vmem:[#allocation3 + $0x138] sm:$0xff]
        %v964 = vld [vmem:[#allocation3 + $0x140] sm:$0xff]
        %v965 = vld [vmem:[#allocation3 + $0x150] sm:$0xff]
        %v966 = vld [vmem:[#allocation3 + $0x158] sm:$0xff]
        %v967 = vld [vmem:[#allocation3 + $0x168] sm:$0xff]
        %v968 = vld [vmem:[#allocation3 + $0x170] sm:$0xff]
        %v969 = vpack.c.bf16 %v937, %v937
        %v970 = vpack.c.bf16 %v938, %v938
        %v971 = vpack.c.bf16 %v939, %v939
        %v972 = vpack.c.bf16 %v940, %v940
        %v973 = vpack.c.bf16 %v941, %v941
        %v974 = vpack.c.bf16 %v942, %v942
        %v975 = vpack.c.bf16 %v943, %v943
        %v976 = vpack.c.bf16 %v944, %v944
        %v977 = vpack.c.bf16 %v945, %v945
        %v978 = vpack.c.bf16 %v946, %v946
        %v979 = vpack.c.bf16 %v947, %v947
        %v980 = vpack.c.bf16 %v948, %v948
        %v981 = vpack.c.bf16 %v949, %v949
        %v982 = vpack.c.bf16 %v950, %v950
        %v983 = vpack.c.bf16 %v951, %v951
        %v984 = vpack.c.bf16 %v952, %v952
        %v985 = vpack.c.bf16 %v953, %v953
        %v986 = vpack.c.bf16 %v954, %v954
        %v987 = vpack.c.bf16 %v955, %v955
        %v988 = vpack.c.bf16 %v956, %v956
        %v989 = vpack.c.bf16 %v957, %v957
        %v990 = vpack.c.bf16 %v958, %v958
        %v991 = vpack.c.bf16 %v959, %v959
        %v992 = vpack.c.bf16 %v960, %v960
        %v993 = vpack.c.bf16 %v961, %v961
        %v994 = vpack.c.bf16 %v962, %v962
        %v995 = vpack.c.bf16 %v963, %v963
        %v996 = vpack.c.bf16 %v964, %v964
        %v997 = vpack.c.bf16 %v965, %v965
        %v998 = vpack.c.bf16 %v966, %v966
        %v999 = vpack.c.bf16 %v967, %v967
        %v1000 = vpack.c.bf16 %v968, %v968
        %1001 = vst [vmem:[#allocation4] sm:$0xf] %v969
        %1002 = vst [vmem:[#allocation4 + $0x24] sm:$0xf] %v970
        %1003 = vst [vmem:[#allocation4 + $0x48] sm:$0xf] %v971
        %1004 = vst [vmem:[#allocation4 + $0x6c] sm:$0xf] %v972
        %1005 = vst [vmem:[#allocation4 + $0x90] sm:$0xf] %v973
        %1006 = vst [vmem:[#allocation4 + $0xb4] sm:$0xf] %v974
        %1007 = vst [vmem:[#allocation4 + $0xd8] sm:$0xf] %v975
        %1008 = vst [vmem:[#allocation4 + $0xfc] sm:$0xf] %v976
        %1009 = vst [vmem:[#allocation4 + $0x120] sm:$0xf] %v977
        %1010 = vst [vmem:[#allocation4 + $0x144] sm:$0xf] %v978
        %1011 = vst [vmem:[#allocation4 + $0x168] sm:$0xf] %v979
        %1012 = vst [vmem:[#allocation4 + $0x18c] sm:$0xf] %v980
        %1013 = vst [vmem:[#allocation4 + $0x1b0] sm:$0xf] %v981
        %1014 = vst [vmem:[#allocation4 + $0x1d4] sm:$0xf] %v982
        %1015 = vst [vmem:[#allocation4 + $0x1f8] sm:$0xf] %v983
        %1016 = vst [vmem:[#allocation4 + $0x21c] sm:$0xf] %v984
        %1017 = vst [vmem:[#allocation4 + $0x240] sm:$0xf] %v985
        %1018 = vst [vmem:[#allocation4 + $0x264] sm:$0xf] %v986
        %1019 = vst [vmem:[#allocation4 + $0x288] sm:$0xf] %v987
        %1020 = vst [vmem:[#allocation4 + $0x2ac] sm:$0xf] %v988
        %1021 = vst [vmem:[#allocation4 + $0x2d0] sm:$0xf] %v989
        %1022 = vst [vmem:[#allocation4 + $0x2f4] sm:$0xf] %v990
        %1023 = vst [vmem:[#allocation4 + $0x318] sm:$0xf] %v991
        %1024 = vst [vmem:[#allocation4 + $0x33c] sm:$0xf] %v992
        %1025 = vst [vmem:[#allocation4 + $0x360] sm:$0xf] %v993
        %1026 = vst [vmem:[#allocation4 + $0x384] sm:$0xf] %v994
        %1027 = vst [vmem:[#allocation4 + $0x3a8] sm:$0xf] %v995
        %1028 = vst [vmem:[#allocation4 + $0x3cc] sm:$0xf] %v996
        %1029 = vst [vmem:[#allocation4 + $0x3f0] sm:$0xf] %v997
        %1030 = vst [vmem:[#allocation4 + $0x414] sm:$0xf] %v998
        %1031 = vst [vmem:[#allocation4 + $0x438] sm:$0xf] %v999
        %1032 = vst [vmem:[#allocation4 + $0x45c] sm:$0xf] %v1000
        %v1033 = vld [vmem:[#allocation3 + $0x1] sm:$0xff]
        %v1034 = vld [vmem:[#allocation3 + $0x9] sm:$0xff]
        %v1035 = vld [vmem:[#allocation3 + $0x19] sm:$0xff]
        %v1036 = vld [vmem:[#allocation3 + $0x21] sm:$0xff]
        %v1037 = vld [vmem:[#allocation3 + $0x31] sm:$0xff]
        %v1038 = vld [vmem:[#allocation3 + $0x39] sm:$0xff]
        %v1039 = vld [vmem:[#allocation3 + $0x49] sm:$0xff]
        %v1040 = vld [vmem:[#allocation3 + $0x51] sm:$0xff]
        %v1041 = vld [vmem:[#allocation3 + $0x61] sm:$0xff]
        %v1042 = vld [vmem:[#allocation3 + $0x69] sm:$0xff]
        %v1043 = vld [vmem:[#allocation3 + $0x79] sm:$0xff]
        %v1044 = vld [vmem:[#allocation3 + $0x81] sm:$0xff]
        %v1045 = vld [vmem:[#allocation3 + $0x91] sm:$0xff]
        %v1046 = vld [vmem:[#allocation3 + $0x99] sm:$0xff]
        %v1047 = vld [vmem:[#allocation3 + $0xa9] sm:$0xff]
        %v1048 = vld [vmem:[#allocation3 + $0xb1] sm:$0xff]
        %v1049 = vld [vmem:[#allocation3 + $0xc1] sm:$0xff]
        %v1050 = vld [vmem:[#allocation3 + $0xc9] sm:$0xff]
        %v1051 = vld [vmem:[#allocation3 + $0xd9] sm:$0xff]
        %v1052 = vld [vmem:[#allocation3 + $0xe1] sm:$0xff]
        %v1053 = vld [vmem:[#allocation3 + $0xf1] sm:$0xff]
        %v1054 = vld [vmem:[#allocation3 + $0xf9] sm:$0xff]
        %v1055 = vld [vmem:[#allocation3 + $0x109] sm:$0xff]
        %v1056 = vld [vmem:[#allocation3 + $0x111] sm:$0xff]
        %v1057 = vld [vmem:[#allocation3 + $0x121] sm:$0xff]
        %v1058 = vld [vmem:[#allocation3 + $0x129] sm:$0xff]
        %v1059 = vld [vmem:[#allocation3 + $0x139] sm:$0xff]
        %v1060 = vld [vmem:[#allocation3 + $0x141] sm:$0xff]
        %v1061 = vld [vmem:[#allocation3 + $0x151] sm:$0xff]
        %v1062 = vld [vmem:[#allocation3 + $0x159] sm:$0xff]
        %v1063 = vld [vmem:[#allocation3 + $0x169] sm:$0xff]
        %v1064 = vld [vmem:[#allocation3 + $0x171] sm:$0xff]
        %v1065 = vpack.c.bf16 %v1033, %v1033
        %v1066 = vpack.c.bf16 %v1034, %v1034
        %v1067 = vpack.c.bf16 %v1035, %v1035
        %v1068 = vpack.c.bf16 %v1036, %v1036
        %v1069 = vpack.c.bf16 %v1037, %v1037
        %v1070 = vpack.c.bf16 %v1038, %v1038
        %v1071 = vpack.c.bf16 %v1039, %v1039
        %v1072 = vpack.c.bf16 %v1040, %v1040
        %v1073 = vpack.c.bf16 %v1041, %v1041
        %v1074 = vpack.c.bf16 %v1042, %v1042
        %v1075 = vpack.c.bf16 %v1043, %v1043
        %v1076 = vpack.c.bf16 %v1044, %v1044
        %v1077 = vpack.c.bf16 %v1045, %v1045
        %v1078 = vpack.c.bf16 %v1046, %v1046
        %v1079 = vpack.c.bf16 %v1047, %v1047
        %v1080 = vpack.c.bf16 %v1048, %v1048
        %v1081 = vpack.c.bf16 %v1049, %v1049
        %v1082 = vpack.c.bf16 %v1050, %v1050
        %v1083 = vpack.c.bf16 %v1051, %v1051
        %v1084 = vpack.c.bf16 %v1052, %v1052
        %v1085 = vpack.c.bf16 %v1053, %v1053
        %v1086 = vpack.c.bf16 %v1054, %v1054
        %v1087 = vpack.c.bf16 %v1055, %v1055
        %v1088 = vpack.c.bf16 %v1056, %v1056
        %v1089 = vpack.c.bf16 %v1057, %v1057
        %v1090 = vpack.c.bf16 %v1058, %v1058
        %v1091 = vpack.c.bf16 %v1059, %v1059
        %v1092 = vpack.c.bf16 %v1060, %v1060
        %v1093 = vpack.c.bf16 %v1061, %v1061
        %v1094 = vpack.c.bf16 %v1062, %v1062
        %v1095 = vpack.c.bf16 %v1063, %v1063
        %v1096 = vpack.c.bf16 %v1064, %v1064
        %1097 = vst [vmem:[#allocation4 + $0x4] sm:$0xf] %v1065
        %1098 = vst [vmem:[#allocation4 + $0x28] sm:$0xf] %v1066
        %1099 = vst [vmem:[#allocation4 + $0x4c] sm:$0xf] %v1067
        %1100 = vst [vmem:[#allocation4 + $0x70] sm:$0xf] %v1068
        %1101 = vst [vmem:[#allocation4 + $0x94] sm:$0xf] %v1069
        %1102 = vst [vmem:[#allocation4 + $0xb8] sm:$0xf] %v1070
        %1103 = vst [vmem:[#allocation4 + $0xdc] sm:$0xf] %v1071
        %1104 = vst [vmem:[#allocation4 + $0x100] sm:$0xf] %v1072
        %1105 = vst [vmem:[#allocation4 + $0x124] sm:$0xf] %v1073
        %1106 = vst [vmem:[#allocation4 + $0x148] sm:$0xf] %v1074
        %1107 = vst [vmem:[#allocation4 + $0x16c] sm:$0xf] %v1075
        %1108 = vst [vmem:[#allocation4 + $0x190] sm:$0xf] %v1076
        %1109 = vst [vmem:[#allocation4 + $0x1b4] sm:$0xf] %v1077
        %1110 = vst [vmem:[#allocation4 + $0x1d8] sm:$0xf] %v1078
        %1111 = vst [vmem:[#allocation4 + $0x1fc] sm:$0xf] %v1079
        %1112 = vst [vmem:[#allocation4 + $0x220] sm:$0xf] %v1080
        %1113 = vst [vmem:[#allocation4 + $0x244] sm:$0xf] %v1081
        %1114 = vst [vmem:[#allocation4 + $0x268] sm:$0xf] %v1082
        %1115 = vst [vmem:[#allocation4 + $0x28c] sm:$0xf] %v1083
        %1116 = vst [vmem:[#allocation4 + $0x2b0] sm:$0xf] %v1084
        %1117 = vst [vmem:[#allocation4 + $0x2d4] sm:$0xf] %v1085
        %1118 = vst [vmem:[#allocation4 + $0x2f8] sm:$0xf] %v1086
        %1119 = vst [vmem:[#allocation4 + $0x31c] sm:$0xf] %v1087
        %1120 = vst [vmem:[#allocation4 + $0x340] sm:$0xf] %v1088
        %1121 = vst [vmem:[#allocation4 + $0x364] sm:$0xf] %v1089
        %1122 = vst [vmem:[#allocation4 + $0x388] sm:$0xf] %v1090
        %1123 = vst [vmem:[#allocation4 + $0x3ac] sm:$0xf] %v1091
        %1124 = vst [vmem:[#allocation4 + $0x3d0] sm:$0xf] %v1092
        %1125 = vst [vmem:[#allocation4 + $0x3f4] sm:$0xf] %v1093
        %1126 = vst [vmem:[#allocation4 + $0x418] sm:$0xf] %v1094
        %1127 = vst [vmem:[#allocation4 + $0x43c] sm:$0xf] %v1095
        %1128 = vst [vmem:[#allocation4 + $0x460] sm:$0xf] %v1096
        %v1129 = vld [vmem:[#allocation3 + $0x2] sm:$0xff]
        %v1130 = vld [vmem:[#allocation3 + $0xa] sm:$0xff]
        %v1131 = vld [vmem:[#allocation3 + $0x1a] sm:$0xff]
        %v1132 = vld [vmem:[#allocation3 + $0x22] sm:$0xff]
        %v1133 = vld [vmem:[#allocation3 + $0x32] sm:$0xff]
        %v1134 = vld [vmem:[#allocation3 + $0x3a] sm:$0xff]
        %v1135 = vld [vmem:[#allocation3 + $0x4a] sm:$0xff]
        %v1136 = vld [vmem:[#allocation3 + $0x52] sm:$0xff]
        %v1137 = vld [vmem:[#allocation3 + $0x62] sm:$0xff]
        %v1138 = vld [vmem:[#allocation3 + $0x6a] sm:$0xff]
        %v1139 = vld [vmem:[#allocation3 + $0x7a] sm:$0xff]
        %v1140 = vld [vmem:[#allocation3 + $0x82] sm:$0xff]
        %v1141 = vld [vmem:[#allocation3 + $0x92] sm:$0xff]
        %v1142 = vld [vmem:[#allocation3 + $0x9a] sm:$0xff]
        %v1143 = vld [vmem:[#allocation3 + $0xaa] sm:$0xff]
        %v1144 = vld [vmem:[#allocation3 + $0xb2] sm:$0xff]
        %v1145 = vld [vmem:[#allocation3 + $0xc2] sm:$0xff]
        %v1146 = vld [vmem:[#allocation3 + $0xca] sm:$0xff]
        %v1147 = vld [vmem:[#allocation3 + $0xda] sm:$0xff]
        %v1148 = vld [vmem:[#allocation3 + $0xe2] sm:$0xff]
        %v1149 = vld [vmem:[#allocation3 + $0xf2] sm:$0xff]
        %v1150 = vld [vmem:[#allocation3 + $0xfa] sm:$0xff]
        %v1151 = vld [vmem:[#allocation3 + $0x10a] sm:$0xff]
        %v1152 = vld [vmem:[#allocation3 + $0x112] sm:$0xff]
        %v1153 = vld [vmem:[#allocation3 + $0x122] sm:$0xff]
        %v1154 = vld [vmem:[#allocation3 + $0x12a] sm:$0xff]
        %v1155 = vld [vmem:[#allocation3 + $0x13a] sm:$0xff]
        %v1156 = vld [vmem:[#allocation3 + $0x142] sm:$0xff]
        %v1157 = vld [vmem:[#allocation3 + $0x152] sm:$0xff]
        %v1158 = vld [vmem:[#allocation3 + $0x15a] sm:$0xff]
        %v1159 = vld [vmem:[#allocation3 + $0x16a] sm:$0xff]
        %v1160 = vld [vmem:[#allocation3 + $0x172] sm:$0xff]
        %v1161 = vpack.c.bf16 %v1129, %v1129
        %v1162 = vpack.c.bf16 %v1130, %v1130
        %v1163 = vpack.c.bf16 %v1131, %v1131
        %v1164 = vpack.c.bf16 %v1132, %v1132
        %v1165 = vpack.c.bf16 %v1133, %v1133
        %v1166 = vpack.c.bf16 %v1134, %v1134
        %v1167 = vpack.c.bf16 %v1135, %v1135
        %v1168 = vpack.c.bf16 %v1136, %v1136
        %v1169 = vpack.c.bf16 %v1137, %v1137
        %v1170 = vpack.c.bf16 %v1138, %v1138
        %v1171 = vpack.c.bf16 %v1139, %v1139
        %v1172 = vpack.c.bf16 %v1140, %v1140
        %v1173 = vpack.c.bf16 %v1141, %v1141
        %v1174 = vpack.c.bf16 %v1142, %v1142
        %v1175 = vpack.c.bf16 %v1143, %v1143
        %v1176 = vpack.c.bf16 %v1144, %v1144
        %v1177 = vpack.c.bf16 %v1145, %v1145
        %v1178 = vpack.c.bf16 %v1146, %v1146
        %v1179 = vpack.c.bf16 %v1147, %v1147
        %v1180 = vpack.c.bf16 %v1148, %v1148
        %v1181 = vpack.c.bf16 %v1149, %v1149
        %v1182 = vpack.c.bf16 %v1150, %v1150
        %v1183 = vpack.c.bf16 %v1151, %v1151
        %v1184 = vpack.c.bf16 %v1152, %v1152
        %v1185 = vpack.c.bf16 %v1153, %v1153
        %v1186 = vpack.c.bf16 %v1154, %v1154
        %v1187 = vpack.c.bf16 %v1155, %v1155
        %v1188 = vpack.c.bf16 %v1156, %v1156
        %v1189 = vpack.c.bf16 %v1157, %v1157
        %v1190 = vpack.c.bf16 %v1158, %v1158
        %v1191 = vpack.c.bf16 %v1159, %v1159
        %v1192 = vpack.c.bf16 %v1160, %v1160
        %1193 = vst [vmem:[#allocation4 + $0x8] sm:$0xf] %v1161
        %1194 = vst [vmem:[#allocation4 + $0x2c] sm:$0xf] %v1162
        %1195 = vst [vmem:[#allocation4 + $0x50] sm:$0xf] %v1163
        %1196 = vst [vmem:[#allocation4 + $0x74] sm:$0xf] %v1164
        %1197 = vst [vmem:[#allocation4 + $0x98] sm:$0xf] %v1165
        %1198 = vst [vmem:[#allocation4 + $0xbc] sm:$0xf] %v1166
        %1199 = vst [vmem:[#allocation4 + $0xe0] sm:$0xf] %v1167
        %1200 = vst [vmem:[#allocation4 + $0x104] sm:$0xf] %v1168
        %1201 = vst [vmem:[#allocation4 + $0x128] sm:$0xf] %v1169
        %1202 = vst [vmem:[#allocation4 + $0x14c] sm:$0xf] %v1170
        %1203 = vst [vmem:[#allocation4 + $0x170] sm:$0xf] %v1171
        %1204 = vst [vmem:[#allocation4 + $0x194] sm:$0xf] %v1172
        %1205 = vst [vmem:[#allocation4 + $0x1b8] sm:$0xf] %v1173
        %1206 = vst [vmem:[#allocation4 + $0x1dc] sm:$0xf] %v1174
        %1207 = vst [vmem:[#allocation4 + $0x200] sm:$0xf] %v1175
        %1208 = vst [vmem:[#allocation4 + $0x224] sm:$0xf] %v1176
        %1209 = vst [vmem:[#allocation4 + $0x248] sm:$0xf] %v1177
        %1210 = vst [vmem:[#allocation4 + $0x26c] sm:$0xf] %v1178
        %1211 = vst [vmem:[#allocation4 + $0x290] sm:$0xf] %v1179
        %1212 = vst [vmem:[#allocation4 + $0x2b4] sm:$0xf] %v1180
        %1213 = vst [vmem:[#allocation4 + $0x2d8] sm:$0xf] %v1181
        %1214 = vst [vmem:[#allocation4 + $0x2fc] sm:$0xf] %v1182
        %1215 = vst [vmem:[#allocation4 + $0x320] sm:$0xf] %v1183
        %1216 = vst [vmem:[#allocation4 + $0x344] sm:$0xf] %v1184
        %1217 = vst [vmem:[#allocation4 + $0x368] sm:$0xf] %v1185
        %1218 = vst [vmem:[#allocation4 + $0x38c] sm:$0xf] %v1186
        %1219 = vst [vmem:[#allocation4 + $0x3b0] sm:$0xf] %v1187
        %1220 = vst [vmem:[#allocation4 + $0x3d4] sm:$0xf] %v1188
        %1221 = vst [vmem:[#allocation4 + $0x3f8] sm:$0xf] %v1189
        %1222 = vst [vmem:[#allocation4 + $0x41c] sm:$0xf] %v1190
        %1223 = vst [vmem:[#allocation4 + $0x440] sm:$0xf] %v1191
        %1224 = vst [vmem:[#allocation4 + $0x464] sm:$0xf] %v1192
        %s1225 = scalar_lea.vmem [#allocation3], 24
        %v1226 = vld [vmem:[%s1225] sm:$0xff]
        %v1227 = vld [vmem:[%s1225 + $0x8] sm:$0xff]
        %v1228 = vld [vmem:[%s1225 + $0x18] sm:$0xff]
        %v1229 = vld [vmem:[%s1225 + $0x20] sm:$0xff]
        %v1230 = vld [vmem:[%s1225 + $0x30] sm:$0xff]
        %v1231 = vld [vmem:[%s1225 + $0x38] sm:$0xff]
        %v1232 = vld [vmem:[%s1225 + $0x48] sm:$0xff]
        %v1233 = vld [vmem:[%s1225 + $0x50] sm:$0xff]
        %v1234 = vld [vmem:[%s1225 + $0x60] sm:$0xff]
        %v1235 = vld [vmem:[%s1225 + $0x68] sm:$0xff]
        %v1236 = vld [vmem:[%s1225 + $0x78] sm:$0xff]
        %v1237 = vld [vmem:[%s1225 + $0x80] sm:$0xff]
        %v1238 = vld [vmem:[%s1225 + $0x90] sm:$0xff]
        %v1239 = vld [vmem:[%s1225 + $0x98] sm:$0xff]
        %v1240 = vld [vmem:[%s1225 + $0xa8] sm:$0xff]
        %v1241 = vld [vmem:[%s1225 + $0xb0] sm:$0xff]
        %v1242 = vld [vmem:[%s1225 + $0xc0] sm:$0xff]
        %v1243 = vld [vmem:[%s1225 + $0xc8] sm:$0xff]
        %v1244 = vld [vmem:[%s1225 + $0xd8] sm:$0xff]
        %v1245 = vld [vmem:[%s1225 + $0xe0] sm:$0xff]
        %v1246 = vld [vmem:[%s1225 + $0xf0] sm:$0xff]
        %v1247 = vld [vmem:[%s1225 + $0xf8] sm:$0xff]
        %v1248 = vld [vmem:[%s1225 + $0x108] sm:$0xff]
        %v1249 = vld [vmem:[%s1225 + $0x110] sm:$0xff]
        %v1250 = vld [vmem:[%s1225 + $0x120] sm:$0xff]
        %v1251 = vld [vmem:[%s1225 + $0x128] sm:$0xff]
        %v1252 = vld [vmem:[%s1225 + $0x138] sm:$0xff]
        %v1253 = vld [vmem:[%s1225 + $0x140] sm:$0xff]
        %v1254 = vld [vmem:[%s1225 + $0x150] sm:$0xff]
        %v1255 = vld [vmem:[%s1225 + $0x158] sm:$0xff]
        %v1256 = vld [vmem:[%s1225 + $0x168] sm:$0xff]
        %v1257 = vld [vmem:[%s1225 + $0x170] sm:$0xff]
        %v1258 = vpack.c.bf16 %v1226, %v1226
        %v1259 = vpack.c.bf16 %v1227, %v1227
        %v1260 = vpack.c.bf16 %v1228, %v1228
        %v1261 = vpack.c.bf16 %v1229, %v1229
        %v1262 = vpack.c.bf16 %v1230, %v1230
        %v1263 = vpack.c.bf16 %v1231, %v1231
        %v1264 = vpack.c.bf16 %v1232, %v1232
        %v1265 = vpack.c.bf16 %v1233, %v1233
        %v1266 = vpack.c.bf16 %v1234, %v1234
        %v1267 = vpack.c.bf16 %v1235, %v1235
        %v1268 = vpack.c.bf16 %v1236, %v1236
        %v1269 = vpack.c.bf16 %v1237, %v1237
        %v1270 = vpack.c.bf16 %v1238, %v1238
        %v1271 = vpack.c.bf16 %v1239, %v1239
        %v1272 = vpack.c.bf16 %v1240, %v1240
        %v1273 = vpack.c.bf16 %v1241, %v1241
        %v1274 = vpack.c.bf16 %v1242, %v1242
        %v1275 = vpack.c.bf16 %v1243, %v1243
        %v1276 = vpack.c.bf16 %v1244, %v1244
        %v1277 = vpack.c.bf16 %v1245, %v1245
        %v1278 = vpack.c.bf16 %v1246, %v1246
        %v1279 = vpack.c.bf16 %v1247, %v1247
        %v1280 = vpack.c.bf16 %v1248, %v1248
        %v1281 = vpack.c.bf16 %v1249, %v1249
        %v1282 = vpack.c.bf16 %v1250, %v1250
        %v1283 = vpack.c.bf16 %v1251, %v1251
        %v1284 = vpack.c.bf16 %v1252, %v1252
        %v1285 = vpack.c.bf16 %v1253, %v1253
        %v1286 = vpack.c.bf16 %v1254, %v1254
        %v1287 = vpack.c.bf16 %v1255, %v1255
        %v1288 = vpack.c.bf16 %v1256, %v1256
        %v1289 = vpack.c.bf16 %v1257, %v1257
        %1290 = vst [vmem:[#allocation4 + $0xc] sm:$0xf] %v1258
        %1291 = vst [vmem:[#allocation4 + $0x30] sm:$0xf] %v1259
        %1292 = vst [vmem:[#allocation4 + $0x54] sm:$0xf] %v1260
        %1293 = vst [vmem:[#allocation4 + $0x78] sm:$0xf] %v1261
        %1294 = vst [vmem:[#allocation4 + $0x9c] sm:$0xf] %v1262
        %1295 = vst [vmem:[#allocation4 + $0xc0] sm:$0xf] %v1263
        %1296 = vst [vmem:[#allocation4 + $0xe4] sm:$0xf] %v1264
        %1297 = vst [vmem:[#allocation4 + $0x108] sm:$0xf] %v1265
        %1298 = vst [vmem:[#allocation4 + $0x12c] sm:$0xf] %v1266
        %1299 = vst [vmem:[#allocation4 + $0x150] sm:$0xf] %v1267
        %1300 = vst [vmem:[#allocation4 + $0x174] sm:$0xf] %v1268
        %1301 = vst [vmem:[#allocation4 + $0x198] sm:$0xf] %v1269
        %1302 = vst [vmem:[#allocation4 + $0x1bc] sm:$0xf] %v1270
        %1303 = vst [vmem:[#allocation4 + $0x1e0] sm:$0xf] %v1271
        %1304 = vst [vmem:[#allocation4 + $0x204] sm:$0xf] %v1272
        %1305 = vst [vmem:[#allocation4 + $0x228] sm:$0xf] %v1273
        %1306 = vst [vmem:[#allocation4 + $0x24c] sm:$0xf] %v1274
        %1307 = vst [vmem:[#allocation4 + $0x270] sm:$0xf] %v1275
        %1308 = vst [vmem:[#allocation4 + $0x294] sm:$0xf] %v1276
        %1309 = vst [vmem:[#allocation4 + $0x2b8] sm:$0xf] %v1277
        %1310 = vst [vmem:[#allocation4 + $0x2dc] sm:$0xf] %v1278
        %1311 = vst [vmem:[#allocation4 + $0x300] sm:$0xf] %v1279
        %1312 = vst [vmem:[#allocation4 + $0x324] sm:$0xf] %v1280
        %1313 = vst [vmem:[#allocation4 + $0x348] sm:$0xf] %v1281
        %1314 = vst [vmem:[#allocation4 + $0x36c] sm:$0xf] %v1282
        %1315 = vst [vmem:[#allocation4 + $0x390] sm:$0xf] %v1283
        %1316 = vst [vmem:[#allocation4 + $0x3b4] sm:$0xf] %v1284
        %1317 = vst [vmem:[#allocation4 + $0x3d8] sm:$0xf] %v1285
        %1318 = vst [vmem:[#allocation4 + $0x3fc] sm:$0xf] %v1286
        %1319 = vst [vmem:[#allocation4 + $0x420] sm:$0xf] %v1287
        %1320 = vst [vmem:[#allocation4 + $0x444] sm:$0xf] %v1288
        %1321 = vst [vmem:[#allocation4 + $0x468] sm:$0xf] %v1289
        %v1322 = vld [vmem:[%s1225 + $0x1] sm:$0xff]
        %v1323 = vld [vmem:[%s1225 + $0x9] sm:$0xff]
        %v1324 = vld [vmem:[%s1225 + $0x19] sm:$0xff]
        %v1325 = vld [vmem:[%s1225 + $0x21] sm:$0xff]
        %v1326 = vld [vmem:[%s1225 + $0x31] sm:$0xff]
        %v1327 = vld [vmem:[%s1225 + $0x39] sm:$0xff]
        %v1328 = vld [vmem:[%s1225 + $0x49] sm:$0xff]
        %v1329 = vld [vmem:[%s1225 + $0x51] sm:$0xff]
        %v1330 = vld [vmem:[%s1225 + $0x61] sm:$0xff]
        %v1331 = vld [vmem:[%s1225 + $0x69] sm:$0xff]
        %v1332 = vld [vmem:[%s1225 + $0x79] sm:$0xff]
        %v1333 = vld [vmem:[%s1225 + $0x81] sm:$0xff]
        %v1334 = vld [vmem:[%s1225 + $0x91] sm:$0xff]
        %v1335 = vld [vmem:[%s1225 + $0x99] sm:$0xff]
        %v1336 = vld [vmem:[%s1225 + $0xa9] sm:$0xff]
        %v1337 = vld [vmem:[%s1225 + $0xb1] sm:$0xff]
        %v1338 = vld [vmem:[%s1225 + $0xc1] sm:$0xff]
        %v1339 = vld [vmem:[%s1225 + $0xc9] sm:$0xff]
        %v1340 = vld [vmem:[%s1225 + $0xd9] sm:$0xff]
        %v1341 = vld [vmem:[%s1225 + $0xe1] sm:$0xff]
        %v1342 = vld [vmem:[%s1225 + $0xf1] sm:$0xff]
        %v1343 = vld [vmem:[%s1225 + $0xf9] sm:$0xff]
        %v1344 = vld [vmem:[%s1225 + $0x109] sm:$0xff]
        %v1345 = vld [vmem:[%s1225 + $0x111] sm:$0xff]
        %v1346 = vld [vmem:[%s1225 + $0x121] sm:$0xff]
        %v1347 = vld [vmem:[%s1225 + $0x129] sm:$0xff]
        %v1348 = vld [vmem:[%s1225 + $0x139] sm:$0xff]
        %v1349 = vld [vmem:[%s1225 + $0x141] sm:$0xff]
        %v1350 = vld [vmem:[%s1225 + $0x151] sm:$0xff]
        %v1351 = vld [vmem:[%s1225 + $0x159] sm:$0xff]
        %v1352 = vld [vmem:[%s1225 + $0x169] sm:$0xff]
        %v1353 = vld [vmem:[%s1225 + $0x171] sm:$0xff]
        %v1354 = vpack.c.bf16 %v1322, %v1322
        %v1355 = vpack.c.bf16 %v1323, %v1323
        %v1356 = vpack.c.bf16 %v1324, %v1324
        %v1357 = vpack.c.bf16 %v1325, %v1325
        %v1358 = vpack.c.bf16 %v1326, %v1326
        %v1359 = vpack.c.bf16 %v1327, %v1327
        %v1360 = vpack.c.bf16 %v1328, %v1328
        %v1361 = vpack.c.bf16 %v1329, %v1329
        %v1362 = vpack.c.bf16 %v1330, %v1330
        %v1363 = vpack.c.bf16 %v1331, %v1331
        %v1364 = vpack.c.bf16 %v1332, %v1332
        %v1365 = vpack.c.bf16 %v1333, %v1333
        %v1366 = vpack.c.bf16 %v1334, %v1334
        %v1367 = vpack.c.bf16 %v1335, %v1335
        %v1368 = vpack.c.bf16 %v1336, %v1336
        %v1369 = vpack.c.bf16 %v1337, %v1337
        %v1370 = vpack.c.bf16 %v1338, %v1338
        %v1371 = vpack.c.bf16 %v1339, %v1339
        %v1372 = vpack.c.bf16 %v1340, %v1340
        %v1373 = vpack.c.bf16 %v1341, %v1341
        %v1374 = vpack.c.bf16 %v1342, %v1342
        %v1375 = vpack.c.bf16 %v1343, %v1343
        %v1376 = vpack.c.bf16 %v1344, %v1344
        %v1377 = vpack.c.bf16 %v1345, %v1345
        %v1378 = vpack.c.bf16 %v1346, %v1346
        %v1379 = vpack.c.bf16 %v1347, %v1347
        %v1380 = vpack.c.bf16 %v1348, %v1348
        %v1381 = vpack.c.bf16 %v1349, %v1349
        %v1382 = vpack.c.bf16 %v1350, %v1350
        %v1383 = vpack.c.bf16 %v1351, %v1351
        %v1384 = vpack.c.bf16 %v1352, %v1352
        %v1385 = vpack.c.bf16 %v1353, %v1353
        %1386 = vst [vmem:[#allocation4 + $0x10] sm:$0xf] %v1354
        %1387 = vst [vmem:[#allocation4 + $0x34] sm:$0xf] %v1355
        %1388 = vst [vmem:[#allocation4 + $0x58] sm:$0xf] %v1356
        %1389 = vst [vmem:[#allocation4 + $0x7c] sm:$0xf] %v1357
        %1390 = vst [vmem:[#allocation4 + $0xa0] sm:$0xf] %v1358
        %1391 = vst [vmem:[#allocation4 + $0xc4] sm:$0xf] %v1359
        %1392 = vst [vmem:[#allocation4 + $0xe8] sm:$0xf] %v1360
        %1393 = vst [vmem:[#allocation4 + $0x10c] sm:$0xf] %v1361
        %1394 = vst [vmem:[#allocation4 + $0x130] sm:$0xf] %v1362
        %1395 = vst [vmem:[#allocation4 + $0x154] sm:$0xf] %v1363
        %1396 = vst [vmem:[#allocation4 + $0x178] sm:$0xf] %v1364
        %1397 = vst [vmem:[#allocation4 + $0x19c] sm:$0xf] %v1365
        %1398 = vst [vmem:[#allocation4 + $0x1c0] sm:$0xf] %v1366
        %1399 = vst [vmem:[#allocation4 + $0x1e4] sm:$0xf] %v1367
        %1400 = vst [vmem:[#allocation4 + $0x208] sm:$0xf] %v1368
        %1401 = vst [vmem:[#allocation4 + $0x22c] sm:$0xf] %v1369
        %1402 = vst [vmem:[#allocation4 + $0x250] sm:$0xf] %v1370
        %1403 = vst [vmem:[#allocation4 + $0x274] sm:$0xf] %v1371
        %1404 = vst [vmem:[#allocation4 + $0x298] sm:$0xf] %v1372
        %1405 = vst [vmem:[#allocation4 + $0x2bc] sm:$0xf] %v1373
        %1406 = vst [vmem:[#allocation4 + $0x2e0] sm:$0xf] %v1374
        %1407 = vst [vmem:[#allocation4 + $0x304] sm:$0xf] %v1375
        %1408 = vst [vmem:[#allocation4 + $0x328] sm:$0xf] %v1376
        %1409 = vst [vmem:[#allocation4 + $0x34c] sm:$0xf] %v1377
        %1410 = vst [vmem:[#allocation4 + $0x370] sm:$0xf] %v1378
        %1411 = vst [vmem:[#allocation4 + $0x394] sm:$0xf] %v1379
        %1412 = vst [vmem:[#allocation4 + $0x3b8] sm:$0xf] %v1380
        %1413 = vst [vmem:[#allocation4 + $0x3dc] sm:$0xf] %v1381
        %1414 = vst [vmem:[#allocation4 + $0x400] sm:$0xf] %v1382
        %1415 = vst [vmem:[#allocation4 + $0x424] sm:$0xf] %v1383
        %1416 = vst [vmem:[#allocation4 + $0x448] sm:$0xf] %v1384
        %1417 = vst [vmem:[#allocation4 + $0x46c] sm:$0xf] %v1385
        %v1418 = vld [vmem:[%s1225 + $0x2] sm:$0xff]
        %v1419 = vld [vmem:[%s1225 + $0xa] sm:$0xff]
        %v1420 = vld [vmem:[%s1225 + $0x1a] sm:$0xff]
        %v1421 = vld [vmem:[%s1225 + $0x22] sm:$0xff]
        %v1422 = vld [vmem:[%s1225 + $0x32] sm:$0xff]
        %v1423 = vld [vmem:[%s1225 + $0x3a] sm:$0xff]
        %v1424 = vld [vmem:[%s1225 + $0x4a] sm:$0xff]
        %v1425 = vld [vmem:[%s1225 + $0x52] sm:$0xff]
        %v1426 = vld [vmem:[%s1225 + $0x62] sm:$0xff]
        %v1427 = vld [vmem:[%s1225 + $0x6a] sm:$0xff]
        %v1428 = vld [vmem:[%s1225 + $0x7a] sm:$0xff]
        %v1429 = vld [vmem:[%s1225 + $0x82] sm:$0xff]
        %v1430 = vld [vmem:[%s1225 + $0x92] sm:$0xff]
        %v1431 = vld [vmem:[%s1225 + $0x9a] sm:$0xff]
        %v1432 = vld [vmem:[%s1225 + $0xaa] sm:$0xff]
        %v1433 = vld [vmem:[%s1225 + $0xb2] sm:$0xff]
        %v1434 = vld [vmem:[%s1225 + $0xc2] sm:$0xff]
        %v1435 = vld [vmem:[%s1225 + $0xca] sm:$0xff]
        %v1436 = vld [vmem:[%s1225 + $0xda] sm:$0xff]
        %v1437 = vld [vmem:[%s1225 + $0xe2] sm:$0xff]
        %v1438 = vld [vmem:[%s1225 + $0xf2] sm:$0xff]
        %v1439 = vld [vmem:[%s1225 + $0xfa] sm:$0xff]
        %v1440 = vld [vmem:[%s1225 + $0x10a] sm:$0xff]
        %v1441 = vld [vmem:[%s1225 + $0x112] sm:$0xff]
        %v1442 = vld [vmem:[%s1225 + $0x122] sm:$0xff]
        %v1443 = vld [vmem:[%s1225 + $0x12a] sm:$0xff]
        %v1444 = vld [vmem:[%s1225 + $0x13a] sm:$0xff]
        %v1445 = vld [vmem:[%s1225 + $0x142] sm:$0xff]
        %v1446 = vld [vmem:[%s1225 + $0x152] sm:$0xff]
        %v1447 = vld [vmem:[%s1225 + $0x15a] sm:$0xff]
        %v1448 = vld [vmem:[%s1225 + $0x16a] sm:$0xff]
        %v1449 = vld [vmem:[%s1225 + $0x172] sm:$0xff]
        %v1450 = vpack.c.bf16 %v1418, %v1418
        %v1451 = vpack.c.bf16 %v1419, %v1419
        %v1452 = vpack.c.bf16 %v1420, %v1420
        %v1453 = vpack.c.bf16 %v1421, %v1421
        %v1454 = vpack.c.bf16 %v1422, %v1422
        %v1455 = vpack.c.bf16 %v1423, %v1423
        %v1456 = vpack.c.bf16 %v1424, %v1424
        %v1457 = vpack.c.bf16 %v1425, %v1425
        %v1458 = vpack.c.bf16 %v1426, %v1426
        %v1459 = vpack.c.bf16 %v1427, %v1427
        %v1460 = vpack.c.bf16 %v1428, %v1428
        %v1461 = vpack.c.bf16 %v1429, %v1429
        %v1462 = vpack.c.bf16 %v1430, %v1430
        %v1463 = vpack.c.bf16 %v1431, %v1431
        %v1464 = vpack.c.bf16 %v1432, %v1432
        %v1465 = vpack.c.bf16 %v1433, %v1433
        %v1466 = vpack.c.bf16 %v1434, %v1434
        %v1467 = vpack.c.bf16 %v1435, %v1435
        %v1468 = vpack.c.bf16 %v1436, %v1436
        %v1469 = vpack.c.bf16 %v1437, %v1437
        %v1470 = vpack.c.bf16 %v1438, %v1438
        %v1471 = vpack.c.bf16 %v1439, %v1439
        %v1472 = vpack.c.bf16 %v1440, %v1440
        %v1473 = vpack.c.bf16 %v1441, %v1441
        %v1474 = vpack.c.bf16 %v1442, %v1442
        %v1475 = vpack.c.bf16 %v1443, %v1443
        %v1476 = vpack.c.bf16 %v1444, %v1444
        %v1477 = vpack.c.bf16 %v1445, %v1445
        %v1478 = vpack.c.bf16 %v1446, %v1446
        %v1479 = vpack.c.bf16 %v1447, %v1447
        %v1480 = vpack.c.bf16 %v1448, %v1448
        %v1481 = vpack.c.bf16 %v1449, %v1449
        %1482 = vst [vmem:[#allocation4 + $0x14] sm:$0xf] %v1450
        %1483 = vst [vmem:[#allocation4 + $0x38] sm:$0xf] %v1451
        %1484 = vst [vmem:[#allocation4 + $0x5c] sm:$0xf] %v1452
        %1485 = vst [vmem:[#allocation4 + $0x80] sm:$0xf] %v1453
        %1486 = vst [vmem:[#allocation4 + $0xa4] sm:$0xf] %v1454
        %1487 = vst [vmem:[#allocation4 + $0xc8] sm:$0xf] %v1455
        %1488 = vst [vmem:[#allocation4 + $0xec] sm:$0xf] %v1456
        %1489 = vst [vmem:[#allocation4 + $0x110] sm:$0xf] %v1457
        %1490 = vst [vmem:[#allocation4 + $0x134] sm:$0xf] %v1458
        %1491 = vst [vmem:[#allocation4 + $0x158] sm:$0xf] %v1459
        %1492 = vst [vmem:[#allocation4 + $0x17c] sm:$0xf] %v1460
        %1493 = vst [vmem:[#allocation4 + $0x1a0] sm:$0xf] %v1461
        %1494 = vst [vmem:[#allocation4 + $0x1c4] sm:$0xf] %v1462
        %1495 = vst [vmem:[#allocation4 + $0x1e8] sm:$0xf] %v1463
        %1496 = vst [vmem:[#allocation4 + $0x20c] sm:$0xf] %v1464
        %1497 = vst [vmem:[#allocation4 + $0x230] sm:$0xf] %v1465
        %1498 = vst [vmem:[#allocation4 + $0x254] sm:$0xf] %v1466
        %1499 = vst [vmem:[#allocation4 + $0x278] sm:$0xf] %v1467
        %1500 = vst [vmem:[#allocation4 + $0x29c] sm:$0xf] %v1468
        %1501 = vst [vmem:[#allocation4 + $0x2c0] sm:$0xf] %v1469
        %1502 = vst [vmem:[#allocation4 + $0x2e4] sm:$0xf] %v1470
        %1503 = vst [vmem:[#allocation4 + $0x308] sm:$0xf] %v1471
        %1504 = vst [vmem:[#allocation4 + $0x32c] sm:$0xf] %v1472
        %1505 = vst [vmem:[#allocation4 + $0x350] sm:$0xf] %v1473
        %1506 = vst [vmem:[#allocation4 + $0x374] sm:$0xf] %v1474
        %1507 = vst [vmem:[#allocation4 + $0x398] sm:$0xf] %v1475
        %1508 = vst [vmem:[#allocation4 + $0x3bc] sm:$0xf] %v1476
        %1509 = vst [vmem:[#allocation4 + $0x3e0] sm:$0xf] %v1477
        %1510 = vst [vmem:[#allocation4 + $0x404] sm:$0xf] %v1478
        %1511 = vst [vmem:[#allocation4 + $0x428] sm:$0xf] %v1479
        %1512 = vst [vmem:[#allocation4 + $0x44c] sm:$0xf] %v1480
        %1513 = vst [vmem:[#allocation4 + $0x470] sm:$0xf] %v1481
        %s1514 = scalar_lea.vmem [#allocation3], 48
        %v1515 = vld [vmem:[%s1514] sm:$0xff]
        %v1516 = vld [vmem:[%s1514 + $0x8] sm:$0xff]
        %v1517 = vld [vmem:[%s1514 + $0x18] sm:$0xff]
        %v1518 = vld [vmem:[%s1514 + $0x20] sm:$0xff]
        %v1519 = vld [vmem:[%s1514 + $0x30] sm:$0xff]
        %v1520 = vld [vmem:[%s1514 + $0x38] sm:$0xff]
        %v1521 = vld [vmem:[%s1514 + $0x48] sm:$0xff]
        %v1522 = vld [vmem:[%s1514 + $0x50] sm:$0xff]
        %v1523 = vld [vmem:[%s1514 + $0x60] sm:$0xff]
        %v1524 = vld [vmem:[%s1514 + $0x68] sm:$0xff]
        %v1525 = vld [vmem:[%s1514 + $0x78] sm:$0xff]
        %v1526 = vld [vmem:[%s1514 + $0x80] sm:$0xff]
        %v1527 = vld [vmem:[%s1514 + $0x90] sm:$0xff]
        %v1528 = vld [vmem:[%s1514 + $0x98] sm:$0xff]
        %v1529 = vld [vmem:[%s1514 + $0xa8] sm:$0xff]
        %v1530 = vld [vmem:[%s1514 + $0xb0] sm:$0xff]
        %v1531 = vld [vmem:[%s1514 + $0xc0] sm:$0xff]
        %v1532 = vld [vmem:[%s1514 + $0xc8] sm:$0xff]
        %v1533 = vld [vmem:[%s1514 + $0xd8] sm:$0xff]
        %v1534 = vld [vmem:[%s1514 + $0xe0] sm:$0xff]
        %v1535 = vld [vmem:[%s1514 + $0xf0] sm:$0xff]
        %v1536 = vld [vmem:[%s1514 + $0xf8] sm:$0xff]
        %v1537 = vld [vmem:[%s1514 + $0x108] sm:$0xff]
        %v1538 = vld [vmem:[%s1514 + $0x110] sm:$0xff]
        %v1539 = vld [vmem:[%s1514 + $0x120] sm:$0xff]
        %v1540 = vld [vmem:[%s1514 + $0x128] sm:$0xff]
        %v1541 = vld [vmem:[%s1514 + $0x138] sm:$0xff]
        %v1542 = vld [vmem:[%s1514 + $0x140] sm:$0xff]
        %v1543 = vld [vmem:[%s1514 + $0x150] sm:$0xff]
        %v1544 = vld [vmem:[%s1514 + $0x158] sm:$0xff]
        %v1545 = vld [vmem:[%s1514 + $0x168] sm:$0xff]
        %v1546 = vld [vmem:[%s1514 + $0x170] sm:$0xff]
        %v1547 = vpack.c.bf16 %v1515, %v1515
        %v1548 = vpack.c.bf16 %v1516, %v1516
        %v1549 = vpack.c.bf16 %v1517, %v1517
        %v1550 = vpack.c.bf16 %v1518, %v1518
        %v1551 = vpack.c.bf16 %v1519, %v1519
        %v1552 = vpack.c.bf16 %v1520, %v1520
        %v1553 = vpack.c.bf16 %v1521, %v1521
        %v1554 = vpack.c.bf16 %v1522, %v1522
        %v1555 = vpack.c.bf16 %v1523, %v1523
        %v1556 = vpack.c.bf16 %v1524, %v1524
        %v1557 = vpack.c.bf16 %v1525, %v1525
        %v1558 = vpack.c.bf16 %v1526, %v1526
        %v1559 = vpack.c.bf16 %v1527, %v1527
        %v1560 = vpack.c.bf16 %v1528, %v1528
        %v1561 = vpack.c.bf16 %v1529, %v1529
        %v1562 = vpack.c.bf16 %v1530, %v1530
        %v1563 = vpack.c.bf16 %v1531, %v1531
        %v1564 = vpack.c.bf16 %v1532, %v1532
        %v1565 = vpack.c.bf16 %v1533, %v1533
        %v1566 = vpack.c.bf16 %v1534, %v1534
        %v1567 = vpack.c.bf16 %v1535, %v1535
        %v1568 = vpack.c.bf16 %v1536, %v1536
        %v1569 = vpack.c.bf16 %v1537, %v1537
        %v1570 = vpack.c.bf16 %v1538, %v1538
        %v1571 = vpack.c.bf16 %v1539, %v1539
        %v1572 = vpack.c.bf16 %v1540, %v1540
        %v1573 = vpack.c.bf16 %v1541, %v1541
        %v1574 = vpack.c.bf16 %v1542, %v1542
        %v1575 = vpack.c.bf16 %v1543, %v1543
        %v1576 = vpack.c.bf16 %v1544, %v1544
        %v1577 = vpack.c.bf16 %v1545, %v1545
        %v1578 = vpack.c.bf16 %v1546, %v1546
        %1579 = vst [vmem:[#allocation4 + $0x18] sm:$0xf] %v1547
        %1580 = vst [vmem:[#allocation4 + $0x3c] sm:$0xf] %v1548
        %1581 = vst [vmem:[#allocation4 + $0x60] sm:$0xf] %v1549
        %1582 = vst [vmem:[#allocation4 + $0x84] sm:$0xf] %v1550
        %1583 = vst [vmem:[#allocation4 + $0xa8] sm:$0xf] %v1551
        %1584 = vst [vmem:[#allocation4 + $0xcc] sm:$0xf] %v1552
        %1585 = vst [vmem:[#allocation4 + $0xf0] sm:$0xf] %v1553
        %1586 = vst [vmem:[#allocation4 + $0x114] sm:$0xf] %v1554
        %1587 = vst [vmem:[#allocation4 + $0x138] sm:$0xf] %v1555
        %1588 = vst [vmem:[#allocation4 + $0x15c] sm:$0xf] %v1556
        %1589 = vst [vmem:[#allocation4 + $0x180] sm:$0xf] %v1557
        %1590 = vst [vmem:[#allocation4 + $0x1a4] sm:$0xf] %v1558
        %1591 = vst [vmem:[#allocation4 + $0x1c8] sm:$0xf] %v1559
        %1592 = vst [vmem:[#allocation4 + $0x1ec] sm:$0xf] %v1560
        %1593 = vst [vmem:[#allocation4 + $0x210] sm:$0xf] %v1561
        %1594 = vst [vmem:[#allocation4 + $0x234] sm:$0xf] %v1562
        %1595 = vst [vmem:[#allocation4 + $0x258] sm:$0xf] %v1563
        %1596 = vst [vmem:[#allocation4 + $0x27c] sm:$0xf] %v1564
        %1597 = vst [vmem:[#allocation4 + $0x2a0] sm:$0xf] %v1565
        %1598 = vst [vmem:[#allocation4 + $0x2c4] sm:$0xf] %v1566
        %1599 = vst [vmem:[#allocation4 + $0x2e8] sm:$0xf] %v1567
        %1600 = vst [vmem:[#allocation4 + $0x30c] sm:$0xf] %v1568
        %1601 = vst [vmem:[#allocation4 + $0x330] sm:$0xf] %v1569
        %1602 = vst [vmem:[#allocation4 + $0x354] sm:$0xf] %v1570
        %1603 = vst [vmem:[#allocation4 + $0x378] sm:$0xf] %v1571
        %1604 = vst [vmem:[#allocation4 + $0x39c] sm:$0xf] %v1572
        %1605 = vst [vmem:[#allocation4 + $0x3c0] sm:$0xf] %v1573
        %1606 = vst [vmem:[#allocation4 + $0x3e4] sm:$0xf] %v1574
        %1607 = vst [vmem:[#allocation4 + $0x408] sm:$0xf] %v1575
        %1608 = vst [vmem:[#allocation4 + $0x42c] sm:$0xf] %v1576
        %1609 = vst [vmem:[#allocation4 + $0x450] sm:$0xf] %v1577
        %1610 = vst [vmem:[#allocation4 + $0x474] sm:$0xf] %v1578
        %v1611 = vld [vmem:[%s1514 + $0x1] sm:$0xff]
        %v1612 = vld [vmem:[%s1514 + $0x9] sm:$0xff]
        %v1613 = vld [vmem:[%s1514 + $0x19] sm:$0xff]
        %v1614 = vld [vmem:[%s1514 + $0x21] sm:$0xff]
        %v1615 = vld [vmem:[%s1514 + $0x31] sm:$0xff]
        %v1616 = vld [vmem:[%s1514 + $0x39] sm:$0xff]
        %v1617 = vld [vmem:[%s1514 + $0x49] sm:$0xff]
        %v1618 = vld [vmem:[%s1514 + $0x51] sm:$0xff]
        %v1619 = vld [vmem:[%s1514 + $0x61] sm:$0xff]
        %v1620 = vld [vmem:[%s1514 + $0x69] sm:$0xff]
        %v1621 = vld [vmem:[%s1514 + $0x79] sm:$0xff]
        %v1622 = vld [vmem:[%s1514 + $0x81] sm:$0xff]
        %v1623 = vld [vmem:[%s1514 + $0x91] sm:$0xff]
        %v1624 = vld [vmem:[%s1514 + $0x99] sm:$0xff]
        %v1625 = vld [vmem:[%s1514 + $0xa9] sm:$0xff]
        %v1626 = vld [vmem:[%s1514 + $0xb1] sm:$0xff]
        %v1627 = vld [vmem:[%s1514 + $0xc1] sm:$0xff]
        %v1628 = vld [vmem:[%s1514 + $0xc9] sm:$0xff]
        %v1629 = vld [vmem:[%s1514 + $0xd9] sm:$0xff]
        %v1630 = vld [vmem:[%s1514 + $0xe1] sm:$0xff]
        %v1631 = vld [vmem:[%s1514 + $0xf1] sm:$0xff]
        %v1632 = vld [vmem:[%s1514 + $0xf9] sm:$0xff]
        %v1633 = vld [vmem:[%s1514 + $0x109] sm:$0xff]
        %v1634 = vld [vmem:[%s1514 + $0x111] sm:$0xff]
        %v1635 = vld [vmem:[%s1514 + $0x121] sm:$0xff]
        %v1636 = vld [vmem:[%s1514 + $0x129] sm:$0xff]
        %v1637 = vld [vmem:[%s1514 + $0x139] sm:$0xff]
        %v1638 = vld [vmem:[%s1514 + $0x141] sm:$0xff]
        %v1639 = vld [vmem:[%s1514 + $0x151] sm:$0xff]
        %v1640 = vld [vmem:[%s1514 + $0x159] sm:$0xff]
        %v1641 = vld [vmem:[%s1514 + $0x169] sm:$0xff]
        %v1642 = vld [vmem:[%s1514 + $0x171] sm:$0xff]
        %v1643 = vpack.c.bf16 %v1611, %v1611
        %v1644 = vpack.c.bf16 %v1612, %v1612
        %v1645 = vpack.c.bf16 %v1613, %v1613
        %v1646 = vpack.c.bf16 %v1614, %v1614
        %v1647 = vpack.c.bf16 %v1615, %v1615
        %v1648 = vpack.c.bf16 %v1616, %v1616
        %v1649 = vpack.c.bf16 %v1617, %v1617
        %v1650 = vpack.c.bf16 %v1618, %v1618
        %v1651 = vpack.c.bf16 %v1619, %v1619
        %v1652 = vpack.c.bf16 %v1620, %v1620
        %v1653 = vpack.c.bf16 %v1621, %v1621
        %v1654 = vpack.c.bf16 %v1622, %v1622
        %v1655 = vpack.c.bf16 %v1623, %v1623
        %v1656 = vpack.c.bf16 %v1624, %v1624
        %v1657 = vpack.c.bf16 %v1625, %v1625
        %v1658 = vpack.c.bf16 %v1626, %v1626
        %v1659 = vpack.c.bf16 %v1627, %v1627
        %v1660 = vpack.c.bf16 %v1628, %v1628
        %v1661 = vpack.c.bf16 %v1629, %v1629
        %v1662 = vpack.c.bf16 %v1630, %v1630
        %v1663 = vpack.c.bf16 %v1631, %v1631
        %v1664 = vpack.c.bf16 %v1632, %v1632
        %v1665 = vpack.c.bf16 %v1633, %v1633
        %v1666 = vpack.c.bf16 %v1634, %v1634
        %v1667 = vpack.c.bf16 %v1635, %v1635
        %v1668 = vpack.c.bf16 %v1636, %v1636
        %v1669 = vpack.c.bf16 %v1637, %v1637
        %v1670 = vpack.c.bf16 %v1638, %v1638
        %v1671 = vpack.c.bf16 %v1639, %v1639
        %v1672 = vpack.c.bf16 %v1640, %v1640
        %v1673 = vpack.c.bf16 %v1641, %v1641
        %v1674 = vpack.c.bf16 %v1642, %v1642
        %1675 = vst [vmem:[#allocation4 + $0x1c] sm:$0xf] %v1643
        %1676 = vst [vmem:[#allocation4 + $0x40] sm:$0xf] %v1644
        %1677 = vst [vmem:[#allocation4 + $0x64] sm:$0xf] %v1645
        %1678 = vst [vmem:[#allocation4 + $0x88] sm:$0xf] %v1646
        %1679 = vst [vmem:[#allocation4 + $0xac] sm:$0xf] %v1647
        %1680 = vst [vmem:[#allocation4 + $0xd0] sm:$0xf] %v1648
        %1681 = vst [vmem:[#allocation4 + $0xf4] sm:$0xf] %v1649
        %1682 = vst [vmem:[#allocation4 + $0x118] sm:$0xf] %v1650
        %1683 = vst [vmem:[#allocation4 + $0x13c] sm:$0xf] %v1651
        %1684 = vst [vmem:[#allocation4 + $0x160] sm:$0xf] %v1652
        %1685 = vst [vmem:[#allocation4 + $0x184] sm:$0xf] %v1653
        %1686 = vst [vmem:[#allocation4 + $0x1a8] sm:$0xf] %v1654
        %1687 = vst [vmem:[#allocation4 + $0x1cc] sm:$0xf] %v1655
        %1688 = vst [vmem:[#allocation4 + $0x1f0] sm:$0xf] %v1656
        %1689 = vst [vmem:[#allocation4 + $0x214] sm:$0xf] %v1657
        %1690 = vst [vmem:[#allocation4 + $0x238] sm:$0xf] %v1658
        %1691 = vst [vmem:[#allocation4 + $0x25c] sm:$0xf] %v1659
        %1692 = vst [vmem:[#allocation4 + $0x280] sm:$0xf] %v1660
        %1693 = vst [vmem:[#allocation4 + $0x2a4] sm:$0xf] %v1661
        %1694 = vst [vmem:[#allocation4 + $0x2c8] sm:$0xf] %v1662
        %1695 = vst [vmem:[#allocation4 + $0x2ec] sm:$0xf] %v1663
        %1696 = vst [vmem:[#allocation4 + $0x310] sm:$0xf] %v1664
        %1697 = vst [vmem:[#allocation4 + $0x334] sm:$0xf] %v1665
        %1698 = vst [vmem:[#allocation4 + $0x358] sm:$0xf] %v1666
        %1699 = vst [vmem:[#allocation4 + $0x37c] sm:$0xf] %v1667
        %1700 = vst [vmem:[#allocation4 + $0x3a0] sm:$0xf] %v1668
        %1701 = vst [vmem:[#allocation4 + $0x3c4] sm:$0xf] %v1669
        %1702 = vst [vmem:[#allocation4 + $0x3e8] sm:$0xf] %v1670
        %1703 = vst [vmem:[#allocation4 + $0x40c] sm:$0xf] %v1671
        %1704 = vst [vmem:[#allocation4 + $0x430] sm:$0xf] %v1672
        %1705 = vst [vmem:[#allocation4 + $0x454] sm:$0xf] %v1673
        %1706 = vst [vmem:[#allocation4 + $0x478] sm:$0xf] %v1674
        %v1707 = vld [vmem:[%s1514 + $0x2] sm:$0xff]
        %v1708 = vld [vmem:[%s1514 + $0xa] sm:$0xff]
        %v1709 = vld [vmem:[%s1514 + $0x1a] sm:$0xff]
        %v1710 = vld [vmem:[%s1514 + $0x22] sm:$0xff]
        %v1711 = vld [vmem:[%s1514 + $0x32] sm:$0xff]
        %v1712 = vld [vmem:[%s1514 + $0x3a] sm:$0xff]
        %v1713 = vld [vmem:[%s1514 + $0x4a] sm:$0xff]
        %v1714 = vld [vmem:[%s1514 + $0x52] sm:$0xff]
        %v1715 = vld [vmem:[%s1514 + $0x62] sm:$0xff]
        %v1716 = vld [vmem:[%s1514 + $0x6a] sm:$0xff]
        %v1717 = vld [vmem:[%s1514 + $0x7a] sm:$0xff]
        %v1718 = vld [vmem:[%s1514 + $0x82] sm:$0xff]
        %v1719 = vld [vmem:[%s1514 + $0x92] sm:$0xff]
        %v1720 = vld [vmem:[%s1514 + $0x9a] sm:$0xff]
        %v1721 = vld [vmem:[%s1514 + $0xaa] sm:$0xff]
        %v1722 = vld [vmem:[%s1514 + $0xb2] sm:$0xff]
        %v1723 = vld [vmem:[%s1514 + $0xc2] sm:$0xff]
        %v1724 = vld [vmem:[%s1514 + $0xca] sm:$0xff]
        %v1725 = vld [vmem:[%s1514 + $0xda] sm:$0xff]
        %v1726 = vld [vmem:[%s1514 + $0xe2] sm:$0xff]
        %v1727 = vld [vmem:[%s1514 + $0xf2] sm:$0xff]
        %v1728 = vld [vmem:[%s1514 + $0xfa] sm:$0xff]
        %v1729 = vld [vmem:[%s1514 + $0x10a] sm:$0xff]
        %v1730 = vld [vmem:[%s1514 + $0x112] sm:$0xff]
        %v1731 = vld [vmem:[%s1514 + $0x122] sm:$0xff]
        %v1732 = vld [vmem:[%s1514 + $0x12a] sm:$0xff]
        %v1733 = vld [vmem:[%s1514 + $0x13a] sm:$0xff]
        %v1734 = vld [vmem:[%s1514 + $0x142] sm:$0xff]
        %v1735 = vld [vmem:[%s1514 + $0x152] sm:$0xff]
        %v1736 = vld [vmem:[%s1514 + $0x15a] sm:$0xff]
        %v1737 = vld [vmem:[%s1514 + $0x16a] sm:$0xff]
        %v1738 = vld [vmem:[%s1514 + $0x172] sm:$0xff]
        %v1739 = vpack.c.bf16 %v1707, %v1707
        %v1740 = vpack.c.bf16 %v1708, %v1708
        %v1741 = vpack.c.bf16 %v1709, %v1709
        %v1742 = vpack.c.bf16 %v1710, %v1710
        %v1743 = vpack.c.bf16 %v1711, %v1711
        %v1744 = vpack.c.bf16 %v1712, %v1712
        %v1745 = vpack.c.bf16 %v1713, %v1713
        %v1746 = vpack.c.bf16 %v1714, %v1714
        %v1747 = vpack.c.bf16 %v1715, %v1715
        %v1748 = vpack.c.bf16 %v1716, %v1716
        %v1749 = vpack.c.bf16 %v1717, %v1717
        %v1750 = vpack.c.bf16 %v1718, %v1718
        %v1751 = vpack.c.bf16 %v1719, %v1719
        %v1752 = vpack.c.bf16 %v1720, %v1720
        %v1753 = vpack.c.bf16 %v1721, %v1721
        %v1754 = vpack.c.bf16 %v1722, %v1722
        %v1755 = vpack.c.bf16 %v1723, %v1723
        %v1756 = vpack.c.bf16 %v1724, %v1724
        %v1757 = vpack.c.bf16 %v1725, %v1725
        %v1758 = vpack.c.bf16 %v1726, %v1726
        %v1759 = vpack.c.bf16 %v1727, %v1727
        %v1760 = vpack.c.bf16 %v1728, %v1728
        %v1761 = vpack.c.bf16 %v1729, %v1729
        %v1762 = vpack.c.bf16 %v1730, %v1730
        %v1763 = vpack.c.bf16 %v1731, %v1731
        %v1764 = vpack.c.bf16 %v1732, %v1732
        %v1765 = vpack.c.bf16 %v1733, %v1733
        %v1766 = vpack.c.bf16 %v1734, %v1734
        %v1767 = vpack.c.bf16 %v1735, %v1735
        %v1768 = vpack.c.bf16 %v1736, %v1736
        %v1769 = vpack.c.bf16 %v1737, %v1737
        %v1770 = vpack.c.bf16 %v1738, %v1738
        %1771 = vst [vmem:[#allocation4 + $0x20] sm:$0xf] %v1739
        %1772 = vst [vmem:[#allocation4 + $0x44] sm:$0xf] %v1740
        %1773 = vst [vmem:[#allocation4 + $0x68] sm:$0xf] %v1741
        %1774 = vst [vmem:[#allocation4 + $0x8c] sm:$0xf] %v1742
        %1775 = vst [vmem:[#allocation4 + $0xb0] sm:$0xf] %v1743
        %1776 = vst [vmem:[#allocation4 + $0xd4] sm:$0xf] %v1744
        %1777 = vst [vmem:[#allocation4 + $0xf8] sm:$0xf] %v1745
        %1778 = vst [vmem:[#allocation4 + $0x11c] sm:$0xf] %v1746
        %1779 = vst [vmem:[#allocation4 + $0x140] sm:$0xf] %v1747
        %1780 = vst [vmem:[#allocation4 + $0x164] sm:$0xf] %v1748
        %1781 = vst [vmem:[#allocation4 + $0x188] sm:$0xf] %v1749
        %1782 = vst [vmem:[#allocation4 + $0x1ac] sm:$0xf] %v1750
        %1783 = vst [vmem:[#allocation4 + $0x1d0] sm:$0xf] %v1751
        %1784 = vst [vmem:[#allocation4 + $0x1f4] sm:$0xf] %v1752
        %1785 = vst [vmem:[#allocation4 + $0x218] sm:$0xf] %v1753
        %1786 = vst [vmem:[#allocation4 + $0x23c] sm:$0xf] %v1754
        %1787 = vst [vmem:[#allocation4 + $0x260] sm:$0xf] %v1755
        %1788 = vst [vmem:[#allocation4 + $0x284] sm:$0xf] %v1756
        %1789 = vst [vmem:[#allocation4 + $0x2a8] sm:$0xf] %v1757
        %1790 = vst [vmem:[#allocation4 + $0x2cc] sm:$0xf] %v1758
        %1791 = vst [vmem:[#allocation4 + $0x2f0] sm:$0xf] %v1759
        %1792 = vst [vmem:[#allocation4 + $0x314] sm:$0xf] %v1760
        %1793 = vst [vmem:[#allocation4 + $0x338] sm:$0xf] %v1761
        %1794 = vst [vmem:[#allocation4 + $0x35c] sm:$0xf] %v1762
        %1795 = vst [vmem:[#allocation4 + $0x380] sm:$0xf] %v1763
        %1796 = vst [vmem:[#allocation4 + $0x3a4] sm:$0xf] %v1764
        %1797 = vst [vmem:[#allocation4 + $0x3c8] sm:$0xf] %v1765
        %1798 = vst [vmem:[#allocation4 + $0x3ec] sm:$0xf] %v1766
        %1799 = vst [vmem:[#allocation4 + $0x410] sm:$0xf] %v1767
        %1800 = vst [vmem:[#allocation4 + $0x434] sm:$0xf] %v1768
        %1801 = vst [vmem:[#allocation4 + $0x458] sm:$0xf] %v1769
        %1802 = vst [vmem:[#allocation4 + $0x47c] sm:$0xf] %v1770
        %v1803 = vld [vmem:[#allocation4] sm:$0xff]
        %v1804 = vld [vmem:[#allocation4 + $0x8] sm:$0xff]
        %v1805 = vld [vmem:[#allocation4 + $0x10] sm:$0xff]
        %v1806 = vld [vmem:[#allocation4 + $0x18] sm:$0xff]
        %v1807 = vld [vmem:[#allocation4 + $0x20] sm:$0xf]
        %v1808 = vld [vmem:[#allocation4 + $0x24] sm:$0xff]
        %v1809 = vld [vmem:[#allocation4 + $0x2c] sm:$0xff]
        %v1810 = vld [vmem:[#allocation4 + $0x34] sm:$0xff]
        %v1811 = vld [vmem:[#allocation4 + $0x3c] sm:$0xff]
        %v1812 = vld [vmem:[#allocation4 + $0x44] sm:$0xf]
        %v1813 = vld [vmem:[#allocation4 + $0x48] sm:$0xff]
        %v1814 = vld [vmem:[#allocation4 + $0x50] sm:$0xff]
        %v1815 = vld [vmem:[#allocation4 + $0x58] sm:$0xff]
        %v1816 = vld [vmem:[#allocation4 + $0x60] sm:$0xff]
        %v1817 = vld [vmem:[#allocation4 + $0x68] sm:$0xf]
        %v1818 = vld [vmem:[#allocation4 + $0x6c] sm:$0xff]
        %v1819 = vld [vmem:[#allocation4 + $0x74] sm:$0xff]
        %v1820 = vld [vmem:[#allocation4 + $0x7c] sm:$0xff]
        %v1821 = vld [vmem:[#allocation4 + $0x84] sm:$0xff]
        %v1822 = vld [vmem:[#allocation4 + $0x8c] sm:$0xf]
        %v1823 = vld [vmem:[#allocation4 + $0x90] sm:$0xff]
        %v1824 = vld [vmem:[#allocation4 + $0x98] sm:$0xff]
        %v1825 = vld [vmem:[#allocation4 + $0xa0] sm:$0xff]
        %v1826 = vld [vmem:[#allocation4 + $0xa8] sm:$0xff]
        %v1827 = vld [vmem:[#allocation4 + $0xb0] sm:$0xf]
        %v1828 = vld [vmem:[#allocation4 + $0xb4] sm:$0xff]
        %v1829 = vld [vmem:[#allocation4 + $0xbc] sm:$0xff]
        %v1830 = vld [vmem:[#allocation4 + $0xc4] sm:$0xff]
        %v1831 = vld [vmem:[#allocation4 + $0xcc] sm:$0xff]
        %v1832 = vld [vmem:[#allocation4 + $0xd4] sm:$0xf]
        %v1833 = vld [vmem:[#allocation4 + $0xd8] sm:$0xff]
        %v1834 = vld [vmem:[#allocation4 + $0xe0] sm:$0xff]
        %v1835 = vld [vmem:[#allocation4 + $0xe8] sm:$0xff]
        %v1836 = vld [vmem:[#allocation4 + $0xf0] sm:$0xff]
        %v1837 = vld [vmem:[#allocation4 + $0xf8] sm:$0xf]
        %v1838 = vld [vmem:[#allocation4 + $0xfc] sm:$0xff]
        %v1839 = vld [vmem:[#allocation4 + $0x104] sm:$0xff]
        %v1840 = vld [vmem:[#allocation4 + $0x10c] sm:$0xff]
        %v1841 = vld [vmem:[#allocation4 + $0x114] sm:$0xff]
        %v1842 = vld [vmem:[#allocation4 + $0x11c] sm:$0xf]
        %v1843 = vld [vmem:[#allocation4 + $0x120] sm:$0xff]
        %v1844 = vld [vmem:[#allocation4 + $0x128] sm:$0xff]
        %v1845 = vld [vmem:[#allocation4 + $0x130] sm:$0xff]
        %v1846 = vld [vmem:[#allocation4 + $0x138] sm:$0xff]
        %v1847 = vld [vmem:[#allocation4 + $0x140] sm:$0xf]
        %v1848 = vld [vmem:[#allocation4 + $0x144] sm:$0xff]
        %v1849 = vld [vmem:[#allocation4 + $0x14c] sm:$0xff]
        %v1850 = vld [vmem:[#allocation4 + $0x154] sm:$0xff]
        %v1851 = vld [vmem:[#allocation4 + $0x15c] sm:$0xff]
        %v1852 = vld [vmem:[#allocation4 + $0x164] sm:$0xf]
        %v1853 = vld [vmem:[#allocation4 + $0x168] sm:$0xff]
        %v1854 = vld [vmem:[#allocation4 + $0x170] sm:$0xff]
        %v1855 = vld [vmem:[#allocation4 + $0x178] sm:$0xff]
        %v1856 = vld [vmem:[#allocation4 + $0x180] sm:$0xff]
        %v1857 = vld [vmem:[#allocation4 + $0x188] sm:$0xf]
        %v1858 = vld [vmem:[#allocation4 + $0x18c] sm:$0xff]
        %v1859 = vld [vmem:[#allocation4 + $0x194] sm:$0xff]
        %v1860 = vld [vmem:[#allocation4 + $0x19c] sm:$0xff]
        %v1861 = vld [vmem:[#allocation4 + $0x1a4] sm:$0xff]
        %v1862 = vld [vmem:[#allocation4 + $0x1ac] sm:$0xf]
        %v1863 = vld [vmem:[#allocation4 + $0x1b0] sm:$0xff]
        %v1864 = vld [vmem:[#allocation4 + $0x1b8] sm:$0xff]
        %v1865 = vld [vmem:[#allocation4 + $0x1c0] sm:$0xff]
        %v1866 = vld [vmem:[#allocation4 + $0x1c8] sm:$0xff]
        %v1867 = vld [vmem:[#allocation4 + $0x1d0] sm:$0xf]
        %v1868 = vld [vmem:[#allocation4 + $0x1d4] sm:$0xff]
        %v1869 = vld [vmem:[#allocation4 + $0x1dc] sm:$0xff]
        %v1870 = vld [vmem:[#allocation4 + $0x1e4] sm:$0xff]
        %v1871 = vld [vmem:[#allocation4 + $0x1ec] sm:$0xff]
        %v1872 = vld [vmem:[#allocation4 + $0x1f4] sm:$0xf]
        %v1873 = vld [vmem:[#allocation4 + $0x1f8] sm:$0xff]
        %v1874 = vld [vmem:[#allocation4 + $0x200] sm:$0xff]
        %v1875 = vld [vmem:[#allocation4 + $0x208] sm:$0xff]
        %v1876 = vld [vmem:[#allocation4 + $0x210] sm:$0xff]
        %v1877 = vld [vmem:[#allocation4 + $0x218] sm:$0xf]
        %v1878 = vld [vmem:[#allocation4 + $0x21c] sm:$0xff]
        %v1879 = vld [vmem:[#allocation4 + $0x224] sm:$0xff]
        %v1880 = vld [vmem:[#allocation4 + $0x22c] sm:$0xff]
        %v1881 = vld [vmem:[#allocation4 + $0x234] sm:$0xff]
        %v1882 = vld [vmem:[#allocation4 + $0x23c] sm:$0xf]
        %v1883 = vld [vmem:[#allocation4 + $0x240] sm:$0xff]
        %v1884 = vld [vmem:[#allocation4 + $0x248] sm:$0xff]
        %v1885 = vld [vmem:[#allocation4 + $0x250] sm:$0xff]
        %v1886 = vld [vmem:[#allocation4 + $0x258] sm:$0xff]
        %v1887 = vld [vmem:[#allocation4 + $0x260] sm:$0xf]
        %v1888 = vld [vmem:[#allocation4 + $0x264] sm:$0xff]
        %v1889 = vld [vmem:[#allocation4 + $0x26c] sm:$0xff]
        %v1890 = vld [vmem:[#allocation4 + $0x274] sm:$0xff]
        %v1891 = vld [vmem:[#allocation4 + $0x27c] sm:$0xff]
        %v1892 = vld [vmem:[#allocation4 + $0x284] sm:$0xf]
        %v1893 = vld [vmem:[#allocation4 + $0x288] sm:$0xff]
        %v1894 = vld [vmem:[#allocation4 + $0x290] sm:$0xff]
        %v1895 = vld [vmem:[#allocation4 + $0x298] sm:$0xff]
        %v1896 = vld [vmem:[#allocation4 + $0x2a0] sm:$0xff]
        %v1897 = vld [vmem:[#allocation4 + $0x2a8] sm:$0xf]
        %v1898 = vld [vmem:[#allocation4 + $0x2ac] sm:$0xff]
        %v1899 = vld [vmem:[#allocation4 + $0x2b4] sm:$0xff]
        %v1900 = vld [vmem:[#allocation4 + $0x2bc] sm:$0xff]
        %v1901 = vld [vmem:[#allocation4 + $0x2c4] sm:$0xff]
        %v1902 = vld [vmem:[#allocation4 + $0x2cc] sm:$0xf]
        %v1903 = vld [vmem:[#allocation4 + $0x2d0] sm:$0xff]
        %v1904 = vld [vmem:[#allocation4 + $0x2d8] sm:$0xff]
        %v1905 = vld [vmem:[#allocation4 + $0x2e0] sm:$0xff]
        %v1906 = vld [vmem:[#allocation4 + $0x2e8] sm:$0xff]
        %v1907 = vld [vmem:[#allocation4 + $0x2f0] sm:$0xf]
        %v1908 = vld [vmem:[#allocation4 + $0x2f4] sm:$0xff]
        %v1909 = vld [vmem:[#allocation4 + $0x2fc] sm:$0xff]
        %v1910 = vld [vmem:[#allocation4 + $0x304] sm:$0xff]
        %v1911 = vld [vmem:[#allocation4 + $0x30c] sm:$0xff]
        %v1912 = vld [vmem:[#allocation4 + $0x314] sm:$0xf]
        %v1913 = vld [vmem:[#allocation4 + $0x318] sm:$0xff]
        %v1914 = vld [vmem:[#allocation4 + $0x320] sm:$0xff]
        %v1915 = vld [vmem:[#allocation4 + $0x328] sm:$0xff]
        %v1916 = vld [vmem:[#allocation4 + $0x330] sm:$0xff]
        %v1917 = vld [vmem:[#allocation4 + $0x338] sm:$0xf]
        %v1918 = vld [vmem:[#allocation4 + $0x33c] sm:$0xff]
        %v1919 = vld [vmem:[#allocation4 + $0x344] sm:$0xff]
        %v1920 = vld [vmem:[#allocation4 + $0x34c] sm:$0xff]
        %v1921 = vld [vmem:[#allocation4 + $0x354] sm:$0xff]
        %v1922 = vld [vmem:[#allocation4 + $0x35c] sm:$0xf]
        %v1923 = vld [vmem:[#allocation4 + $0x360] sm:$0xff]
        %v1924 = vld [vmem:[#allocation4 + $0x368] sm:$0xff]
        %v1925 = vld [vmem:[#allocation4 + $0x370] sm:$0xff]
        %v1926 = vld [vmem:[#allocation4 + $0x378] sm:$0xff]
        %v1927 = vld [vmem:[#allocation4 + $0x380] sm:$0xf]
        %v1928 = vld [vmem:[#allocation4 + $0x384] sm:$0xff]
        %v1929 = vld [vmem:[#allocation4 + $0x38c] sm:$0xff]
        %v1930 = vld [vmem:[#allocation4 + $0x394] sm:$0xff]
        %v1931 = vld [vmem:[#allocation4 + $0x39c] sm:$0xff]
        %v1932 = vld [vmem:[#allocation4 + $0x3a4] sm:$0xf]
        %v1933 = vld [vmem:[#allocation4 + $0x3a8] sm:$0xff]
        %v1934 = vld [vmem:[#allocation4 + $0x3b0] sm:$0xff]
        %v1935 = vld [vmem:[#allocation4 + $0x3b8] sm:$0xff]
        %v1936 = vld [vmem:[#allocation4 + $0x3c0] sm:$0xff]
        %v1937 = vld [vmem:[#allocation4 + $0x3c8] sm:$0xf]
        %v1938 = vld [vmem:[#allocation4 + $0x3cc] sm:$0xff]
        %v1939 = vld [vmem:[#allocation4 + $0x3d4] sm:$0xff]
        %v1940 = vld [vmem:[#allocation4 + $0x3dc] sm:$0xff]
        %v1941 = vld [vmem:[#allocation4 + $0x3e4] sm:$0xff]
        %v1942 = vld [vmem:[#allocation4 + $0x3ec] sm:$0xf]
        %v1943 = vld [vmem:[#allocation4 + $0x3f0] sm:$0xff]
        %v1944 = vld [vmem:[#allocation4 + $0x3f8] sm:$0xff]
        %v1945 = vld [vmem:[#allocation4 + $0x400] sm:$0xff]
        %v1946 = vld [vmem:[#allocation4 + $0x408] sm:$0xff]
        %v1947 = vld [vmem:[#allocation4 + $0x410] sm:$0xf]
        %v1948 = vld [vmem:[#allocation4 + $0x414] sm:$0xff]
        %v1949 = vld [vmem:[#allocation4 + $0x41c] sm:$0xff]
        %v1950 = vld [vmem:[#allocation4 + $0x424] sm:$0xff]
        %v1951 = vld [vmem:[#allocation4 + $0x42c] sm:$0xff]
        %v1952 = vld [vmem:[#allocation4 + $0x434] sm:$0xf]
        %v1953 = vld [vmem:[#allocation4 + $0x438] sm:$0xff]
        %v1954 = vld [vmem:[#allocation4 + $0x440] sm:$0xff]
        %v1955 = vld [vmem:[#allocation4 + $0x448] sm:$0xff]
        %v1956 = vld [vmem:[#allocation4 + $0x450] sm:$0xff]
        %v1957 = vld [vmem:[#allocation4 + $0x458] sm:$0xf]
        %v1958 = vld [vmem:[#allocation4 + $0x45c] sm:$0xff]
        %v1959 = vld [vmem:[#allocation4 + $0x464] sm:$0xff]
        %v1960 = vld [vmem:[#allocation4 + $0x46c] sm:$0xff]
        %v1961 = vld [vmem:[#allocation4 + $0x474] sm:$0xff]
        %v1962 = vld [vmem:[#allocation4 + $0x47c] sm:$0xf]
        %v1963 = vld [vmem:[#allocation12] sm:$0xf]
        %v1964 = vld [vmem:[#allocation12 + $0x4] sm:$0xf]
        %v1965 = vld [vmem:[#allocation12 + $0x8] sm:$0xf]
        %v1966 = vld [vmem:[#allocation12 + $0xc] sm:$0xf]
        %v1967 = vld [vmem:[#allocation12 + $0x10] sm:$0xf]
        %v1968 = vld [vmem:[#allocation12 + $0x14] sm:$0xf]
        %v1969 = vld [vmem:[#allocation12 + $0x18] sm:$0xf]
        %v1970 = vld [vmem:[#allocation12 + $0x1c] sm:$0xf]
        %v1971 = vld [vmem:[#allocation12 + $0x20] sm:$0xf]
        %v1972 = vld [vmem:[#allocation12 + $0x24] sm:$0xf]
        %v1973 = vld [vmem:[#allocation12 + $0x28] sm:$0xf]
        %v1974 = vld [vmem:[#allocation12 + $0x2c] sm:$0xf]
        %v1975 = vld [vmem:[#allocation12 + $0x30] sm:$0xf]
        %v1976 = vld [vmem:[#allocation12 + $0x34] sm:$0xf]
        %v1977 = vld [vmem:[#allocation12 + $0x38] sm:$0xf]
        %v1978 = vld [vmem:[#allocation12 + $0x3c] sm:$0xf]
        %v1979 = vld [vmem:[#allocation12 + $0x40] sm:$0xf]
        %v1980 = vld [vmem:[#allocation12 + $0x44] sm:$0xf]
        %v1981 = vld [vmem:[#allocation12 + $0x48] sm:$0xf]
        %v1982 = vld [vmem:[#allocation12 + $0x4c] sm:$0xf]
        %v1983 = vld [vmem:[#allocation12 + $0x50] sm:$0xf]
        %v1984 = vld [vmem:[#allocation12 + $0x54] sm:$0xf]
        %v1985 = vld [vmem:[#allocation12 + $0x58] sm:$0xf]
        %v1986 = vld [vmem:[#allocation12 + $0x5c] sm:$0xf]
        %v1987 = vld [vmem:[#allocation12 + $0x60] sm:$0xf]
        %v1988 = vld [vmem:[#allocation12 + $0x64] sm:$0xf]
        %v1989 = vld [vmem:[#allocation12 + $0x68] sm:$0xf]
        %v1990 = vld [vmem:[#allocation12 + $0x6c] sm:$0xf]
        %v1991 = vld [vmem:[#allocation12 + $0x70] sm:$0xf]
        %v1992 = vld [vmem:[#allocation12 + $0x74] sm:$0xf]
        %v1993 = vld [vmem:[#allocation12 + $0x78] sm:$0xf]
        %v1994 = vld [vmem:[#allocation12 + $0x7c] sm:$0xf]
        %v1995 = vld [vmem:[#allocation12 + $0x80] sm:$0xf]
        %v1996 = vld [vmem:[#allocation12 + $0x84] sm:$0xf]
        %v1997 = vld [vmem:[#allocation12 + $0x88] sm:$0xf]
        %v1998 = vld [vmem:[#allocation12 + $0x8c] sm:$0xf]
        %v1999 = vld [vmem:[#allocation12 + $0x90] sm:$0xf]
        %v2000 = vld [vmem:[#allocation12 + $0x94] sm:$0xf]
        %v2001 = vld [vmem:[#allocation12 + $0x98] sm:$0xf]
        %v2002 = vld [vmem:[#allocation12 + $0x9c] sm:$0xf]
        %v2003 = vld [vmem:[#allocation12 + $0xa0] sm:$0xf]
        %v2004 = vld [vmem:[#allocation12 + $0xa4] sm:$0xf]
        %v2005 = vld [vmem:[#allocation12 + $0xa8] sm:$0xf]
        %v2006 = vld [vmem:[#allocation12 + $0xac] sm:$0xf]
        %v2007 = vld [vmem:[#allocation12 + $0xb0] sm:$0xf]
        %v2008 = vld [vmem:[#allocation12 + $0xb4] sm:$0xf]
        %v2009 = vld [vmem:[#allocation12 + $0xb8] sm:$0xf]
        %v2010 = vld [vmem:[#allocation12 + $0xbc] sm:$0xf]
        %v2011 = vld [vmem:[#allocation12 + $0xc0] sm:$0xf]
        %v2012 = vld [vmem:[#allocation12 + $0xc4] sm:$0xf]
        %v2013 = vld [vmem:[#allocation12 + $0xc8] sm:$0xf]
        %v2014 = vld [vmem:[#allocation12 + $0xcc] sm:$0xf]
        %v2015 = vld [vmem:[#allocation12 + $0xd0] sm:$0xf]
        %v2016 = vld [vmem:[#allocation12 + $0xd4] sm:$0xf]
        %v2017 = vld [vmem:[#allocation12 + $0xd8] sm:$0xf]
        %v2018 = vld [vmem:[#allocation12 + $0xdc] sm:$0xf]
        %v2019 = vld [vmem:[#allocation12 + $0xe0] sm:$0xf]
        %v2020 = vld [vmem:[#allocation12 + $0xe4] sm:$0xf]
        %v2021 = vld [vmem:[#allocation12 + $0xe8] sm:$0xf]
        %v2022 = vld [vmem:[#allocation12 + $0xec] sm:$0xf]
        %v2023 = vld [vmem:[#allocation12 + $0xf0] sm:$0xf]
        %v2024 = vld [vmem:[#allocation12 + $0xf4] sm:$0xf]
        %v2025 = vld [vmem:[#allocation12 + $0xf8] sm:$0xf]
        %v2026 = vld [vmem:[#allocation12 + $0xfc] sm:$0xf]
        %v2027 = vld [vmem:[#allocation12 + $0x100] sm:$0xf]
        %v2028 = vld [vmem:[#allocation12 + $0x104] sm:$0xf]
        %v2029 = vld [vmem:[#allocation12 + $0x108] sm:$0xf]
        %v2030 = vld [vmem:[#allocation12 + $0x10c] sm:$0xf]
        %v2031 = vld [vmem:[#allocation12 + $0x110] sm:$0xf]
        %v2032 = vld [vmem:[#allocation12 + $0x114] sm:$0xf]
        %v2033 = vld [vmem:[#allocation12 + $0x118] sm:$0xf]
        %v2034 = vld [vmem:[#allocation12 + $0x11c] sm:$0xf]
        %v2035 = vld [vmem:[#allocation12 + $0x120] sm:$0xf]
        %v2036 = vld [vmem:[#allocation12 + $0x124] sm:$0xf]
        %v2037 = vld [vmem:[#allocation12 + $0x128] sm:$0xf]
        %v2038 = vld [vmem:[#allocation12 + $0x12c] sm:$0xf]
        %v2039 = vld [vmem:[#allocation12 + $0x130] sm:$0xf]
        %v2040 = vld [vmem:[#allocation12 + $0x134] sm:$0xf]
        %v2041 = vld [vmem:[#allocation12 + $0x138] sm:$0xf]
        %v2042 = vld [vmem:[#allocation12 + $0x13c] sm:$0xf]
        %v2043 = vld [vmem:[#allocation12 + $0x140] sm:$0xf]
        %v2044 = vld [vmem:[#allocation12 + $0x144] sm:$0xf]
        %v2045 = vld [vmem:[#allocation12 + $0x148] sm:$0xf]
        %v2046 = vld [vmem:[#allocation12 + $0x14c] sm:$0xf]
        %v2047 = vld [vmem:[#allocation12 + $0x150] sm:$0xf]
        %v2048 = vld [vmem:[#allocation12 + $0x154] sm:$0xf]
        %v2049 = vld [vmem:[#allocation12 + $0x158] sm:$0xf]
        %v2050 = vld [vmem:[#allocation12 + $0x15c] sm:$0xf]
        %v2051 = vld [vmem:[#allocation12 + $0x160] sm:$0xf]
        %v2052 = vld [vmem:[#allocation12 + $0x164] sm:$0xf]
        %v2053 = vld [vmem:[#allocation12 + $0x168] sm:$0xf]
        %v2054 = vld [vmem:[#allocation12 + $0x16c] sm:$0xf]
        %v2055 = vld [vmem:[#allocation12 + $0x170] sm:$0xf]
        %v2056 = vld [vmem:[#allocation12 + $0x174] sm:$0xf]
        %v2057 = vld [vmem:[#allocation12 + $0x178] sm:$0xf]
        %v2058 = vld [vmem:[#allocation12 + $0x17c] sm:$0xf]
        %v2059 = vld [vmem:[#allocation12 + $0x180] sm:$0xf]
        %v2060 = vld [vmem:[#allocation12 + $0x184] sm:$0xf]
        %v2061 = vld [vmem:[#allocation12 + $0x188] sm:$0xf]
        %v2062 = vld [vmem:[#allocation12 + $0x18c] sm:$0xf]
        %v2063 = vld [vmem:[#allocation12 + $0x190] sm:$0xf]
        %v2064 = vld [vmem:[#allocation12 + $0x194] sm:$0xf]
        %v2065 = vld [vmem:[#allocation12 + $0x198] sm:$0xf]
        %v2066 = vld [vmem:[#allocation12 + $0x19c] sm:$0xf]
        %v2067 = vld [vmem:[#allocation12 + $0x1a0] sm:$0xf]
        %v2068 = vld [vmem:[#allocation12 + $0x1a4] sm:$0xf]
        %v2069 = vld [vmem:[#allocation12 + $0x1a8] sm:$0xf]
        %v2070 = vld [vmem:[#allocation12 + $0x1ac] sm:$0xf]
        %v2071 = vld [vmem:[#allocation12 + $0x1b0] sm:$0xf]
        %v2072 = vld [vmem:[#allocation12 + $0x1b4] sm:$0xf]
        %v2073 = vld [vmem:[#allocation12 + $0x1b8] sm:$0xf]
        %v2074 = vld [vmem:[#allocation12 + $0x1bc] sm:$0xf]
        %v2075 = vld [vmem:[#allocation12 + $0x1c0] sm:$0xf]
        %v2076 = vld [vmem:[#allocation12 + $0x1c4] sm:$0xf]
        %v2077 = vld [vmem:[#allocation12 + $0x1c8] sm:$0xf]
        %v2078 = vld [vmem:[#allocation12 + $0x1cc] sm:$0xf]
        %v2079 = vld [vmem:[#allocation12 + $0x1d0] sm:$0xf]
        %v2080 = vld [vmem:[#allocation12 + $0x1d4] sm:$0xf]
        %v2081 = vld [vmem:[#allocation12 + $0x1d8] sm:$0xf]
        %v2082 = vld [vmem:[#allocation12 + $0x1dc] sm:$0xf]
        %v2083 = vld [vmem:[#allocation12 + $0x1e0] sm:$0xf]
        %v2084 = vld [vmem:[#allocation12 + $0x1e4] sm:$0xf]
        %v2085 = vld [vmem:[#allocation12 + $0x1e8] sm:$0xf]
        %v2086 = vld [vmem:[#allocation12 + $0x1ec] sm:$0xf]
        %v2087 = vld [vmem:[#allocation12 + $0x1f0] sm:$0xf]
        %v2088 = vld [vmem:[#allocation12 + $0x1f4] sm:$0xf]
        %v2089 = vld [vmem:[#allocation12 + $0x1f8] sm:$0xf]
        %v2090 = vld [vmem:[#allocation12 + $0x1fc] sm:$0xf]
        %v2091 = vld [vmem:[#allocation12 + $0x200] sm:$0xf]
        %v2092 = vld [vmem:[#allocation12 + $0x204] sm:$0xf]
        %v2093 = vld [vmem:[#allocation12 + $0x208] sm:$0xf]
        %v2094 = vld [vmem:[#allocation12 + $0x20c] sm:$0xf]
        %v2095 = vld [vmem:[#allocation12 + $0x210] sm:$0xf]
        %v2096 = vld [vmem:[#allocation12 + $0x214] sm:$0xf]
        %v2097 = vld [vmem:[#allocation12 + $0x218] sm:$0xf]
        %v2098 = vld [vmem:[#allocation12 + $0x21c] sm:$0xf]
        %v2099 = vld [vmem:[#allocation12 + $0x220] sm:$0xf]
        %v2100 = vld [vmem:[#allocation12 + $0x224] sm:$0xf]
        %v2101 = vld [vmem:[#allocation12 + $0x228] sm:$0xf]
        %v2102 = vld [vmem:[#allocation12 + $0x22c] sm:$0xf]
        %v2103 = vld [vmem:[#allocation12 + $0x230] sm:$0xf]
        %v2104 = vld [vmem:[#allocation12 + $0x234] sm:$0xf]
        %v2105 = vld [vmem:[#allocation12 + $0x238] sm:$0xf]
        %v2106 = vld [vmem:[#allocation12 + $0x23c] sm:$0xf]
        %v2267 = vunpack.c.l.b16 %v1803
        %v2268 = vunpack.c.h.b16 %v1803
        %v2269 = vunpack.c.l.b16 %v1804
        %v2270 = vunpack.c.h.b16 %v1804
        %v2271 = vunpack.c.l.b16 %v1805
        %v2272 = vunpack.c.h.b16 %v1805
        %v2273 = vunpack.c.l.b16 %v1806
        %v2274 = vunpack.c.h.b16 %v1806
        %v2275 = vunpack.c.l.b16 %v1807
        %v2276 = vunpack.c.l.b16 %v1808
        %v2277 = vunpack.c.h.b16 %v1808
        %v2278 = vunpack.c.l.b16 %v1809
        %v2279 = vunpack.c.h.b16 %v1809
        %v2280 = vunpack.c.l.b16 %v1810
        %v2281 = vunpack.c.h.b16 %v1810
        %v2282 = vunpack.c.l.b16 %v1811
        %v2283 = vunpack.c.h.b16 %v1811
        %v2284 = vunpack.c.l.b16 %v1812
        %v2285 = vunpack.c.l.b16 %v1813
        %v2286 = vunpack.c.h.b16 %v1813
        %v2287 = vunpack.c.l.b16 %v1814
        %v2288 = vunpack.c.h.b16 %v1814
        %v2289 = vunpack.c.l.b16 %v1815
        %v2290 = vunpack.c.h.b16 %v1815
        %v2291 = vunpack.c.l.b16 %v1816
        %v2292 = vunpack.c.h.b16 %v1816
        %v2293 = vunpack.c.l.b16 %v1817
        %v2294 = vunpack.c.l.b16 %v1818
        %v2295 = vunpack.c.h.b16 %v1818
        %v2296 = vunpack.c.l.b16 %v1819
        %v2297 = vunpack.c.h.b16 %v1819
        %v2298 = vunpack.c.l.b16 %v1820
        %v2299 = vunpack.c.h.b16 %v1820
        %v2300 = vunpack.c.l.b16 %v1821
        %v2301 = vunpack.c.h.b16 %v1821
        %v2302 = vunpack.c.l.b16 %v1822
        %v2303 = vunpack.c.l.b16 %v1823
        %v2304 = vunpack.c.h.b16 %v1823
        %v2305 = vunpack.c.l.b16 %v1824
        %v2306 = vunpack.c.h.b16 %v1824
        %v2307 = vunpack.c.l.b16 %v1825
        %v2308 = vunpack.c.h.b16 %v1825
        %v2309 = vunpack.c.l.b16 %v1826
        %v2310 = vunpack.c.h.b16 %v1826
        %v2311 = vunpack.c.l.b16 %v1827
        %v2312 = vunpack.c.l.b16 %v1828
        %v2313 = vunpack.c.h.b16 %v1828
        %v2314 = vunpack.c.l.b16 %v1829
        %v2315 = vunpack.c.h.b16 %v1829
        %v2316 = vunpack.c.l.b16 %v1830
        %v2317 = vunpack.c.h.b16 %v1830
        %v2318 = vunpack.c.l.b16 %v1831
        %v2319 = vunpack.c.h.b16 %v1831
        %v2320 = vunpack.c.l.b16 %v1832
        %v2321 = vunpack.c.l.b16 %v1833
        %v2322 = vunpack.c.h.b16 %v1833
        %v2323 = vunpack.c.l.b16 %v1834
        %v2324 = vunpack.c.h.b16 %v1834
        %v2325 = vunpack.c.l.b16 %v1835
        %v2326 = vunpack.c.h.b16 %v1835
        %v2327 = vunpack.c.l.b16 %v1836
        %v2328 = vunpack.c.h.b16 %v1836
        %v2329 = vunpack.c.l.b16 %v1837
        %v2330 = vunpack.c.l.b16 %v1838
        %v2331 = vunpack.c.h.b16 %v1838
        %v2332 = vunpack.c.l.b16 %v1839
        %v2333 = vunpack.c.h.b16 %v1839
        %v2334 = vunpack.c.l.b16 %v1840
        %v2335 = vunpack.c.h.b16 %v1840
        %v2336 = vunpack.c.l.b16 %v1841
        %v2337 = vunpack.c.h.b16 %v1841
        %v2338 = vunpack.c.l.b16 %v1842
        %v2339 = vunpack.c.l.b16 %v1843
        %v2340 = vunpack.c.h.b16 %v1843
        %v2341 = vunpack.c.l.b16 %v1844
        %v2342 = vunpack.c.h.b16 %v1844
        %v2343 = vunpack.c.l.b16 %v1845
        %v2344 = vunpack.c.h.b16 %v1845
        %v2345 = vunpack.c.l.b16 %v1846
        %v2346 = vunpack.c.h.b16 %v1846
        %v2347 = vunpack.c.l.b16 %v1847
        %v2348 = vunpack.c.l.b16 %v1848
        %v2349 = vunpack.c.h.b16 %v1848
        %v2350 = vunpack.c.l.b16 %v1849
        %v2351 = vunpack.c.h.b16 %v1849
        %v2352 = vunpack.c.l.b16 %v1850
        %v2353 = vunpack.c.h.b16 %v1850
        %v2354 = vunpack.c.l.b16 %v1851
        %v2355 = vunpack.c.h.b16 %v1851
        %v2356 = vunpack.c.l.b16 %v1852
        %v2357 = vunpack.c.l.b16 %v1853
        %v2358 = vunpack.c.h.b16 %v1853
        %v2359 = vunpack.c.l.b16 %v1854
        %v2360 = vunpack.c.h.b16 %v1854
        %v2361 = vunpack.c.l.b16 %v1855
        %v2362 = vunpack.c.h.b16 %v1855
        %v2363 = vunpack.c.l.b16 %v1856
        %v2364 = vunpack.c.h.b16 %v1856
        %v2365 = vunpack.c.l.b16 %v1857
        %v2366 = vunpack.c.l.b16 %v1858
        %v2367 = vunpack.c.h.b16 %v1858
        %v2368 = vunpack.c.l.b16 %v1859
        %v2369 = vunpack.c.h.b16 %v1859
        %v2370 = vunpack.c.l.b16 %v1860
        %v2371 = vunpack.c.h.b16 %v1860
        %v2372 = vunpack.c.l.b16 %v1861
        %v2373 = vunpack.c.h.b16 %v1861
        %v2374 = vunpack.c.l.b16 %v1862
        %v2375 = vunpack.c.l.b16 %v1863
        %v2376 = vunpack.c.h.b16 %v1863
        %v2377 = vunpack.c.l.b16 %v1864
        %v2378 = vunpack.c.h.b16 %v1864
        %v2379 = vunpack.c.l.b16 %v1865
        %v2380 = vunpack.c.h.b16 %v1865
        %v2381 = vunpack.c.l.b16 %v1866
        %v2382 = vunpack.c.h.b16 %v1866
        %v2383 = vunpack.c.l.b16 %v1867
        %v2384 = vunpack.c.l.b16 %v1868
        %v2385 = vunpack.c.h.b16 %v1868
        %v2386 = vunpack.c.l.b16 %v1869
        %v2387 = vunpack.c.h.b16 %v1869
        %v2388 = vunpack.c.l.b16 %v1870
        %v2389 = vunpack.c.h.b16 %v1870
        %v2390 = vunpack.c.l.b16 %v1871
        %v2391 = vunpack.c.h.b16 %v1871
        %v2392 = vunpack.c.l.b16 %v1872
        %v2393 = vunpack.c.l.b16 %v1873
        %v2394 = vunpack.c.h.b16 %v1873
        %v2395 = vunpack.c.l.b16 %v1874
        %v2396 = vunpack.c.h.b16 %v1874
        %v2397 = vunpack.c.l.b16 %v1875
        %v2398 = vunpack.c.h.b16 %v1875
        %v2399 = vunpack.c.l.b16 %v1876
        %v2400 = vunpack.c.h.b16 %v1876
        %v2401 = vunpack.c.l.b16 %v1877
        %v2402 = vunpack.c.l.b16 %v1878
        %v2403 = vunpack.c.h.b16 %v1878
        %v2404 = vunpack.c.l.b16 %v1879
        %v2405 = vunpack.c.h.b16 %v1879
        %v2406 = vunpack.c.l.b16 %v1880
        %v2407 = vunpack.c.h.b16 %v1880
        %v2408 = vunpack.c.l.b16 %v1881
        %v2409 = vunpack.c.h.b16 %v1881
        %v2410 = vunpack.c.l.b16 %v1882
        %v2411 = vunpack.c.l.b16 %v1883
        %v2412 = vunpack.c.h.b16 %v1883
        %v2413 = vunpack.c.l.b16 %v1884
        %v2414 = vunpack.c.h.b16 %v1884
        %v2415 = vunpack.c.l.b16 %v1885
        %v2416 = vunpack.c.h.b16 %v1885
        %v2417 = vunpack.c.l.b16 %v1886
        %v2418 = vunpack.c.h.b16 %v1886
        %v2419 = vunpack.c.l.b16 %v1887
        %v2420 = vunpack.c.l.b16 %v1888
        %v2421 = vunpack.c.h.b16 %v1888
        %v2422 = vunpack.c.l.b16 %v1889
        %v2423 = vunpack.c.h.b16 %v1889
        %v2424 = vunpack.c.l.b16 %v1890
        %v2425 = vunpack.c.h.b16 %v1890
        %v2426 = vunpack.c.l.b16 %v1891
        %v2427 = vunpack.c.h.b16 %v1891
        %v2428 = vunpack.c.l.b16 %v1892
        %v2429 = vunpack.c.l.b16 %v1893
        %v2430 = vunpack.c.h.b16 %v1893
        %v2431 = vunpack.c.l.b16 %v1894
        %v2432 = vunpack.c.h.b16 %v1894
        %v2433 = vunpack.c.l.b16 %v1895
        %v2434 = vunpack.c.h.b16 %v1895
        %v2435 = vunpack.c.l.b16 %v1896
        %v2436 = vunpack.c.h.b16 %v1896
        %v2437 = vunpack.c.l.b16 %v1897
        %v2438 = vunpack.c.l.b16 %v1898
        %v2439 = vunpack.c.h.b16 %v1898
        %v2440 = vunpack.c.l.b16 %v1899
        %v2441 = vunpack.c.h.b16 %v1899
        %v2442 = vunpack.c.l.b16 %v1900
        %v2443 = vunpack.c.h.b16 %v1900
        %v2444 = vunpack.c.l.b16 %v1901
        %v2445 = vunpack.c.h.b16 %v1901
        %v2446 = vunpack.c.l.b16 %v1902
        %v2447 = vunpack.c.l.b16 %v1903
        %v2448 = vunpack.c.h.b16 %v1903
        %v2449 = vunpack.c.l.b16 %v1904
        %v2450 = vunpack.c.h.b16 %v1904
        %v2451 = vunpack.c.l.b16 %v1905
        %v2452 = vunpack.c.h.b16 %v1905
        %v2453 = vunpack.c.l.b16 %v1906
        %v2454 = vunpack.c.h.b16 %v1906
        %v2455 = vunpack.c.l.b16 %v1907
        %v2456 = vunpack.c.l.b16 %v1908
        %v2457 = vunpack.c.h.b16 %v1908
        %v2458 = vunpack.c.l.b16 %v1909
        %v2459 = vunpack.c.h.b16 %v1909
        %v2460 = vunpack.c.l.b16 %v1910
        %v2461 = vunpack.c.h.b16 %v1910
        %v2462 = vunpack.c.l.b16 %v1911
        %v2463 = vunpack.c.h.b16 %v1911
        %v2464 = vunpack.c.l.b16 %v1912
        %v2465 = vunpack.c.l.b16 %v1913
        %v2466 = vunpack.c.h.b16 %v1913
        %v2467 = vunpack.c.l.b16 %v1914
        %v2468 = vunpack.c.h.b16 %v1914
        %v2469 = vunpack.c.l.b16 %v1915
        %v2470 = vunpack.c.h.b16 %v1915
        %v2471 = vunpack.c.l.b16 %v1916
        %v2472 = vunpack.c.h.b16 %v1916
        %v2473 = vunpack.c.l.b16 %v1917
        %v2474 = vunpack.c.l.b16 %v1918
        %v2475 = vunpack.c.h.b16 %v1918
        %v2476 = vunpack.c.l.b16 %v1919
        %v2477 = vunpack.c.h.b16 %v1919
        %v2478 = vunpack.c.l.b16 %v1920
        %v2479 = vunpack.c.h.b16 %v1920
        %v2480 = vunpack.c.l.b16 %v1921
        %v2481 = vunpack.c.h.b16 %v1921
        %v2482 = vunpack.c.l.b16 %v1922
        %v2483 = vunpack.c.l.b16 %v1923
        %v2484 = vunpack.c.h.b16 %v1923
        %v2485 = vunpack.c.l.b16 %v1924
        %v2486 = vunpack.c.h.b16 %v1924
        %v2487 = vunpack.c.l.b16 %v1925
        %v2488 = vunpack.c.h.b16 %v1925
        %v2489 = vunpack.c.l.b16 %v1926
        %v2490 = vunpack.c.h.b16 %v1926
        %v2491 = vunpack.c.l.b16 %v1927
        %v2492 = vunpack.c.l.b16 %v1928
        %v2493 = vunpack.c.h.b16 %v1928
        %v2494 = vunpack.c.l.b16 %v1929
        %v2495 = vunpack.c.h.b16 %v1929
        %v2496 = vunpack.c.l.b16 %v1930
        %v2497 = vunpack.c.h.b16 %v1930
        %v2498 = vunpack.c.l.b16 %v1931
        %v2499 = vunpack.c.h.b16 %v1931
        %v2500 = vunpack.c.l.b16 %v1932
        %v2501 = vunpack.c.l.b16 %v1933
        %v2502 = vunpack.c.h.b16 %v1933
        %v2503 = vunpack.c.l.b16 %v1934
        %v2504 = vunpack.c.h.b16 %v1934
        %v2505 = vunpack.c.l.b16 %v1935
        %v2506 = vunpack.c.h.b16 %v1935
        %v2507 = vunpack.c.l.b16 %v1936
        %v2508 = vunpack.c.h.b16 %v1936
        %v2509 = vunpack.c.l.b16 %v1937
        %v2510 = vunpack.c.l.b16 %v1938
        %v2511 = vunpack.c.h.b16 %v1938
        %v2512 = vunpack.c.l.b16 %v1939
        %v2513 = vunpack.c.h.b16 %v1939
        %v2514 = vunpack.c.l.b16 %v1940
        %v2515 = vunpack.c.h.b16 %v1940
        %v2516 = vunpack.c.l.b16 %v1941
        %v2517 = vunpack.c.h.b16 %v1941
        %v2518 = vunpack.c.l.b16 %v1942
        %v2519 = vunpack.c.l.b16 %v1943
        %v2520 = vunpack.c.h.b16 %v1943
        %v2521 = vunpack.c.l.b16 %v1944
        %v2522 = vunpack.c.h.b16 %v1944
        %v2523 = vunpack.c.l.b16 %v1945
        %v2524 = vunpack.c.h.b16 %v1945
        %v2525 = vunpack.c.l.b16 %v1946
        %v2526 = vunpack.c.h.b16 %v1946
        %v2527 = vunpack.c.l.b16 %v1947
        %v2528 = vunpack.c.l.b16 %v1948
        %v2529 = vunpack.c.h.b16 %v1948
        %v2530 = vunpack.c.l.b16 %v1949
        %v2531 = vunpack.c.h.b16 %v1949
        %v2532 = vunpack.c.l.b16 %v1950
        %v2533 = vunpack.c.h.b16 %v1950
        %v2534 = vunpack.c.l.b16 %v1951
        %v2535 = vunpack.c.h.b16 %v1951
        %v2536 = vunpack.c.l.b16 %v1952
        %v2537 = vunpack.c.l.b16 %v1953
        %v2538 = vunpack.c.h.b16 %v1953
        %v2539 = vunpack.c.l.b16 %v1954
        %v2540 = vunpack.c.h.b16 %v1954
        %v2541 = vunpack.c.l.b16 %v1955
        %v2542 = vunpack.c.h.b16 %v1955
        %v2543 = vunpack.c.l.b16 %v1956
        %v2544 = vunpack.c.h.b16 %v1956
        %v2545 = vunpack.c.l.b16 %v1957
        %v2546 = vunpack.c.l.b16 %v1958
        %v2547 = vunpack.c.h.b16 %v1958
        %v2548 = vunpack.c.l.b16 %v1959
        %v2549 = vunpack.c.h.b16 %v1959
        %v2550 = vunpack.c.l.b16 %v1960
        %v2551 = vunpack.c.h.b16 %v1960
        %v2552 = vunpack.c.l.b16 %v1961
        %v2553 = vunpack.c.h.b16 %v1961
        %v2554 = vunpack.c.l.b16 %v1962
        %v2555 = vpack.c.b16 %v2276, %v2267
        %v2556 = vpack.c.b16 %v2277, %v2268
        %v2557 = vpack.c.b16 %v2278, %v2269
        %v2558 = vpack.c.b16 %v2279, %v2270
        %v2559 = vpack.c.b16 %v2280, %v2271
        %v2560 = vpack.c.b16 %v2281, %v2272
        %v2561 = vpack.c.b16 %v2282, %v2273
        %v2562 = vpack.c.b16 %v2283, %v2274
        %v2563 = vpack.c.b16 %v2284, %v2275
        %v2564 = vpack.c.b16 %v2294, %v2285
        %v2565 = vpack.c.b16 %v2295, %v2286
        %v2566 = vpack.c.b16 %v2296, %v2287
        %v2567 = vpack.c.b16 %v2297, %v2288
        %v2568 = vpack.c.b16 %v2298, %v2289
        %v2569 = vpack.c.b16 %v2299, %v2290
        %v2570 = vpack.c.b16 %v2300, %v2291
        %v2571 = vpack.c.b16 %v2301, %v2292
        %v2572 = vpack.c.b16 %v2302, %v2293
        %v2573 = vpack.c.b16 %v2312, %v2303
        %v2574 = vpack.c.b16 %v2313, %v2304
        %v2575 = vpack.c.b16 %v2314, %v2305
        %v2576 = vpack.c.b16 %v2315, %v2306
        %v2577 = vpack.c.b16 %v2316, %v2307
        %v2578 = vpack.c.b16 %v2317, %v2308
        %v2579 = vpack.c.b16 %v2318, %v2309
        %v2580 = vpack.c.b16 %v2319, %v2310
        %v2581 = vpack.c.b16 %v2320, %v2311
        %v2582 = vpack.c.b16 %v2330, %v2321
        %v2583 = vpack.c.b16 %v2331, %v2322
        %v2584 = vpack.c.b16 %v2332, %v2323
        %v2585 = vpack.c.b16 %v2333, %v2324
        %v2586 = vpack.c.b16 %v2334, %v2325
        %v2587 = vpack.c.b16 %v2335, %v2326
        %v2588 = vpack.c.b16 %v2336, %v2327
        %v2589 = vpack.c.b16 %v2337, %v2328
        %v2590 = vpack.c.b16 %v2338, %v2329
        %v2591 = vpack.c.b16 %v2348, %v2339
        %v2592 = vpack.c.b16 %v2349, %v2340
        %v2593 = vpack.c.b16 %v2350, %v2341
        %v2594 = vpack.c.b16 %v2351, %v2342
        %v2595 = vpack.c.b16 %v2352, %v2343
        %v2596 = vpack.c.b16 %v2353, %v2344
        %v2597 = vpack.c.b16 %v2354, %v2345
        %v2598 = vpack.c.b16 %v2355, %v2346
        %v2599 = vpack.c.b16 %v2356, %v2347
        %v2600 = vpack.c.b16 %v2366, %v2357
        %v2601 = vpack.c.b16 %v2367, %v2358
        %v2602 = vpack.c.b16 %v2368, %v2359
        %v2603 = vpack.c.b16 %v2369, %v2360
        %v2604 = vpack.c.b16 %v2370, %v2361
        %v2605 = vpack.c.b16 %v2371, %v2362
        %v2606 = vpack.c.b16 %v2372, %v2363
        %v2607 = vpack.c.b16 %v2373, %v2364
        %v2608 = vpack.c.b16 %v2374, %v2365
        %v2609 = vpack.c.b16 %v2384, %v2375
        %v2610 = vpack.c.b16 %v2385, %v2376
        %v2611 = vpack.c.b16 %v2386, %v2377
        %v2612 = vpack.c.b16 %v2387, %v2378
        %v2613 = vpack.c.b16 %v2388, %v2379
        %v2614 = vpack.c.b16 %v2389, %v2380
        %v2615 = vpack.c.b16 %v2390, %v2381
        %v2616 = vpack.c.b16 %v2391, %v2382
        %v2617 = vpack.c.b16 %v2392, %v2383
        %v2618 = vpack.c.b16 %v2402, %v2393
        %v2619 = vpack.c.b16 %v2403, %v2394
        %v2620 = vpack.c.b16 %v2404, %v2395
        %v2621 = vpack.c.b16 %v2405, %v2396
        %v2622 = vpack.c.b16 %v2406, %v2397
        %v2623 = vpack.c.b16 %v2407, %v2398
        %v2624 = vpack.c.b16 %v2408, %v2399
        %v2625 = vpack.c.b16 %v2409, %v2400
        %v2626 = vpack.c.b16 %v2410, %v2401
        %v2627 = vpack.c.b16 %v2420, %v2411
        %v2628 = vpack.c.b16 %v2421, %v2412
        %v2629 = vpack.c.b16 %v2422, %v2413
        %v2630 = vpack.c.b16 %v2423, %v2414
        %v2631 = vpack.c.b16 %v2424, %v2415
        %v2632 = vpack.c.b16 %v2425, %v2416
        %v2633 = vpack.c.b16 %v2426, %v2417
        %v2634 = vpack.c.b16 %v2427, %v2418
        %v2635 = vpack.c.b16 %v2428, %v2419
        %v2636 = vpack.c.b16 %v2438, %v2429
        %v2637 = vpack.c.b16 %v2439, %v2430
        %v2638 = vpack.c.b16 %v2440, %v2431
        %v2639 = vpack.c.b16 %v2441, %v2432
        %v2640 = vpack.c.b16 %v2442, %v2433
        %v2641 = vpack.c.b16 %v2443, %v2434
        %v2642 = vpack.c.b16 %v2444, %v2435
        %v2643 = vpack.c.b16 %v2445, %v2436
        %v2644 = vpack.c.b16 %v2446, %v2437
        %v2645 = vpack.c.b16 %v2456, %v2447
        %v2646 = vpack.c.b16 %v2457, %v2448
        %v2647 = vpack.c.b16 %v2458, %v2449
        %v2648 = vpack.c.b16 %v2459, %v2450
        %v2649 = vpack.c.b16 %v2460, %v2451
        %v2650 = vpack.c.b16 %v2461, %v2452
        %v2651 = vpack.c.b16 %v2462, %v2453
        %v2652 = vpack.c.b16 %v2463, %v2454
        %v2653 = vpack.c.b16 %v2464, %v2455
        %v2654 = vpack.c.b16 %v2474, %v2465
        %v2655 = vpack.c.b16 %v2475, %v2466
        %v2656 = vpack.c.b16 %v2476, %v2467
        %v2657 = vpack.c.b16 %v2477, %v2468
        %v2658 = vpack.c.b16 %v2478, %v2469
        %v2659 = vpack.c.b16 %v2479, %v2470
        %v2660 = vpack.c.b16 %v2480, %v2471
        %v2661 = vpack.c.b16 %v2481, %v2472
        %v2662 = vpack.c.b16 %v2482, %v2473
        %v2663 = vpack.c.b16 %v2492, %v2483
        %v2664 = vpack.c.b16 %v2493, %v2484
        %v2665 = vpack.c.b16 %v2494, %v2485
        %v2666 = vpack.c.b16 %v2495, %v2486
        %v2667 = vpack.c.b16 %v2496, %v2487
        %v2668 = vpack.c.b16 %v2497, %v2488
        %v2669 = vpack.c.b16 %v2498, %v2489
        %v2670 = vpack.c.b16 %v2499, %v2490
        %v2671 = vpack.c.b16 %v2500, %v2491
        %v2672 = vpack.c.b16 %v2510, %v2501
        %v2673 = vpack.c.b16 %v2511, %v2502
        %v2674 = vpack.c.b16 %v2512, %v2503
        %v2675 = vpack.c.b16 %v2513, %v2504
        %v2676 = vpack.c.b16 %v2514, %v2505
        %v2677 = vpack.c.b16 %v2515, %v2506
        %v2678 = vpack.c.b16 %v2516, %v2507
        %v2679 = vpack.c.b16 %v2517, %v2508
        %v2680 = vpack.c.b16 %v2518, %v2509
        %v2681 = vpack.c.b16 %v2528, %v2519
        %v2682 = vpack.c.b16 %v2529, %v2520
        %v2683 = vpack.c.b16 %v2530, %v2521
        %v2684 = vpack.c.b16 %v2531, %v2522
        %v2685 = vpack.c.b16 %v2532, %v2523
        %v2686 = vpack.c.b16 %v2533, %v2524
        %v2687 = vpack.c.b16 %v2534, %v2525
        %v2688 = vpack.c.b16 %v2535, %v2526
        %v2689 = vpack.c.b16 %v2536, %v2527
        %v2690 = vpack.c.b16 %v2546, %v2537
        %v2691 = vpack.c.b16 %v2547, %v2538
        %v2692 = vpack.c.b16 %v2548, %v2539
        %v2693 = vpack.c.b16 %v2549, %v2540
        %v2694 = vpack.c.b16 %v2550, %v2541
        %v2695 = vpack.c.b16 %v2551, %v2542
        %v2696 = vpack.c.b16 %v2552, %v2543
        %v2697 = vpack.c.b16 %v2553, %v2544
        %v2698 = vpack.c.b16 %v2554, %v2545
        %v2987 = vunpack.c.l.b16 %v1963
        %v2988 = vunpack.c.l.b16 %v1964
        %v2989 = vunpack.c.l.b16 %v1965
        %v2990 = vunpack.c.l.b16 %v1966
        %v2991 = vunpack.c.l.b16 %v1967
        %v2992 = vunpack.c.l.b16 %v1968
        %v2993 = vunpack.c.l.b16 %v1969
        %v2994 = vunpack.c.l.b16 %v1970
        %v2995 = vunpack.c.l.b16 %v1971
        %v2996 = vunpack.c.l.b16 %v1972
        %v2997 = vunpack.c.l.b16 %v1973
        %v2998 = vunpack.c.l.b16 %v1974
        %v2999 = vunpack.c.l.b16 %v1975
        %v3000 = vunpack.c.l.b16 %v1976
        %v3001 = vunpack.c.l.b16 %v1977
        %v3002 = vunpack.c.l.b16 %v1978
        %v3003 = vunpack.c.l.b16 %v1979
        %v3004 = vunpack.c.l.b16 %v1980
        %v3005 = vunpack.c.l.b16 %v1981
        %v3006 = vunpack.c.l.b16 %v1982
        %v3007 = vunpack.c.l.b16 %v1983
        %v3008 = vunpack.c.l.b16 %v1984
        %v3009 = vunpack.c.l.b16 %v1985
        %v3010 = vunpack.c.l.b16 %v1986
        %v3011 = vunpack.c.l.b16 %v1987
        %v3012 = vunpack.c.l.b16 %v1988
        %v3013 = vunpack.c.l.b16 %v1989
        %v3014 = vunpack.c.l.b16 %v1990
        %v3015 = vunpack.c.l.b16 %v1991
        %v3016 = vunpack.c.l.b16 %v1992
        %v3017 = vunpack.c.l.b16 %v1993
        %v3018 = vunpack.c.l.b16 %v1994
        %v3019 = vunpack.c.l.b16 %v1995
        %v3020 = vunpack.c.l.b16 %v1996
        %v3021 = vunpack.c.l.b16 %v1997
        %v3022 = vunpack.c.l.b16 %v1998
        %v3023 = vunpack.c.l.b16 %v1999
        %v3024 = vunpack.c.l.b16 %v2000
        %v3025 = vunpack.c.l.b16 %v2001
        %v3026 = vunpack.c.l.b16 %v2002
        %v3027 = vunpack.c.l.b16 %v2003
        %v3028 = vunpack.c.l.b16 %v2004
        %v3029 = vunpack.c.l.b16 %v2005
        %v3030 = vunpack.c.l.b16 %v2006
        %v3031 = vunpack.c.l.b16 %v2007
        %v3032 = vunpack.c.l.b16 %v2008
        %v3033 = vunpack.c.l.b16 %v2009
        %v3034 = vunpack.c.l.b16 %v2010
        %v3035 = vunpack.c.l.b16 %v2011
        %v3036 = vunpack.c.l.b16 %v2012
        %v3037 = vunpack.c.l.b16 %v2013
        %v3038 = vunpack.c.l.b16 %v2014
        %v3039 = vunpack.c.l.b16 %v2015
        %v3040 = vunpack.c.l.b16 %v2016
        %v3041 = vunpack.c.l.b16 %v2017
        %v3042 = vunpack.c.l.b16 %v2018
        %v3043 = vunpack.c.l.b16 %v2019
        %v3044 = vunpack.c.l.b16 %v2020
        %v3045 = vunpack.c.l.b16 %v2021
        %v3046 = vunpack.c.l.b16 %v2022
        %v3047 = vunpack.c.l.b16 %v2023
        %v3048 = vunpack.c.l.b16 %v2024
        %v3049 = vunpack.c.l.b16 %v2025
        %v3050 = vunpack.c.l.b16 %v2026
        %v3051 = vunpack.c.l.b16 %v2027
        %v3052 = vunpack.c.l.b16 %v2028
        %v3053 = vunpack.c.l.b16 %v2029
        %v3054 = vunpack.c.l.b16 %v2030
        %v3055 = vunpack.c.l.b16 %v2031
        %v3056 = vunpack.c.l.b16 %v2032
        %v3057 = vunpack.c.l.b16 %v2033
        %v3058 = vunpack.c.l.b16 %v2034
        %v3059 = vunpack.c.l.b16 %v2035
        %v3060 = vunpack.c.l.b16 %v2036
        %v3061 = vunpack.c.l.b16 %v2037
        %v3062 = vunpack.c.l.b16 %v2038
        %v3063 = vunpack.c.l.b16 %v2039
        %v3064 = vunpack.c.l.b16 %v2040
        %v3065 = vunpack.c.l.b16 %v2041
        %v3066 = vunpack.c.l.b16 %v2042
        %v3067 = vunpack.c.l.b16 %v2043
        %v3068 = vunpack.c.l.b16 %v2044
        %v3069 = vunpack.c.l.b16 %v2045
        %v3070 = vunpack.c.l.b16 %v2046
        %v3071 = vunpack.c.l.b16 %v2047
        %v3072 = vunpack.c.l.b16 %v2048
        %v3073 = vunpack.c.l.b16 %v2049
        %v3074 = vunpack.c.l.b16 %v2050
        %v3075 = vunpack.c.l.b16 %v2051
        %v3076 = vunpack.c.l.b16 %v2052
        %v3077 = vunpack.c.l.b16 %v2053
        %v3078 = vunpack.c.l.b16 %v2054
        %v3079 = vunpack.c.l.b16 %v2055
        %v3080 = vunpack.c.l.b16 %v2056
        %v3081 = vunpack.c.l.b16 %v2057
        %v3082 = vunpack.c.l.b16 %v2058
        %v3083 = vunpack.c.l.b16 %v2059
        %v3084 = vunpack.c.l.b16 %v2060
        %v3085 = vunpack.c.l.b16 %v2061
        %v3086 = vunpack.c.l.b16 %v2062
        %v3087 = vunpack.c.l.b16 %v2063
        %v3088 = vunpack.c.l.b16 %v2064
        %v3089 = vunpack.c.l.b16 %v2065
        %v3090 = vunpack.c.l.b16 %v2066
        %v3091 = vunpack.c.l.b16 %v2067
        %v3092 = vunpack.c.l.b16 %v2068
        %v3093 = vunpack.c.l.b16 %v2069
        %v3094 = vunpack.c.l.b16 %v2070
        %v3095 = vunpack.c.l.b16 %v2071
        %v3096 = vunpack.c.l.b16 %v2072
        %v3097 = vunpack.c.l.b16 %v2073
        %v3098 = vunpack.c.l.b16 %v2074
        %v3099 = vunpack.c.l.b16 %v2075
        %v3100 = vunpack.c.l.b16 %v2076
        %v3101 = vunpack.c.l.b16 %v2077
        %v3102 = vunpack.c.l.b16 %v2078
        %v3103 = vunpack.c.l.b16 %v2079
        %v3104 = vunpack.c.l.b16 %v2080
        %v3105 = vunpack.c.l.b16 %v2081
        %v3106 = vunpack.c.l.b16 %v2082
        %v3107 = vunpack.c.l.b16 %v2083
        %v3108 = vunpack.c.l.b16 %v2084
        %v3109 = vunpack.c.l.b16 %v2085
        %v3110 = vunpack.c.l.b16 %v2086
        %v3111 = vunpack.c.l.b16 %v2087
        %v3112 = vunpack.c.l.b16 %v2088
        %v3113 = vunpack.c.l.b16 %v2089
        %v3114 = vunpack.c.l.b16 %v2090
        %v3115 = vunpack.c.l.b16 %v2091
        %v3116 = vunpack.c.l.b16 %v2092
        %v3117 = vunpack.c.l.b16 %v2093
        %v3118 = vunpack.c.l.b16 %v2094
        %v3119 = vunpack.c.l.b16 %v2095
        %v3120 = vunpack.c.l.b16 %v2096
        %v3121 = vunpack.c.l.b16 %v2097
        %v3122 = vunpack.c.l.b16 %v2098
        %v3123 = vunpack.c.l.b16 %v2099
        %v3124 = vunpack.c.l.b16 %v2100
        %v3125 = vunpack.c.l.b16 %v2101
        %v3126 = vunpack.c.l.b16 %v2102
        %v3127 = vunpack.c.l.b16 %v2103
        %v3128 = vunpack.c.l.b16 %v2104
        %v3129 = vunpack.c.l.b16 %v2105
        %v3130 = vunpack.c.l.b16 %v2106
        %v3131 = vpack.c.b16 %v2988, %v2987
        %v3132 = vpack.c.b16 %v2990, %v2989
        %v3133 = vpack.c.b16 %v2992, %v2991
        %v3134 = vpack.c.b16 %v2994, %v2993
        %v3135 = vpack.c.b16 %v2996, %v2995
        %v3136 = vpack.c.b16 %v2998, %v2997
        %v3137 = vpack.c.b16 %v3000, %v2999
        %v3138 = vpack.c.b16 %v3002, %v3001
        %v3139 = vpack.c.b16 %v3004, %v3003
        %v3140 = vpack.c.b16 %v3006, %v3005
        %v3141 = vpack.c.b16 %v3008, %v3007
        %v3142 = vpack.c.b16 %v3010, %v3009
        %v3143 = vpack.c.b16 %v3012, %v3011
        %v3144 = vpack.c.b16 %v3014, %v3013
        %v3145 = vpack.c.b16 %v3016, %v3015
        %v3146 = vpack.c.b16 %v3018, %v3017
        %v3147 = vpack.c.b16 %v3020, %v3019
        %v3148 = vpack.c.b16 %v3022, %v3021
        %v3149 = vpack.c.b16 %v3024, %v3023
        %v3150 = vpack.c.b16 %v3026, %v3025
        %v3151 = vpack.c.b16 %v3028, %v3027
        %v3152 = vpack.c.b16 %v3030, %v3029
        %v3153 = vpack.c.b16 %v3032, %v3031
        %v3154 = vpack.c.b16 %v3034, %v3033
        %v3155 = vpack.c.b16 %v3036, %v3035
        %v3156 = vpack.c.b16 %v3038, %v3037
        %v3157 = vpack.c.b16 %v3040, %v3039
        %v3158 = vpack.c.b16 %v3042, %v3041
        %v3159 = vpack.c.b16 %v3044, %v3043
        %v3160 = vpack.c.b16 %v3046, %v3045
        %v3161 = vpack.c.b16 %v3048, %v3047
        %v3162 = vpack.c.b16 %v3050, %v3049
        %v3163 = vpack.c.b16 %v3052, %v3051
        %v3164 = vpack.c.b16 %v3054, %v3053
        %v3165 = vpack.c.b16 %v3056, %v3055
        %v3166 = vpack.c.b16 %v3058, %v3057
        %v3167 = vpack.c.b16 %v3060, %v3059
        %v3168 = vpack.c.b16 %v3062, %v3061
        %v3169 = vpack.c.b16 %v3064, %v3063
        %v3170 = vpack.c.b16 %v3066, %v3065
        %v3171 = vpack.c.b16 %v3068, %v3067
        %v3172 = vpack.c.b16 %v3070, %v3069
        %v3173 = vpack.c.b16 %v3072, %v3071
        %v3174 = vpack.c.b16 %v3074, %v3073
        %v3175 = vpack.c.b16 %v3076, %v3075
        %v3176 = vpack.c.b16 %v3078, %v3077
        %v3177 = vpack.c.b16 %v3080, %v3079
        %v3178 = vpack.c.b16 %v3082, %v3081
        %v3179 = vpack.c.b16 %v3084, %v3083
        %v3180 = vpack.c.b16 %v3086, %v3085
        %v3181 = vpack.c.b16 %v3088, %v3087
        %v3182 = vpack.c.b16 %v3090, %v3089
        %v3183 = vpack.c.b16 %v3092, %v3091
        %v3184 = vpack.c.b16 %v3094, %v3093
        %v3185 = vpack.c.b16 %v3096, %v3095
        %v3186 = vpack.c.b16 %v3098, %v3097
        %v3187 = vpack.c.b16 %v3100, %v3099
        %v3188 = vpack.c.b16 %v3102, %v3101
        %v3189 = vpack.c.b16 %v3104, %v3103
        %v3190 = vpack.c.b16 %v3106, %v3105
        %v3191 = vpack.c.b16 %v3108, %v3107
        %v3192 = vpack.c.b16 %v3110, %v3109
        %v3193 = vpack.c.b16 %v3112, %v3111
        %v3194 = vpack.c.b16 %v3114, %v3113
        %v3195 = vpack.c.b16 %v3116, %v3115
        %v3196 = vpack.c.b16 %v3118, %v3117
        %v3197 = vpack.c.b16 %v3120, %v3119
        %v3198 = vpack.c.b16 %v3122, %v3121
        %v3199 = vpack.c.b16 %v3124, %v3123
        %v3200 = vpack.c.b16 %v3126, %v3125
        %v3201 = vpack.c.b16 %v3128, %v3127
        %v3202 = vpack.c.b16 %v3130, %v3129
        %3275 = vmatpush.bf16.msra.mxu0 %v3138
        %3276 = vmatpush.bf16.msra.mxu0 %v3137
        %3277 = vmatpush.bf16.msra.mxu0 %v3136
        %3278 = vmatpush.bf16.msra.mxu0 %v3135
        %3279 = vmatpush.bf16.msra.mxu0 %v3134
        %3280 = vmatpush.bf16.msra.mxu0 %v3133
        %3281 = vmatpush.bf16.msra.mxu0 %v3132
        %3282 = vmatpush.bf16.msra.mxu0 %v3131
        %3283 = vmatmul.bf16.gmra.mxu0 %v2555
        %v3284 = vpop.f32.mrf.mxu0
        %v3285 = vadd.f32 0.0, %v3284
        %v3286 = vpop.f32.mrf.mxu0
        %v3287 = vadd.f32 0.0, %v3286
        %3288 = vmatmul.bf16.gmra.mxu0 %v2564
        %v3289 = vpop.f32.mrf.mxu0
        %v3290 = vadd.f32 0.0, %v3289
        %v3291 = vpop.f32.mrf.mxu0
        %v3292 = vadd.f32 0.0, %v3291
        %3293 = vmatmul.bf16.gmra.mxu0 %v2573
        %v3294 = vpop.f32.mrf.mxu0
        %v3295 = vadd.f32 0.0, %v3294
        %v3296 = vpop.f32.mrf.mxu0
        %v3297 = vadd.f32 0.0, %v3296
        %3298 = vmatmul.bf16.gmra.mxu0 %v2582
        %v3299 = vpop.f32.mrf.mxu0
        %v3300 = vadd.f32 0.0, %v3299
        %v3301 = vpop.f32.mrf.mxu0
        %v3302 = vadd.f32 0.0, %v3301
        %3303 = vmatmul.bf16.gmra.mxu0 %v2591
        %v3304 = vpop.f32.mrf.mxu0
        %v3305 = vadd.f32 0.0, %v3304
        %v3306 = vpop.f32.mrf.mxu0
        %v3307 = vadd.f32 0.0, %v3306
        %3308 = vmatmul.bf16.gmra.mxu0 %v2600
        %v3309 = vpop.f32.mrf.mxu0
        %v3310 = vadd.f32 0.0, %v3309
        %v3311 = vpop.f32.mrf.mxu0
        %v3312 = vadd.f32 0.0, %v3311
        %3313 = vmatmul.bf16.gmra.mxu0 %v2609
        %v3314 = vpop.f32.mrf.mxu0
        %v3315 = vadd.f32 0.0, %v3314
        %v3316 = vpop.f32.mrf.mxu0
        %v3317 = vadd.f32 0.0, %v3316
        %3318 = vmatmul.bf16.gmra.mxu0 %v2618
        %v3319 = vpop.f32.mrf.mxu0
        %v3320 = vadd.f32 0.0, %v3319
        %v3321 = vpop.f32.mrf.mxu0
        %v3322 = vadd.f32 0.0, %v3321
        %3323 = vmatmul.bf16.gmra.mxu0 %v2627
        %v3324 = vpop.f32.mrf.mxu0
        %v3325 = vadd.f32 0.0, %v3324
        %v3326 = vpop.f32.mrf.mxu0
        %v3327 = vadd.f32 0.0, %v3326
        %3328 = vmatmul.bf16.gmra.mxu0 %v2636
        %v3329 = vpop.f32.mrf.mxu0
        %v3330 = vadd.f32 0.0, %v3329
        %v3331 = vpop.f32.mrf.mxu0
        %v3332 = vadd.f32 0.0, %v3331
        %3333 = vmatmul.bf16.gmra.mxu0 %v2645
        %v3334 = vpop.f32.mrf.mxu0
        %v3335 = vadd.f32 0.0, %v3334
        %v3336 = vpop.f32.mrf.mxu0
        %v3337 = vadd.f32 0.0, %v3336
        %3338 = vmatmul.bf16.gmra.mxu0 %v2654
        %v3339 = vpop.f32.mrf.mxu0
        %v3340 = vadd.f32 0.0, %v3339
        %v3341 = vpop.f32.mrf.mxu0
        %v3342 = vadd.f32 0.0, %v3341
        %3343 = vmatmul.bf16.gmra.mxu0 %v2663
        %v3344 = vpop.f32.mrf.mxu0
        %v3345 = vadd.f32 0.0, %v3344
        %v3346 = vpop.f32.mrf.mxu0
        %v3347 = vadd.f32 0.0, %v3346
        %3348 = vmatmul.bf16.gmra.mxu0 %v2672
        %v3349 = vpop.f32.mrf.mxu0
        %v3350 = vadd.f32 0.0, %v3349
        %v3351 = vpop.f32.mrf.mxu0
        %v3352 = vadd.f32 0.0, %v3351
        %3353 = vmatmul.bf16.gmra.mxu0 %v2681
        %v3354 = vpop.f32.mrf.mxu0
        %v3355 = vadd.f32 0.0, %v3354
        %v3356 = vpop.f32.mrf.mxu0
        %v3357 = vadd.f32 0.0, %v3356
        %3358 = vmatmul.bf16.gmra.mxu0 %v2690
        %v3359 = vpop.f32.mrf.mxu0
        %v3360 = vadd.f32 0.0, %v3359
        %v3361 = vpop.f32.mrf.mxu0
        %v3362 = vadd.f32 0.0, %v3361
        %3363 = vdwg.mxu0
        %3364 = vmatpush.bf16.msra.mxu0 %v3146
        %3365 = vmatpush.bf16.msra.mxu0 %v3145
        %3366 = vmatpush.bf16.msra.mxu0 %v3144
        %3367 = vmatpush.bf16.msra.mxu0 %v3143
        %3368 = vmatpush.bf16.msra.mxu0 %v3142
        %3369 = vmatpush.bf16.msra.mxu0 %v3141
        %3370 = vmatpush.bf16.msra.mxu0 %v3140
        %3371 = vmatpush.bf16.msra.mxu0 %v3139
        %3372 = vmatmul.bf16.gmra.mxu0 %v2556
        %v3373 = vpop.f32.mrf.mxu0
        %v3374 = vadd.f32 %v3285, %v3373
        %v3375 = vpop.f32.mrf.mxu0
        %v3376 = vadd.f32 %v3287, %v3375
        %3377 = vmatmul.bf16.gmra.mxu0 %v2565
        %v3378 = vpop.f32.mrf.mxu0
        %v3379 = vadd.f32 %v3290, %v3378
        %v3380 = vpop.f32.mrf.mxu0
        %v3381 = vadd.f32 %v3292, %v3380
        %3382 = vmatmul.bf16.gmra.mxu0 %v2574
        %v3383 = vpop.f32.mrf.mxu0
        %v3384 = vadd.f32 %v3295, %v3383
        %v3385 = vpop.f32.mrf.mxu0
        %v3386 = vadd.f32 %v3297, %v3385
        %3387 = vmatmul.bf16.gmra.mxu0 %v2583
        %v3388 = vpop.f32.mrf.mxu0
        %v3389 = vadd.f32 %v3300, %v3388
        %v3390 = vpop.f32.mrf.mxu0
        %v3391 = vadd.f32 %v3302, %v3390
        %3392 = vmatmul.bf16.gmra.mxu0 %v2592
        %v3393 = vpop.f32.mrf.mxu0
        %v3394 = vadd.f32 %v3305, %v3393
        %v3395 = vpop.f32.mrf.mxu0
        %v3396 = vadd.f32 %v3307, %v3395
        %3397 = vmatmul.bf16.gmra.mxu0 %v2601
        %v3398 = vpop.f32.mrf.mxu0
        %v3399 = vadd.f32 %v3310, %v3398
        %v3400 = vpop.f32.mrf.mxu0
        %v3401 = vadd.f32 %v3312, %v3400
        %3402 = vmatmul.bf16.gmra.mxu0 %v2610
        %v3403 = vpop.f32.mrf.mxu0
        %v3404 = vadd.f32 %v3315, %v3403
        %v3405 = vpop.f32.mrf.mxu0
        %v3406 = vadd.f32 %v3317, %v3405
        %3407 = vmatmul.bf16.gmra.mxu0 %v2619
        %v3408 = vpop.f32.mrf.mxu0
        %v3409 = vadd.f32 %v3320, %v3408
        %v3410 = vpop.f32.mrf.mxu0
        %v3411 = vadd.f32 %v3322, %v3410
        %3412 = vmatmul.bf16.gmra.mxu0 %v2628
        %v3413 = vpop.f32.mrf.mxu0
        %v3414 = vadd.f32 %v3325, %v3413
        %v3415 = vpop.f32.mrf.mxu0
        %v3416 = vadd.f32 %v3327, %v3415
        %3417 = vmatmul.bf16.gmra.mxu0 %v2637
        %v3418 = vpop.f32.mrf.mxu0
        %v3419 = vadd.f32 %v3330, %v3418
        %v3420 = vpop.f32.mrf.mxu0
        %v3421 = vadd.f32 %v3332, %v3420
        %3422 = vmatmul.bf16.gmra.mxu0 %v2646
        %v3423 = vpop.f32.mrf.mxu0
        %v3424 = vadd.f32 %v3335, %v3423
        %v3425 = vpop.f32.mrf.mxu0
        %v3426 = vadd.f32 %v3337, %v3425
        %3427 = vmatmul.bf16.gmra.mxu0 %v2655
        %v3428 = vpop.f32.mrf.mxu0
        %v3429 = vadd.f32 %v3340, %v3428
        %v3430 = vpop.f32.mrf.mxu0
        %v3431 = vadd.f32 %v3342, %v3430
        %3432 = vmatmul.bf16.gmra.mxu0 %v2664
        %v3433 = vpop.f32.mrf.mxu0
        %v3434 = vadd.f32 %v3345, %v3433
        %v3435 = vpop.f32.mrf.mxu0
        %v3436 = vadd.f32 %v3347, %v3435
        %3437 = vmatmul.bf16.gmra.mxu0 %v2673
        %v3438 = vpop.f32.mrf.mxu0
        %v3439 = vadd.f32 %v3350, %v3438
        %v3440 = vpop.f32.mrf.mxu0
        %v3441 = vadd.f32 %v3352, %v3440
        %3442 = vmatmul.bf16.gmra.mxu0 %v2682
        %v3443 = vpop.f32.mrf.mxu0
        %v3444 = vadd.f32 %v3355, %v3443
        %v3445 = vpop.f32.mrf.mxu0
        %v3446 = vadd.f32 %v3357, %v3445
        %3447 = vmatmul.bf16.gmra.mxu0 %v2691
        %v3448 = vpop.f32.mrf.mxu0
        %v3449 = vadd.f32 %v3360, %v3448
        %v3450 = vpop.f32.mrf.mxu0
        %v3451 = vadd.f32 %v3362, %v3450
        %3452 = vdwg.mxu0
        %3453 = vmatpush.bf16.msra.mxu0 %v3154
        %3454 = vmatpush.bf16.msra.mxu0 %v3153
        %3455 = vmatpush.bf16.msra.mxu0 %v3152
        %3456 = vmatpush.bf16.msra.mxu0 %v3151
        %3457 = vmatpush.bf16.msra.mxu0 %v3150
        %3458 = vmatpush.bf16.msra.mxu0 %v3149
        %3459 = vmatpush.bf16.msra.mxu0 %v3148
        %3460 = vmatpush.bf16.msra.mxu0 %v3147
        %3461 = vmatmul.bf16.gmra.mxu0 %v2557
        %v3462 = vpop.f32.mrf.mxu0
        %v3463 = vadd.f32 %v3374, %v3462
        %v3464 = vpop.f32.mrf.mxu0
        %v3465 = vadd.f32 %v3376, %v3464
        %3466 = vmatmul.bf16.gmra.mxu0 %v2566
        %v3467 = vpop.f32.mrf.mxu0
        %v3468 = vadd.f32 %v3379, %v3467
        %v3469 = vpop.f32.mrf.mxu0
        %v3470 = vadd.f32 %v3381, %v3469
        %3471 = vmatmul.bf16.gmra.mxu0 %v2575
        %v3472 = vpop.f32.mrf.mxu0
        %v3473 = vadd.f32 %v3384, %v3472
        %v3474 = vpop.f32.mrf.mxu0
        %v3475 = vadd.f32 %v3386, %v3474
        %3476 = vmatmul.bf16.gmra.mxu0 %v2584
        %v3477 = vpop.f32.mrf.mxu0
        %v3478 = vadd.f32 %v3389, %v3477
        %v3479 = vpop.f32.mrf.mxu0
        %v3480 = vadd.f32 %v3391, %v3479
        %3481 = vmatmul.bf16.gmra.mxu0 %v2593
        %v3482 = vpop.f32.mrf.mxu0
        %v3483 = vadd.f32 %v3394, %v3482
        %v3484 = vpop.f32.mrf.mxu0
        %v3485 = vadd.f32 %v3396, %v3484
        %3486 = vmatmul.bf16.gmra.mxu0 %v2602
        %v3487 = vpop.f32.mrf.mxu0
        %v3488 = vadd.f32 %v3399, %v3487
        %v3489 = vpop.f32.mrf.mxu0
        %v3490 = vadd.f32 %v3401, %v3489
        %3491 = vmatmul.bf16.gmra.mxu0 %v2611
        %v3492 = vpop.f32.mrf.mxu0
        %v3493 = vadd.f32 %v3404, %v3492
        %v3494 = vpop.f32.mrf.mxu0
        %v3495 = vadd.f32 %v3406, %v3494
        %3496 = vmatmul.bf16.gmra.mxu0 %v2620
        %v3497 = vpop.f32.mrf.mxu0
        %v3498 = vadd.f32 %v3409, %v3497
        %v3499 = vpop.f32.mrf.mxu0
        %v3500 = vadd.f32 %v3411, %v3499
        %3501 = vmatmul.bf16.gmra.mxu0 %v2629
        %v3502 = vpop.f32.mrf.mxu0
        %v3503 = vadd.f32 %v3414, %v3502
        %v3504 = vpop.f32.mrf.mxu0
        %v3505 = vadd.f32 %v3416, %v3504
        %3506 = vmatmul.bf16.gmra.mxu0 %v2638
        %v3507 = vpop.f32.mrf.mxu0
        %v3508 = vadd.f32 %v3419, %v3507
        %v3509 = vpop.f32.mrf.mxu0
        %v3510 = vadd.f32 %v3421, %v3509
        %3511 = vmatmul.bf16.gmra.mxu0 %v2647
        %v3512 = vpop.f32.mrf.mxu0
        %v3513 = vadd.f32 %v3424, %v3512
        %v3514 = vpop.f32.mrf.mxu0
        %v3515 = vadd.f32 %v3426, %v3514
        %3516 = vmatmul.bf16.gmra.mxu0 %v2656
        %v3517 = vpop.f32.mrf.mxu0
        %v3518 = vadd.f32 %v3429, %v3517
        %v3519 = vpop.f32.mrf.mxu0
        %v3520 = vadd.f32 %v3431, %v3519
        %3521 = vmatmul.bf16.gmra.mxu0 %v2665
        %v3522 = vpop.f32.mrf.mxu0
        %v3523 = vadd.f32 %v3434, %v3522
        %v3524 = vpop.f32.mrf.mxu0
        %v3525 = vadd.f32 %v3436, %v3524
        %3526 = vmatmul.bf16.gmra.mxu0 %v2674
        %v3527 = vpop.f32.mrf.mxu0
        %v3528 = vadd.f32 %v3439, %v3527
        %v3529 = vpop.f32.mrf.mxu0
        %v3530 = vadd.f32 %v3441, %v3529
        %3531 = vmatmul.bf16.gmra.mxu0 %v2683
        %v3532 = vpop.f32.mrf.mxu0
        %v3533 = vadd.f32 %v3444, %v3532
        %v3534 = vpop.f32.mrf.mxu0
        %v3535 = vadd.f32 %v3446, %v3534
        %3536 = vmatmul.bf16.gmra.mxu0 %v2692
        %v3537 = vpop.f32.mrf.mxu0
        %v3538 = vadd.f32 %v3449, %v3537
        %v3539 = vpop.f32.mrf.mxu0
        %v3540 = vadd.f32 %v3451, %v3539
        %3541 = vdwg.mxu0
        %3542 = vmatpush.bf16.msra.mxu0 %v3162
        %3543 = vmatpush.bf16.msra.mxu0 %v3161
        %3544 = vmatpush.bf16.msra.mxu0 %v3160
        %3545 = vmatpush.bf16.msra.mxu0 %v3159
        %3546 = vmatpush.bf16.msra.mxu0 %v3158
        %3547 = vmatpush.bf16.msra.mxu0 %v3157
        %3548 = vmatpush.bf16.msra.mxu0 %v3156
        %3549 = vmatpush.bf16.msra.mxu0 %v3155
        %3550 = vmatmul.bf16.gmra.mxu0 %v2558
        %v3551 = vpop.f32.mrf.mxu0
        %v3552 = vadd.f32 %v3463, %v3551
        %v3553 = vpop.f32.mrf.mxu0
        %v3554 = vadd.f32 %v3465, %v3553
        %3555 = vmatmul.bf16.gmra.mxu0 %v2567
        %v3556 = vpop.f32.mrf.mxu0
        %v3557 = vadd.f32 %v3468, %v3556
        %v3558 = vpop.f32.mrf.mxu0
        %v3559 = vadd.f32 %v3470, %v3558
        %3560 = vmatmul.bf16.gmra.mxu0 %v2576
        %v3561 = vpop.f32.mrf.mxu0
        %v3562 = vadd.f32 %v3473, %v3561
        %v3563 = vpop.f32.mrf.mxu0
        %v3564 = vadd.f32 %v3475, %v3563
        %3565 = vmatmul.bf16.gmra.mxu0 %v2585
        %v3566 = vpop.f32.mrf.mxu0
        %v3567 = vadd.f32 %v3478, %v3566
        %v3568 = vpop.f32.mrf.mxu0
        %v3569 = vadd.f32 %v3480, %v3568
        %3570 = vmatmul.bf16.gmra.mxu0 %v2594
        %v3571 = vpop.f32.mrf.mxu0
        %v3572 = vadd.f32 %v3483, %v3571
        %v3573 = vpop.f32.mrf.mxu0
        %v3574 = vadd.f32 %v3485, %v3573
        %3575 = vmatmul.bf16.gmra.mxu0 %v2603
        %v3576 = vpop.f32.mrf.mxu0
        %v3577 = vadd.f32 %v3488, %v3576
        %v3578 = vpop.f32.mrf.mxu0
        %v3579 = vadd.f32 %v3490, %v3578
        %3580 = vmatmul.bf16.gmra.mxu0 %v2612
        %v3581 = vpop.f32.mrf.mxu0
        %v3582 = vadd.f32 %v3493, %v3581
        %v3583 = vpop.f32.mrf.mxu0
        %v3584 = vadd.f32 %v3495, %v3583
        %3585 = vmatmul.bf16.gmra.mxu0 %v2621
        %v3586 = vpop.f32.mrf.mxu0
        %v3587 = vadd.f32 %v3498, %v3586
        %v3588 = vpop.f32.mrf.mxu0
        %v3589 = vadd.f32 %v3500, %v3588
        %3590 = vmatmul.bf16.gmra.mxu0 %v2630
        %v3591 = vpop.f32.mrf.mxu0
        %v3592 = vadd.f32 %v3503, %v3591
        %v3593 = vpop.f32.mrf.mxu0
        %v3594 = vadd.f32 %v3505, %v3593
        %3595 = vmatmul.bf16.gmra.mxu0 %v2639
        %v3596 = vpop.f32.mrf.mxu0
        %v3597 = vadd.f32 %v3508, %v3596
        %v3598 = vpop.f32.mrf.mxu0
        %v3599 = vadd.f32 %v3510, %v3598
        %3600 = vmatmul.bf16.gmra.mxu0 %v2648
        %v3601 = vpop.f32.mrf.mxu0
        %v3602 = vadd.f32 %v3513, %v3601
        %v3603 = vpop.f32.mrf.mxu0
        %v3604 = vadd.f32 %v3515, %v3603
        %3605 = vmatmul.bf16.gmra.mxu0 %v2657
        %v3606 = vpop.f32.mrf.mxu0
        %v3607 = vadd.f32 %v3518, %v3606
        %v3608 = vpop.f32.mrf.mxu0
        %v3609 = vadd.f32 %v3520, %v3608
        %3610 = vmatmul.bf16.gmra.mxu0 %v2666
        %v3611 = vpop.f32.mrf.mxu0
        %v3612 = vadd.f32 %v3523, %v3611
        %v3613 = vpop.f32.mrf.mxu0
        %v3614 = vadd.f32 %v3525, %v3613
        %3615 = vmatmul.bf16.gmra.mxu0 %v2675
        %v3616 = vpop.f32.mrf.mxu0
        %v3617 = vadd.f32 %v3528, %v3616
        %v3618 = vpop.f32.mrf.mxu0
        %v3619 = vadd.f32 %v3530, %v3618
        %3620 = vmatmul.bf16.gmra.mxu0 %v2684
        %v3621 = vpop.f32.mrf.mxu0
        %v3622 = vadd.f32 %v3533, %v3621
        %v3623 = vpop.f32.mrf.mxu0
        %v3624 = vadd.f32 %v3535, %v3623
        %3625 = vmatmul.bf16.gmra.mxu0 %v2693
        %v3626 = vpop.f32.mrf.mxu0
        %v3627 = vadd.f32 %v3538, %v3626
        %v3628 = vpop.f32.mrf.mxu0
        %v3629 = vadd.f32 %v3540, %v3628
        %3630 = vdwg.mxu0
        %3631 = vmatpush.bf16.msra.mxu0 %v3170
        %3632 = vmatpush.bf16.msra.mxu0 %v3169
        %3633 = vmatpush.bf16.msra.mxu0 %v3168
        %3634 = vmatpush.bf16.msra.mxu0 %v3167
        %3635 = vmatpush.bf16.msra.mxu0 %v3166
        %3636 = vmatpush.bf16.msra.mxu0 %v3165
        %3637 = vmatpush.bf16.msra.mxu0 %v3164
        %3638 = vmatpush.bf16.msra.mxu0 %v3163
        %3639 = vmatmul.bf16.gmra.mxu0 %v2559
        %v3640 = vpop.f32.mrf.mxu0
        %v3641 = vadd.f32 %v3552, %v3640
        %v3642 = vpop.f32.mrf.mxu0
        %v3643 = vadd.f32 %v3554, %v3642
        %3644 = vmatmul.bf16.gmra.mxu0 %v2568
        %v3645 = vpop.f32.mrf.mxu0
        %v3646 = vadd.f32 %v3557, %v3645
        %v3647 = vpop.f32.mrf.mxu0
        %v3648 = vadd.f32 %v3559, %v3647
        %3649 = vmatmul.bf16.gmra.mxu0 %v2577
        %v3650 = vpop.f32.mrf.mxu0
        %v3651 = vadd.f32 %v3562, %v3650
        %v3652 = vpop.f32.mrf.mxu0
        %v3653 = vadd.f32 %v3564, %v3652
        %3654 = vmatmul.bf16.gmra.mxu0 %v2586
        %v3655 = vpop.f32.mrf.mxu0
        %v3656 = vadd.f32 %v3567, %v3655
        %v3657 = vpop.f32.mrf.mxu0
        %v3658 = vadd.f32 %v3569, %v3657
        %3659 = vmatmul.bf16.gmra.mxu0 %v2595
        %v3660 = vpop.f32.mrf.mxu0
        %v3661 = vadd.f32 %v3572, %v3660
        %v3662 = vpop.f32.mrf.mxu0
        %v3663 = vadd.f32 %v3574, %v3662
        %3664 = vmatmul.bf16.gmra.mxu0 %v2604
        %v3665 = vpop.f32.mrf.mxu0
        %v3666 = vadd.f32 %v3577, %v3665
        %v3667 = vpop.f32.mrf.mxu0
        %v3668 = vadd.f32 %v3579, %v3667
        %3669 = vmatmul.bf16.gmra.mxu0 %v2613
        %v3670 = vpop.f32.mrf.mxu0
        %v3671 = vadd.f32 %v3582, %v3670
        %v3672 = vpop.f32.mrf.mxu0
        %v3673 = vadd.f32 %v3584, %v3672
        %3674 = vmatmul.bf16.gmra.mxu0 %v2622
        %v3675 = vpop.f32.mrf.mxu0
        %v3676 = vadd.f32 %v3587, %v3675
        %v3677 = vpop.f32.mrf.mxu0
        %v3678 = vadd.f32 %v3589, %v3677
        %3679 = vmatmul.bf16.gmra.mxu0 %v2631
        %v3680 = vpop.f32.mrf.mxu0
        %v3681 = vadd.f32 %v3592, %v3680
        %v3682 = vpop.f32.mrf.mxu0
        %v3683 = vadd.f32 %v3594, %v3682
        %3684 = vmatmul.bf16.gmra.mxu0 %v2640
        %v3685 = vpop.f32.mrf.mxu0
        %v3686 = vadd.f32 %v3597, %v3685
        %v3687 = vpop.f32.mrf.mxu0
        %v3688 = vadd.f32 %v3599, %v3687
        %3689 = vmatmul.bf16.gmra.mxu0 %v2649
        %v3690 = vpop.f32.mrf.mxu0
        %v3691 = vadd.f32 %v3602, %v3690
        %v3692 = vpop.f32.mrf.mxu0
        %v3693 = vadd.f32 %v3604, %v3692
        %3694 = vmatmul.bf16.gmra.mxu0 %v2658
        %v3695 = vpop.f32.mrf.mxu0
        %v3696 = vadd.f32 %v3607, %v3695
        %v3697 = vpop.f32.mrf.mxu0
        %v3698 = vadd.f32 %v3609, %v3697
        %3699 = vmatmul.bf16.gmra.mxu0 %v2667
        %v3700 = vpop.f32.mrf.mxu0
        %v3701 = vadd.f32 %v3612, %v3700
        %v3702 = vpop.f32.mrf.mxu0
        %v3703 = vadd.f32 %v3614, %v3702
        %3704 = vmatmul.bf16.gmra.mxu0 %v2676
        %v3705 = vpop.f32.mrf.mxu0
        %v3706 = vadd.f32 %v3617, %v3705
        %v3707 = vpop.f32.mrf.mxu0
        %v3708 = vadd.f32 %v3619, %v3707
        %3709 = vmatmul.bf16.gmra.mxu0 %v2685
        %v3710 = vpop.f32.mrf.mxu0
        %v3711 = vadd.f32 %v3622, %v3710
        %v3712 = vpop.f32.mrf.mxu0
        %v3713 = vadd.f32 %v3624, %v3712
        %3714 = vmatmul.bf16.gmra.mxu0 %v2694
        %v3715 = vpop.f32.mrf.mxu0
        %v3716 = vadd.f32 %v3627, %v3715
        %v3717 = vpop.f32.mrf.mxu0
        %v3718 = vadd.f32 %v3629, %v3717
        %3719 = vdwg.mxu0
        %3720 = vmatpush.bf16.msra.mxu0 %v3178
        %3721 = vmatpush.bf16.msra.mxu0 %v3177
        %3722 = vmatpush.bf16.msra.mxu0 %v3176
        %3723 = vmatpush.bf16.msra.mxu0 %v3175
        %3724 = vmatpush.bf16.msra.mxu0 %v3174
        %3725 = vmatpush.bf16.msra.mxu0 %v3173
        %3726 = vmatpush.bf16.msra.mxu0 %v3172
        %3727 = vmatpush.bf16.msra.mxu0 %v3171
        %3728 = vmatmul.bf16.gmra.mxu0 %v2560
        %v3729 = vpop.f32.mrf.mxu0
        %v3730 = vadd.f32 %v3641, %v3729
        %v3731 = vpop.f32.mrf.mxu0
        %v3732 = vadd.f32 %v3643, %v3731
        %3733 = vmatmul.bf16.gmra.mxu0 %v2569
        %v3734 = vpop.f32.mrf.mxu0
        %v3735 = vadd.f32 %v3646, %v3734
        %v3736 = vpop.f32.mrf.mxu0
        %v3737 = vadd.f32 %v3648, %v3736
        %3738 = vmatmul.bf16.gmra.mxu0 %v2578
        %v3739 = vpop.f32.mrf.mxu0
        %v3740 = vadd.f32 %v3651, %v3739
        %v3741 = vpop.f32.mrf.mxu0
        %v3742 = vadd.f32 %v3653, %v3741
        %3743 = vmatmul.bf16.gmra.mxu0 %v2587
        %v3744 = vpop.f32.mrf.mxu0
        %v3745 = vadd.f32 %v3656, %v3744
        %v3746 = vpop.f32.mrf.mxu0
        %v3747 = vadd.f32 %v3658, %v3746
        %3748 = vmatmul.bf16.gmra.mxu0 %v2596
        %v3749 = vpop.f32.mrf.mxu0
        %v3750 = vadd.f32 %v3661, %v3749
        %v3751 = vpop.f32.mrf.mxu0
        %v3752 = vadd.f32 %v3663, %v3751
        %3753 = vmatmul.bf16.gmra.mxu0 %v2605
        %v3754 = vpop.f32.mrf.mxu0
        %v3755 = vadd.f32 %v3666, %v3754
        %v3756 = vpop.f32.mrf.mxu0
        %v3757 = vadd.f32 %v3668, %v3756
        %3758 = vmatmul.bf16.gmra.mxu0 %v2614
        %v3759 = vpop.f32.mrf.mxu0
        %v3760 = vadd.f32 %v3671, %v3759
        %v3761 = vpop.f32.mrf.mxu0
        %v3762 = vadd.f32 %v3673, %v3761
        %3763 = vmatmul.bf16.gmra.mxu0 %v2623
        %v3764 = vpop.f32.mrf.mxu0
        %v3765 = vadd.f32 %v3676, %v3764
        %v3766 = vpop.f32.mrf.mxu0
        %v3767 = vadd.f32 %v3678, %v3766
        %3768 = vmatmul.bf16.gmra.mxu0 %v2632
        %v3769 = vpop.f32.mrf.mxu0
        %v3770 = vadd.f32 %v3681, %v3769
        %v3771 = vpop.f32.mrf.mxu0
        %v3772 = vadd.f32 %v3683, %v3771
        %3773 = vmatmul.bf16.gmra.mxu0 %v2641
        %v3774 = vpop.f32.mrf.mxu0
        %v3775 = vadd.f32 %v3686, %v3774
        %v3776 = vpop.f32.mrf.mxu0
        %v3777 = vadd.f32 %v3688, %v3776
        %3778 = vmatmul.bf16.gmra.mxu0 %v2650
        %v3779 = vpop.f32.mrf.mxu0
        %v3780 = vadd.f32 %v3691, %v3779
        %v3781 = vpop.f32.mrf.mxu0
        %v3782 = vadd.f32 %v3693, %v3781
        %3783 = vmatmul.bf16.gmra.mxu0 %v2659
        %v3784 = vpop.f32.mrf.mxu0
        %v3785 = vadd.f32 %v3696, %v3784
        %v3786 = vpop.f32.mrf.mxu0
        %v3787 = vadd.f32 %v3698, %v3786
        %3788 = vmatmul.bf16.gmra.mxu0 %v2668
        %v3789 = vpop.f32.mrf.mxu0
        %v3790 = vadd.f32 %v3701, %v3789
        %v3791 = vpop.f32.mrf.mxu0
        %v3792 = vadd.f32 %v3703, %v3791
        %3793 = vmatmul.bf16.gmra.mxu0 %v2677
        %v3794 = vpop.f32.mrf.mxu0
        %v3795 = vadd.f32 %v3706, %v3794
        %v3796 = vpop.f32.mrf.mxu0
        %v3797 = vadd.f32 %v3708, %v3796
        %3798 = vmatmul.bf16.gmra.mxu0 %v2686
        %v3799 = vpop.f32.mrf.mxu0
        %v3800 = vadd.f32 %v3711, %v3799
        %v3801 = vpop.f32.mrf.mxu0
        %v3802 = vadd.f32 %v3713, %v3801
        %3803 = vmatmul.bf16.gmra.mxu0 %v2695
        %v3804 = vpop.f32.mrf.mxu0
        %v3805 = vadd.f32 %v3716, %v3804
        %v3806 = vpop.f32.mrf.mxu0
        %v3807 = vadd.f32 %v3718, %v3806
        %3808 = vdwg.mxu0
        %3809 = vmatpush.bf16.msra.mxu0 %v3186
        %3810 = vmatpush.bf16.msra.mxu0 %v3185
        %3811 = vmatpush.bf16.msra.mxu0 %v3184
        %3812 = vmatpush.bf16.msra.mxu0 %v3183
        %3813 = vmatpush.bf16.msra.mxu0 %v3182
        %3814 = vmatpush.bf16.msra.mxu0 %v3181
        %3815 = vmatpush.bf16.msra.mxu0 %v3180
        %3816 = vmatpush.bf16.msra.mxu0 %v3179
        %3817 = vmatmul.bf16.gmra.mxu0 %v2561
        %v3818 = vpop.f32.mrf.mxu0
        %v3819 = vadd.f32 %v3730, %v3818
        %v3820 = vpop.f32.mrf.mxu0
        %v3821 = vadd.f32 %v3732, %v3820
        %3822 = vmatmul.bf16.gmra.mxu0 %v2570
        %v3823 = vpop.f32.mrf.mxu0
        %v3824 = vadd.f32 %v3735, %v3823
        %v3825 = vpop.f32.mrf.mxu0
        %v3826 = vadd.f32 %v3737, %v3825
        %3827 = vmatmul.bf16.gmra.mxu0 %v2579
        %v3828 = vpop.f32.mrf.mxu0
        %v3829 = vadd.f32 %v3740, %v3828
        %v3830 = vpop.f32.mrf.mxu0
        %v3831 = vadd.f32 %v3742, %v3830
        %3832 = vmatmul.bf16.gmra.mxu0 %v2588
        %v3833 = vpop.f32.mrf.mxu0
        %v3834 = vadd.f32 %v3745, %v3833
        %v3835 = vpop.f32.mrf.mxu0
        %v3836 = vadd.f32 %v3747, %v3835
        %3837 = vmatmul.bf16.gmra.mxu0 %v2597
        %v3838 = vpop.f32.mrf.mxu0
        %v3839 = vadd.f32 %v3750, %v3838
        %v3840 = vpop.f32.mrf.mxu0
        %v3841 = vadd.f32 %v3752, %v3840
        %3842 = vmatmul.bf16.gmra.mxu0 %v2606
        %v3843 = vpop.f32.mrf.mxu0
        %v3844 = vadd.f32 %v3755, %v3843
        %v3845 = vpop.f32.mrf.mxu0
        %v3846 = vadd.f32 %v3757, %v3845
        %3847 = vmatmul.bf16.gmra.mxu0 %v2615
        %v3848 = vpop.f32.mrf.mxu0
        %v3849 = vadd.f32 %v3760, %v3848
        %v3850 = vpop.f32.mrf.mxu0
        %v3851 = vadd.f32 %v3762, %v3850
        %3852 = vmatmul.bf16.gmra.mxu0 %v2624
        %v3853 = vpop.f32.mrf.mxu0
        %v3854 = vadd.f32 %v3765, %v3853
        %v3855 = vpop.f32.mrf.mxu0
        %v3856 = vadd.f32 %v3767, %v3855
        %3857 = vmatmul.bf16.gmra.mxu0 %v2633
        %v3858 = vpop.f32.mrf.mxu0
        %v3859 = vadd.f32 %v3770, %v3858
        %v3860 = vpop.f32.mrf.mxu0
        %v3861 = vadd.f32 %v3772, %v3860
        %3862 = vmatmul.bf16.gmra.mxu0 %v2642
        %v3863 = vpop.f32.mrf.mxu0
        %v3864 = vadd.f32 %v3775, %v3863
        %v3865 = vpop.f32.mrf.mxu0
        %v3866 = vadd.f32 %v3777, %v3865
        %3867 = vmatmul.bf16.gmra.mxu0 %v2651
        %v3868 = vpop.f32.mrf.mxu0
        %v3869 = vadd.f32 %v3780, %v3868
        %v3870 = vpop.f32.mrf.mxu0
        %v3871 = vadd.f32 %v3782, %v3870
        %3872 = vmatmul.bf16.gmra.mxu0 %v2660
        %v3873 = vpop.f32.mrf.mxu0
        %v3874 = vadd.f32 %v3785, %v3873
        %v3875 = vpop.f32.mrf.mxu0
        %v3876 = vadd.f32 %v3787, %v3875
        %3877 = vmatmul.bf16.gmra.mxu0 %v2669
        %v3878 = vpop.f32.mrf.mxu0
        %v3879 = vadd.f32 %v3790, %v3878
        %v3880 = vpop.f32.mrf.mxu0
        %v3881 = vadd.f32 %v3792, %v3880
        %3882 = vmatmul.bf16.gmra.mxu0 %v2678
        %v3883 = vpop.f32.mrf.mxu0
        %v3884 = vadd.f32 %v3795, %v3883
        %v3885 = vpop.f32.mrf.mxu0
        %v3886 = vadd.f32 %v3797, %v3885
        %3887 = vmatmul.bf16.gmra.mxu0 %v2687
        %v3888 = vpop.f32.mrf.mxu0
        %v3889 = vadd.f32 %v3800, %v3888
        %v3890 = vpop.f32.mrf.mxu0
        %v3891 = vadd.f32 %v3802, %v3890
        %3892 = vmatmul.bf16.gmra.mxu0 %v2696
        %v3893 = vpop.f32.mrf.mxu0
        %v3894 = vadd.f32 %v3805, %v3893
        %v3895 = vpop.f32.mrf.mxu0
        %v3896 = vadd.f32 %v3807, %v3895
        %3897 = vdwg.mxu0
        %3898 = vmatpush.bf16.msra.mxu0 %v3194
        %3899 = vmatpush.bf16.msra.mxu0 %v3193
        %3900 = vmatpush.bf16.msra.mxu0 %v3192
        %3901 = vmatpush.bf16.msra.mxu0 %v3191
        %3902 = vmatpush.bf16.msra.mxu0 %v3190
        %3903 = vmatpush.bf16.msra.mxu0 %v3189
        %3904 = vmatpush.bf16.msra.mxu0 %v3188
        %3905 = vmatpush.bf16.msra.mxu0 %v3187
        %3906 = vmatmul.bf16.gmra.mxu0 %v2562
        %v3907 = vpop.f32.mrf.mxu0
        %v3908 = vadd.f32 %v3819, %v3907
        %v3909 = vpop.f32.mrf.mxu0
        %v3910 = vadd.f32 %v3821, %v3909
        %3911 = vmatmul.bf16.gmra.mxu0 %v2571
        %v3912 = vpop.f32.mrf.mxu0
        %v3913 = vadd.f32 %v3824, %v3912
        %v3914 = vpop.f32.mrf.mxu0
        %v3915 = vadd.f32 %v3826, %v3914
        %3916 = vmatmul.bf16.gmra.mxu0 %v2580
        %v3917 = vpop.f32.mrf.mxu0
        %v3918 = vadd.f32 %v3829, %v3917
        %v3919 = vpop.f32.mrf.mxu0
        %v3920 = vadd.f32 %v3831, %v3919
        %3921 = vmatmul.bf16.gmra.mxu0 %v2589
        %v3922 = vpop.f32.mrf.mxu0
        %v3923 = vadd.f32 %v3834, %v3922
        %v3924 = vpop.f32.mrf.mxu0
        %v3925 = vadd.f32 %v3836, %v3924
        %3926 = vmatmul.bf16.gmra.mxu0 %v2598
        %v3927 = vpop.f32.mrf.mxu0
        %v3928 = vadd.f32 %v3839, %v3927
        %v3929 = vpop.f32.mrf.mxu0
        %v3930 = vadd.f32 %v3841, %v3929
        %3931 = vmatmul.bf16.gmra.mxu0 %v2607
        %v3932 = vpop.f32.mrf.mxu0
        %v3933 = vadd.f32 %v3844, %v3932
        %v3934 = vpop.f32.mrf.mxu0
        %v3935 = vadd.f32 %v3846, %v3934
        %3936 = vmatmul.bf16.gmra.mxu0 %v2616
        %v3937 = vpop.f32.mrf.mxu0
        %v3938 = vadd.f32 %v3849, %v3937
        %v3939 = vpop.f32.mrf.mxu0
        %v3940 = vadd.f32 %v3851, %v3939
        %3941 = vmatmul.bf16.gmra.mxu0 %v2625
        %v3942 = vpop.f32.mrf.mxu0
        %v3943 = vadd.f32 %v3854, %v3942
        %v3944 = vpop.f32.mrf.mxu0
        %v3945 = vadd.f32 %v3856, %v3944
        %3946 = vmatmul.bf16.gmra.mxu0 %v2634
        %v3947 = vpop.f32.mrf.mxu0
        %v3948 = vadd.f32 %v3859, %v3947
        %v3949 = vpop.f32.mrf.mxu0
        %v3950 = vadd.f32 %v3861, %v3949
        %3951 = vmatmul.bf16.gmra.mxu0 %v2643
        %v3952 = vpop.f32.mrf.mxu0
        %v3953 = vadd.f32 %v3864, %v3952
        %v3954 = vpop.f32.mrf.mxu0
        %v3955 = vadd.f32 %v3866, %v3954
        %3956 = vmatmul.bf16.gmra.mxu0 %v2652
        %v3957 = vpop.f32.mrf.mxu0
        %v3958 = vadd.f32 %v3869, %v3957
        %v3959 = vpop.f32.mrf.mxu0
        %v3960 = vadd.f32 %v3871, %v3959
        %3961 = vmatmul.bf16.gmra.mxu0 %v2661
        %v3962 = vpop.f32.mrf.mxu0
        %v3963 = vadd.f32 %v3874, %v3962
        %v3964 = vpop.f32.mrf.mxu0
        %v3965 = vadd.f32 %v3876, %v3964
        %3966 = vmatmul.bf16.gmra.mxu0 %v2670
        %v3967 = vpop.f32.mrf.mxu0
        %v3968 = vadd.f32 %v3879, %v3967
        %v3969 = vpop.f32.mrf.mxu0
        %v3970 = vadd.f32 %v3881, %v3969
        %3971 = vmatmul.bf16.gmra.mxu0 %v2679
        %v3972 = vpop.f32.mrf.mxu0
        %v3973 = vadd.f32 %v3884, %v3972
        %v3974 = vpop.f32.mrf.mxu0
        %v3975 = vadd.f32 %v3886, %v3974
        %3976 = vmatmul.bf16.gmra.mxu0 %v2688
        %v3977 = vpop.f32.mrf.mxu0
        %v3978 = vadd.f32 %v3889, %v3977
        %v3979 = vpop.f32.mrf.mxu0
        %v3980 = vadd.f32 %v3891, %v3979
        %3981 = vmatmul.bf16.gmra.mxu0 %v2697
        %v3982 = vpop.f32.mrf.mxu0
        %v3983 = vadd.f32 %v3894, %v3982
        %v3984 = vpop.f32.mrf.mxu0
        %v3985 = vadd.f32 %v3896, %v3984
        %3986 = vdwg.mxu0
        %3987 = vmatpush.bf16.msra.mxu0 %v3202
        %3988 = vmatpush.bf16.msra.mxu0 %v3201
        %3989 = vmatpush.bf16.msra.mxu0 %v3200
        %3990 = vmatpush.bf16.msra.mxu0 %v3199
        %3991 = vmatpush.bf16.msra.mxu0 %v3198
        %3992 = vmatpush.bf16.msra.mxu0 %v3197
        %3993 = vmatpush.bf16.msra.mxu0 %v3196
        %3994 = vmatpush.bf16.msra.mxu0 %v3195
        %3995 = vmatmul.bf16.gmra.mxu0 %v2563
        %v3996 = vpop.f32.mrf.mxu0
        %v3997 = vadd.f32 %v3908, %v3996
        %v3998 = vpop.f32.mrf.mxu0
        %v3999 = vadd.f32 %v3910, %v3998
        %4000 = vmatmul.bf16.gmra.mxu0 %v2572
        %v4001 = vpop.f32.mrf.mxu0
        %v4002 = vadd.f32 %v3913, %v4001
        %v4003 = vpop.f32.mrf.mxu0
        %v4004 = vadd.f32 %v3915, %v4003
        %4005 = vmatmul.bf16.gmra.mxu0 %v2581
        %v4006 = vpop.f32.mrf.mxu0
        %v4007 = vadd.f32 %v3918, %v4006
        %v4008 = vpop.f32.mrf.mxu0
        %v4009 = vadd.f32 %v3920, %v4008
        %4010 = vmatmul.bf16.gmra.mxu0 %v2590
        %v4011 = vpop.f32.mrf.mxu0
        %v4012 = vadd.f32 %v3923, %v4011
        %v4013 = vpop.f32.mrf.mxu0
        %v4014 = vadd.f32 %v3925, %v4013
        %4015 = vmatmul.bf16.gmra.mxu0 %v2599
        %v4016 = vpop.f32.mrf.mxu0
        %v4017 = vadd.f32 %v3928, %v4016
        %v4018 = vpop.f32.mrf.mxu0
        %v4019 = vadd.f32 %v3930, %v4018
        %4020 = vmatmul.bf16.gmra.mxu0 %v2608
        %v4021 = vpop.f32.mrf.mxu0
        %v4022 = vadd.f32 %v3933, %v4021
        %v4023 = vpop.f32.mrf.mxu0
        %v4024 = vadd.f32 %v3935, %v4023
        %4025 = vmatmul.bf16.gmra.mxu0 %v2617
        %v4026 = vpop.f32.mrf.mxu0
        %v4027 = vadd.f32 %v3938, %v4026
        %v4028 = vpop.f32.mrf.mxu0
        %v4029 = vadd.f32 %v3940, %v4028
        %4030 = vmatmul.bf16.gmra.mxu0 %v2626
        %v4031 = vpop.f32.mrf.mxu0
        %v4032 = vadd.f32 %v3943, %v4031
        %v4033 = vpop.f32.mrf.mxu0
        %v4034 = vadd.f32 %v3945, %v4033
        %4035 = vmatmul.bf16.gmra.mxu0 %v2635
        %v4036 = vpop.f32.mrf.mxu0
        %v4037 = vadd.f32 %v3948, %v4036
        %v4038 = vpop.f32.mrf.mxu0
        %v4039 = vadd.f32 %v3950, %v4038
        %4040 = vmatmul.bf16.gmra.mxu0 %v2644
        %v4041 = vpop.f32.mrf.mxu0
        %v4042 = vadd.f32 %v3953, %v4041
        %v4043 = vpop.f32.mrf.mxu0
        %v4044 = vadd.f32 %v3955, %v4043
        %4045 = vmatmul.bf16.gmra.mxu0 %v2653
        %v4046 = vpop.f32.mrf.mxu0
        %v4047 = vadd.f32 %v3958, %v4046
        %v4048 = vpop.f32.mrf.mxu0
        %v4049 = vadd.f32 %v3960, %v4048
        %4050 = vmatmul.bf16.gmra.mxu0 %v2662
        %v4051 = vpop.f32.mrf.mxu0
        %v4052 = vadd.f32 %v3963, %v4051
        %v4053 = vpop.f32.mrf.mxu0
        %v4054 = vadd.f32 %v3965, %v4053
        %4055 = vmatmul.bf16.gmra.mxu0 %v2671
        %v4056 = vpop.f32.mrf.mxu0
        %v4057 = vadd.f32 %v3968, %v4056
        %v4058 = vpop.f32.mrf.mxu0
        %v4059 = vadd.f32 %v3970, %v4058
        %4060 = vmatmul.bf16.gmra.mxu0 %v2680
        %v4061 = vpop.f32.mrf.mxu0
        %v4062 = vadd.f32 %v3973, %v4061
        %v4063 = vpop.f32.mrf.mxu0
        %v4064 = vadd.f32 %v3975, %v4063
        %4065 = vmatmul.bf16.gmra.mxu0 %v2689
        %v4066 = vpop.f32.mrf.mxu0
        %v4067 = vadd.f32 %v3978, %v4066
        %v4068 = vpop.f32.mrf.mxu0
        %v4069 = vadd.f32 %v3980, %v4068
        %4070 = vmatmul.bf16.gmra.mxu0 %v2698
        %v4071 = vpop.f32.mrf.mxu0
        %v4072 = vadd.f32 %v3983, %v4071
        %v4073 = vpop.f32.mrf.mxu0
        %v4074 = vadd.f32 %v3985, %v4073
        %4075 = vdwg.mxu0
        %v4076 = vld [vmem:[%s5] sm:$0x1]
        %v4077 = vperm.slane %v4076, 0
        %v4078 = vmul.f32 %v3997, %v4077
        %v4079 = vmul.f32 %v3999, %v4077
        %v4080 = vmul.f32 %v4002, %v4077
        %v4081 = vmul.f32 %v4004, %v4077
        %v4082 = vmul.f32 %v4007, %v4077
        %v4083 = vmul.f32 %v4009, %v4077
        %v4084 = vmul.f32 %v4012, %v4077
        %v4085 = vmul.f32 %v4014, %v4077
        %v4086 = vmul.f32 %v4017, %v4077
        %v4087 = vmul.f32 %v4019, %v4077
        %v4088 = vmul.f32 %v4022, %v4077
        %v4089 = vmul.f32 %v4024, %v4077
        %v4090 = vmul.f32 %v4027, %v4077
        %v4091 = vmul.f32 %v4029, %v4077
        %v4092 = vmul.f32 %v4032, %v4077
        %v4093 = vmul.f32 %v4034, %v4077
        %v4094 = vmul.f32 %v4037, %v4077
        %v4095 = vmul.f32 %v4039, %v4077
        %v4096 = vmul.f32 %v4042, %v4077
        %v4097 = vmul.f32 %v4044, %v4077
        %v4098 = vmul.f32 %v4047, %v4077
        %v4099 = vmul.f32 %v4049, %v4077
        %v4100 = vmul.f32 %v4052, %v4077
        %v4101 = vmul.f32 %v4054, %v4077
        %v4102 = vmul.f32 %v4057, %v4077
        %v4103 = vmul.f32 %v4059, %v4077
        %v4104 = vmul.f32 %v4062, %v4077
        %v4105 = vmul.f32 %v4064, %v4077
        %v4106 = vmul.f32 %v4067, %v4077
        %v4107 = vmul.f32 %v4069, %v4077
        %v4108 = vmul.f32 %v4072, %v4077
        %v4109 = vmul.f32 %v4074, %v4077
        %v4110 = vld [vmem:[%s5 + $0x1] sm:$0x1]
        %v4111 = vperm.slane %v4110, 0
        %v4112 = vadd.f32 %v4078, %v4111
        %v4113 = vadd.f32 %v4079, %v4111
        %v4114 = vadd.f32 %v4080, %v4111
        %v4115 = vadd.f32 %v4081, %v4111
        %v4116 = vadd.f32 %v4082, %v4111
        %v4117 = vadd.f32 %v4083, %v4111
        %v4118 = vadd.f32 %v4084, %v4111
        %v4119 = vadd.f32 %v4085, %v4111
        %v4120 = vadd.f32 %v4086, %v4111
        %v4121 = vadd.f32 %v4087, %v4111
        %v4122 = vadd.f32 %v4088, %v4111
        %v4123 = vadd.f32 %v4089, %v4111
        %v4124 = vadd.f32 %v4090, %v4111
        %v4125 = vadd.f32 %v4091, %v4111
        %v4126 = vadd.f32 %v4092, %v4111
        %v4127 = vadd.f32 %v4093, %v4111
        %v4128 = vadd.f32 %v4094, %v4111
        %v4129 = vadd.f32 %v4095, %v4111
        %v4130 = vadd.f32 %v4096, %v4111
        %v4131 = vadd.f32 %v4097, %v4111
        %v4132 = vadd.f32 %v4098, %v4111
        %v4133 = vadd.f32 %v4099, %v4111
        %v4134 = vadd.f32 %v4100, %v4111
        %v4135 = vadd.f32 %v4101, %v4111
        %v4136 = vadd.f32 %v4102, %v4111
        %v4137 = vadd.f32 %v4103, %v4111
        %v4138 = vadd.f32 %v4104, %v4111
        %v4139 = vadd.f32 %v4105, %v4111
        %v4140 = vadd.f32 %v4106, %v4111
        %v4141 = vadd.f32 %v4107, %v4111
        %v4142 = vadd.f32 %v4108, %v4111
        %v4143 = vadd.f32 %v4109, %v4111
        %v4144 = vmax.f32 %v4112, 0.0
        %v4145 = vmax.f32 %v4113, 0.0
        %v4146 = vmax.f32 %v4114, 0.0
        %v4147 = vmax.f32 %v4115, 0.0
        %v4148 = vmax.f32 %v4116, 0.0
        %v4149 = vmax.f32 %v4117, 0.0
        %v4150 = vmax.f32 %v4118, 0.0
        %v4151 = vmax.f32 %v4119, 0.0
        %v4152 = vmax.f32 %v4120, 0.0
        %v4153 = vmax.f32 %v4121, 0.0
        %v4154 = vmax.f32 %v4122, 0.0
        %v4155 = vmax.f32 %v4123, 0.0
        %v4156 = vmax.f32 %v4124, 0.0
        %v4157 = vmax.f32 %v4125, 0.0
        %v4158 = vmax.f32 %v4126, 0.0
        %v4159 = vmax.f32 %v4127, 0.0
        %v4160 = vmax.f32 %v4128, 0.0
        %v4161 = vmax.f32 %v4129, 0.0
        %v4162 = vmax.f32 %v4130, 0.0
        %v4163 = vmax.f32 %v4131, 0.0
        %v4164 = vmax.f32 %v4132, 0.0
        %v4165 = vmax.f32 %v4133, 0.0
        %v4166 = vmax.f32 %v4134, 0.0
        %v4167 = vmax.f32 %v4135, 0.0
        %v4168 = vmax.f32 %v4136, 0.0
        %v4169 = vmax.f32 %v4137, 0.0
        %v4170 = vmax.f32 %v4138, 0.0
        %v4171 = vmax.f32 %v4139, 0.0
        %v4172 = vmax.f32 %v4140, 0.0
        %v4173 = vmax.f32 %v4141, 0.0
        %v4174 = vmax.f32 %v4142, 0.0
        %v4175 = vmax.f32 %v4143, 0.0
        %v4176 = vpack.c.bf16 %v4145, %v4144
        %v4177 = vpack.c.bf16 %v4147, %v4146
        %v4178 = vpack.c.bf16 %v4149, %v4148
        %v4179 = vpack.c.bf16 %v4151, %v4150
        %v4180 = vpack.c.bf16 %v4153, %v4152
        %v4181 = vpack.c.bf16 %v4155, %v4154
        %v4182 = vpack.c.bf16 %v4157, %v4156
        %v4183 = vpack.c.bf16 %v4159, %v4158
        %v4184 = vpack.c.bf16 %v4161, %v4160
        %v4185 = vpack.c.bf16 %v4163, %v4162
        %v4186 = vpack.c.bf16 %v4165, %v4164
        %v4187 = vpack.c.bf16 %v4167, %v4166
        %v4188 = vpack.c.bf16 %v4169, %v4168
        %v4189 = vpack.c.bf16 %v4171, %v4170
        %v4190 = vpack.c.bf16 %v4173, %v4172
        %v4191 = vpack.c.bf16 %v4175, %v4174
        %v4192 = vld [vmem:[#allocation14] sm:$0xf]
        %v4193 = vld [vmem:[#allocation14 + $0x4] sm:$0xf]
        %v4194 = vld [vmem:[#allocation14 + $0x8] sm:$0xf]
        %v4195 = vld [vmem:[#allocation14 + $0xc] sm:$0xf]
        %v4196 = vld [vmem:[#allocation14 + $0x10] sm:$0xf]
        %v4197 = vld [vmem:[#allocation14 + $0x14] sm:$0xf]
        %v4198 = vld [vmem:[#allocation14 + $0x18] sm:$0xf]
        %v4199 = vld [vmem:[#allocation14 + $0x1c] sm:$0xf]
        %v4200 = vld [vmem:[#allocation14 + $0x20] sm:$0xf]
        %v4201 = vld [vmem:[#allocation14 + $0x24] sm:$0xf]
        %v4202 = vld [vmem:[#allocation14 + $0x28] sm:$0xf]
        %v4203 = vld [vmem:[#allocation14 + $0x2c] sm:$0xf]
        %v4204 = vld [vmem:[#allocation14 + $0x30] sm:$0xf]
        %v4205 = vld [vmem:[#allocation14 + $0x34] sm:$0xf]
        %v4206 = vld [vmem:[#allocation14 + $0x38] sm:$0xf]
        %v4207 = vld [vmem:[#allocation14 + $0x3c] sm:$0xf]
        %v4224 = vunpack.c.l.b16 %v4192
        %v4225 = vunpack.c.l.b16 %v4193
        %v4226 = vunpack.c.l.b16 %v4194
        %v4227 = vunpack.c.l.b16 %v4195
        %v4228 = vunpack.c.l.b16 %v4196
        %v4229 = vunpack.c.l.b16 %v4197
        %v4230 = vunpack.c.l.b16 %v4198
        %v4231 = vunpack.c.l.b16 %v4199
        %v4232 = vunpack.c.l.b16 %v4200
        %v4233 = vunpack.c.l.b16 %v4201
        %v4234 = vunpack.c.l.b16 %v4202
        %v4235 = vunpack.c.l.b16 %v4203
        %v4236 = vunpack.c.l.b16 %v4204
        %v4237 = vunpack.c.l.b16 %v4205
        %v4238 = vunpack.c.l.b16 %v4206
        %v4239 = vunpack.c.l.b16 %v4207
        %v4240 = vpack.c.b16 %v4225, %v4224
        %v4241 = vpack.c.b16 %v4227, %v4226
        %v4242 = vpack.c.b16 %v4229, %v4228
        %v4243 = vpack.c.b16 %v4231, %v4230
        %v4244 = vpack.c.b16 %v4233, %v4232
        %v4245 = vpack.c.b16 %v4235, %v4234
        %v4246 = vpack.c.b16 %v4237, %v4236
        %v4247 = vpack.c.b16 %v4239, %v4238
        %4256 = vmatpush.bf16.msra.mxu0 %v4247
        %4257 = vmatpush.bf16.msra.mxu0 %v4246
        %4258 = vmatpush.bf16.msra.mxu0 %v4245
        %4259 = vmatpush.bf16.msra.mxu0 %v4244
        %4260 = vmatpush.bf16.msra.mxu0 %v4243
        %4261 = vmatpush.bf16.msra.mxu0 %v4242
        %4262 = vmatpush.bf16.msra.mxu0 %v4241
        %4263 = vmatpush.bf16.msra.mxu0 %v4240
        %4264 = vmatmul.bf16.gmra.mxu0 %v4176
        %v4265 = vpop.f32.mrf.mxu0
        %v4266 = vadd.f32 %v365, %v4265
        %v4267 = vpop.f32.mrf.mxu0
        %v4268 = vadd.f32 %v366, %v4267
        %4269 = vmatmul.bf16.gmra.mxu0 %v4177
        %v4270 = vpop.f32.mrf.mxu0
        %v4271 = vadd.f32 %v367, %v4270
        %v4272 = vpop.f32.mrf.mxu0
        %v4273 = vadd.f32 %v368, %v4272
        %4274 = vmatmul.bf16.gmra.mxu0 %v4178
        %v4275 = vpop.f32.mrf.mxu0
        %v4276 = vadd.f32 %v369, %v4275
        %v4277 = vpop.f32.mrf.mxu0
        %v4278 = vadd.f32 %v370, %v4277
        %4279 = vmatmul.bf16.gmra.mxu0 %v4179
        %v4280 = vpop.f32.mrf.mxu0
        %v4281 = vadd.f32 %v371, %v4280
        %v4282 = vpop.f32.mrf.mxu0
        %v4283 = vadd.f32 %v372, %v4282
        %4284 = vmatmul.bf16.gmra.mxu0 %v4180
        %v4285 = vpop.f32.mrf.mxu0
        %v4286 = vadd.f32 %v373, %v4285
        %v4287 = vpop.f32.mrf.mxu0
        %v4288 = vadd.f32 %v374, %v4287
        %4289 = vmatmul.bf16.gmra.mxu0 %v4181
        %v4290 = vpop.f32.mrf.mxu0
        %v4291 = vadd.f32 %v375, %v4290
        %v4292 = vpop.f32.mrf.mxu0
        %v4293 = vadd.f32 %v376, %v4292
        %4294 = vmatmul.bf16.gmra.mxu0 %v4182
        %v4295 = vpop.f32.mrf.mxu0
        %v4296 = vadd.f32 %v377, %v4295
        %v4297 = vpop.f32.mrf.mxu0
        %v4298 = vadd.f32 %v378, %v4297
        %4299 = vmatmul.bf16.gmra.mxu0 %v4183
        %v4300 = vpop.f32.mrf.mxu0
        %v4301 = vadd.f32 %v379, %v4300
        %v4302 = vpop.f32.mrf.mxu0
        %v4303 = vadd.f32 %v380, %v4302
        %4304 = vmatmul.bf16.gmra.mxu0 %v4184
        %v4305 = vpop.f32.mrf.mxu0
        %v4306 = vadd.f32 %v381, %v4305
        %v4307 = vpop.f32.mrf.mxu0
        %v4308 = vadd.f32 %v382, %v4307
        %4309 = vmatmul.bf16.gmra.mxu0 %v4185
        %v4310 = vpop.f32.mrf.mxu0
        %v4311 = vadd.f32 %v383, %v4310
        %v4312 = vpop.f32.mrf.mxu0
        %v4313 = vadd.f32 %v384, %v4312
        %4314 = vmatmul.bf16.gmra.mxu0 %v4186
        %v4315 = vpop.f32.mrf.mxu0
        %v4316 = vadd.f32 %v385, %v4315
        %v4317 = vpop.f32.mrf.mxu0
        %v4318 = vadd.f32 %v386, %v4317
        %4319 = vmatmul.bf16.gmra.mxu0 %v4187
        %v4320 = vpop.f32.mrf.mxu0
        %v4321 = vadd.f32 %v387, %v4320
        %v4322 = vpop.f32.mrf.mxu0
        %v4323 = vadd.f32 %v388, %v4322
        %4324 = vmatmul.bf16.gmra.mxu0 %v4188
        %v4325 = vpop.f32.mrf.mxu0
        %v4326 = vadd.f32 %v389, %v4325
        %v4327 = vpop.f32.mrf.mxu0
        %v4328 = vadd.f32 %v390, %v4327
        %4329 = vmatmul.bf16.gmra.mxu0 %v4189
        %v4330 = vpop.f32.mrf.mxu0
        %v4331 = vadd.f32 %v391, %v4330
        %v4332 = vpop.f32.mrf.mxu0
        %v4333 = vadd.f32 %v392, %v4332
        %4334 = vmatmul.bf16.gmra.mxu0 %v4190
        %v4335 = vpop.f32.mrf.mxu0
        %v4336 = vadd.f32 %v393, %v4335
        %v4337 = vpop.f32.mrf.mxu0
        %v4338 = vadd.f32 %v394, %v4337
        %4339 = vmatmul.bf16.gmra.mxu0 %v4191
        %v4340 = vpop.f32.mrf.mxu0
        %v4341 = vadd.f32 %v395, %v4340
        %v4342 = vpop.f32.mrf.mxu0
        %v4343 = vadd.f32 %v396, %v4342
        %4344 = vdwg.mxu0
        %4345 = vst [vmem:[%s362] sm:$0xff] %v4266
        %4346 = vst [vmem:[%s362 + $0x8] sm:$0xff] %v4268
        %4347 = vst [vmem:[%s362 + $0x10] sm:$0xff] %v4271
        %4348 = vst [vmem:[%s362 + $0x18] sm:$0xff] %v4273
        %4349 = vst [vmem:[%s362 + $0x20] sm:$0xff] %v4276
        %4350 = vst [vmem:[%s362 + $0x28] sm:$0xff] %v4278
        %4351 = vst [vmem:[%s362 + $0x30] sm:$0xff] %v4281
        %4352 = vst [vmem:[%s362 + $0x38] sm:$0xff] %v4283
        %4353 = vst [vmem:[%s362 + $0x40] sm:$0xff] %v4286
        %4354 = vst [vmem:[%s362 + $0x48] sm:$0xff] %v4288
        %4355 = vst [vmem:[%s362 + $0x50] sm:$0xff] %v4291
        %4356 = vst [vmem:[%s362 + $0x58] sm:$0xff] %v4293
        %4357 = vst [vmem:[%s362 + $0x60] sm:$0xff] %v4296
        %4358 = vst [vmem:[%s362 + $0x68] sm:$0xff] %v4298
        %4359 = vst [vmem:[%s362 + $0x70] sm:$0xff] %v4301
        %4360 = vst [vmem:[%s362 + $0x78] sm:$0xff] %v4303
        %4361 = vst [vmem:[%s362 + $0x80] sm:$0xff] %v4306
        %4362 = vst [vmem:[%s362 + $0x88] sm:$0xff] %v4308
        %4363 = vst [vmem:[%s362 + $0x90] sm:$0xff] %v4311
        %4364 = vst [vmem:[%s362 + $0x98] sm:$0xff] %v4313
        %4365 = vst [vmem:[%s362 + $0xa0] sm:$0xff] %v4316
        %4366 = vst [vmem:[%s362 + $0xa8] sm:$0xff] %v4318
        %4367 = vst [vmem:[%s362 + $0xb0] sm:$0xff] %v4321
        %4368 = vst [vmem:[%s362 + $0xb8] sm:$0xff] %v4323
        %4369 = vst [vmem:[%s362 + $0xc0] sm:$0xff] %v4326
        %4370 = vst [vmem:[%s362 + $0xc8] sm:$0xff] %v4328
        %4371 = vst [vmem:[%s362 + $0xd0] sm:$0xff] %v4331
        %4372 = vst [vmem:[%s362 + $0xd8] sm:$0xff] %v4333
        %4373 = vst [vmem:[%s362 + $0xe0] sm:$0xff] %v4336
        %4374 = vst [vmem:[%s362 + $0xe8] sm:$0xff] %v4338
        %4375 = vst [vmem:[%s362 + $0xf0] sm:$0xff] %v4341
        %4376 = vst [vmem:[%s362 + $0xf8] sm:$0xff] %v4343
        %s4377 = sand.u32 %s186, 1
        %s4378 = scalar_lea.sflag [#allocation8], %s4377
        %s4379 = sand.u32 %s186, 1
        %s4380 = smul.addr %s4379, 256
        %s4381 = scalar_lea.vmem [#allocation15], %s4380
        // Predicated region
        $region88: #{tpu_custom_call.1} parent=47 // pred_check
          %p4382 = pneg %p196
        $region89: #{tpu_custom_call.1} parent=47 // pred_check_branch
          %4384 = sbr.rel (%p4382) target = $region91
        $region90: #{tpu_custom_call.1} parent=47 // pred_region
          %s4385 = smul.u32 32, %s26
          %4387 = vsyncadd %s4378, 0
          %s4388 = smul.addr %s4385, 8
          %s4389 = scalar_lea.hbm %s7, %s4388
          %s4390 = sshll.u32 %s4381, 4
          %s4391 = int_to_ptr.vmem [resolvable:$true] %s4390
          %s4392 = sshll.u32 %s4389, 4
          %s4393 = int_to_ptr.hbm [resolvable:$true] %s4392
          %4398 = dma.vmem_to_hbm [thread:$0]  %s4391, 4096, %s4393, %s4378, 128, 128, 8
        $region91: #{tpu_custom_call.1} parent=47 // pred_fallthru
          _
      $region48: #{tpu_custom_call.1} parent=5 // pred_fallthru
        _
      %p4399 = scmp.le.s32.totalorder 2, %s21
      // Predicated region
      $region92: #{tpu_custom_call.1} parent=5 // pred_check
        %p4400 = pneg %p4399
      $region93: #{tpu_custom_call.1} parent=5 // pred_check_branch
        %4402 = sbr.rel (%p4400) target = $region95
      $region94: #{tpu_custom_call.1} parent=5 // pred_region
        %s4403 = ssub.s32 %s21, 2
        // Predicated region
        $region96: #{tpu_custom_call.1} parent=94 // pred_check
          %p4404 = pneg %p202
        $region97: #{tpu_custom_call.1} parent=94 // pred_check_branch
          %4406 = sbr.rel (%p4404) target = $region99
        $region98: #{tpu_custom_call.1} parent=94 // pred_region
          %s4407 = sand.u32 %s187, 1
          %s4408 = scalar_lea.sflag [#allocation8], %s4407
          %s4409 = sand.u32 %s187, 1
          %s4410 = smul.addr %s4409, 256
          %s4411 = scalar_lea.vmem [#allocation15], %s4410
          %4413 = dma.done %s4408, 4096
        $region99: #{tpu_custom_call.1} parent=94 // pred_fallthru
          _
      $region95: #{tpu_custom_call.1} parent=5 // pred_fallthru
        _
    $region6: #{tpu_custom_call.1} parent=1 // loop_footer
      %s25 = sadd.s32 1, %s21
    $region7: #{tpu_custom_call.1} parent=1 // loop_footer_branch
      %20 = sbr.rel target = $region3
    $region8: #{tpu_custom_call.1} parent=1 // loop_exit
      _
    %4414 = vsyncpa [#allocation7], 1
    %s4415 = scalar_lea.sflag [#allocation7], 1
    %4416 = vsyncpa %s4415, 1
    %4417 = vsyncpa [#allocation10], 1
    %4418 = vsyncpa [#allocation13], 1
    %4419 = vsyncpa [#allocation8], 1
    %s4420 = scalar_lea.sflag [#allocation8], 1
    %4421 = vsyncpa %s4420, 1
  %4422 = vsyncmov [#allocation5]
  %s4423 = vpop.sfrf %4422
  %p4424 = scmp.eq.s32.totalorder %s4423, 0
  %p4425 = pneg %p4424
  %4427 = shalt.err (%p4425)

</llo_original>
